<compile_context>
chip_gen: v5e
topology: v5e:2x2
jax: 0.10.0
libtpu: 0.0.40
codegen_flags: <defaults>
</compile_context>

<pallas_src>
import jax
import jax.numpy as jnp
from jax import lax
from jax.experimental import pallas as pl
from jax.experimental.pallas import tpu as pltpu

# ---- static sizes implied by the module (28x28 input -> 26 -> 13 -> 11 -> 5) ----
XPAD = 832   # padded flattened input width  (>= 768 + 58)
W1   = 768   # conv1 accumulator width on the 28-stride grid (>= 733)
M1W  = 704   # pool1 window-max width                        (>= 697)
P1W  = 208   # pooled1 width on the 13-stride grid           (>= 169 + 28)
OW2  = 176   # conv2 output width on the 13-stride grid      (>= 142, <= P1W - 28)
M2W  = 128   # pool2 window-max width                        (>= 113, <= OW2 - 14)
NPAD = 128   # padded logits width (lane-dense store), real outputs = first 10


def _net_kernel(x_ref, w1_ref, b1_ref, w2_ref, b2_ref, s1_ref,
                fw1_ref, fb1_ref, fw2_ref, fb2_ref, out_ref):
    f32 = jnp.float32
    xv = x_ref[0]                                      # (1, XPAD) f32, zero-padded

    # ---- conv1 (VPU): 9 shifted FMAs;  acc1[c, 28*h + w] = conv1(x)[c, h, w] ----
    acc1 = jnp.zeros((32, W1), f32)
    for i in range(3):
        for j in range(3):
            k = 3 * i + j
            off = 28 * i + j
            acc1 = acc1 + w1_ref[k] * xv[:, off:off + W1]     # (32,1)*(1,W1)

    # ---- pool1: 2x2 window max on the 28-stride grid ----
    m1 = jnp.maximum(jnp.maximum(acc1[:, 0:M1W], acc1[:, 1:M1W + 1]),
                     jnp.maximum(acc1[:, 28:M1W + 28], acc1[:, 29:M1W + 29]))

    # stride-2 compress onto the 13-stride grid via a constant 0/1 matrix (MXU)
    p1 = jnp.dot(m1.astype(jnp.bfloat16), s1_ref[...],
                 preferred_element_type=f32)                  # (32, P1W)
    p1 = jnp.maximum(p1 + b1_ref[...], 0.0)                   # conv1 bias + ReLU
    p1 = p1.astype(jnp.bfloat16)

    # ---- conv2 (MXU): 9 shifted matmuls, bf16 x bf16 -> f32 accumulation ----
    acc2 = jnp.zeros((64, OW2), f32)
    for i in range(3):
        for j in range(3):
            k = 3 * i + j
            off = 13 * i + j
            acc2 = acc2 + jnp.dot(w2_ref[k], p1[:, off:off + OW2],
                                  preferred_element_type=f32)

    # ---- pool2: 2x2 window max on the 13-stride grid, then bias + ReLU ----
    m2 = jnp.maximum(jnp.maximum(acc2[:, 0:M2W], acc2[:, 1:M2W + 1]),
                     jnp.maximum(acc2[:, 13:M2W + 13], acc2[:, 14:M2W + 14]))
    a2 = jnp.maximum(m2 + b2_ref[...], 0.0)                   # (64, M2W) f32

    # ---- fc1 (VPU): 25-step multiply-accumulate over valid pooled positions ----
    fc1_acc = jnp.zeros((64, 128), f32)
    for yo in range(5):
        for xo in range(5):
            p = 5 * yo + xo
            cp = 26 * yo + 2 * xo                             # pooled column index
            fc1_acc = fc1_acc + a2[:, cp:cp + 1] * fw1_ref[p]  # f32 FMA, no casts
    h1 = jnp.sum(fc1_acc, axis=0, keepdims=True) + fb1_ref[...]   # (1, 128)
    h1 = jnp.maximum(h1, 0.0)

    # ---- fc2 (tiny matmul, padded to 128 lanes -> unmasked lane-dense store) ----
    out = jnp.dot(h1, fw2_ref[...], preferred_element_type=f32) + fb2_ref[...]
    out_ref[...] = out.reshape(1, 1, NPAD)


# ---------------------------------------------------------------------------
# Parameters (deterministic synthetic init, PyTorch-equivalent layout) + prep
# ---------------------------------------------------------------------------
def init_params(key):
    ks = jax.random.split(key, 8)
    s = 0.05
    return {
        "conv1_w": jax.random.normal(ks[0], (32, 1, 3, 3), jnp.float32) * s,
        "conv1_b": jax.random.normal(ks[1], (32,), jnp.float32) * s,
        "conv2_w": jax.random.normal(ks[2], (64, 32, 3, 3), jnp.float32) * s,
        "conv2_b": jax.random.normal(ks[3], (64,), jnp.float32) * s,
        "fc1_w": jax.random.normal(ks[4], (64 * 5 * 5, 128), jnp.float32) * s,
        "fc1_b": jax.random.normal(ks[5], (128,), jnp.float32) * s,
        "fc2_w": jax.random.normal(ks[6], (128, 10), jnp.float32) * s,
        "fc2_b": jax.random.normal(ks[7], (10,), jnp.float32) * s,
    }


def _selection_matrix():
    # S1[t, q] = 1  iff  t == 56*(q//13) + 2*(q%13) and q < 169  (pool1 stride-2 pick)
    q = jnp.arange(P1W)
    tgt = 56 * (q // 13) + 2 * (q % 13)
    t = jnp.arange(M1W)
    s1 = (t[:, None] == tgt[None, :]) & (q[None, :] < 169)
    return s1.astype(jnp.bfloat16)


def prepare_params(params):
    """One-time re-layout of weights into kernel-friendly, VMEM-resident form."""
    fw2 = jnp.zeros((128, NPAD), jnp.float32).at[:, :10].set(
        params["fc2_w"].astype(jnp.float32))
    fb2 = jnp.zeros((1, NPAD), jnp.float32).at[:, :10].set(
        params["fc2_b"].astype(jnp.float32))
    return {
        # conv1 weights as (k, Cout, 1) so w1[k] is a (32,1) per-tap column (VPU)
        "w1": params["conv1_w"].transpose(2, 3, 0, 1).reshape(9, 32, 1)
                                .astype(jnp.float32),
        "b1": params["conv1_b"].reshape(32, 1).astype(jnp.float32),
        # conv2 weights as (k, Cout, Cin) bf16 for the 9 shifted MXU matmuls
        "w2": params["conv2_w"].transpose(2, 3, 0, 1).reshape(9, 64, 32)
                                .astype(jnp.bfloat16),
        "b2": params["conv2_b"].reshape(64, 1).astype(jnp.float32),
        "s1": _selection_matrix(),
        # fc1 weights as (p=yo*5+xo, Cin=64, 128), f32 (no per-tap cast in kernel)
        "fw1": params["fc1_w"].reshape(64, 25, 128).transpose(1, 0, 2)
                               .astype(jnp.float32),
        "fb1": params["fc1_b"].reshape(1, 128).astype(jnp.float32),
        # fc2 weights / bias zero-padded to 128 output lanes
        "fw2": fw2,
        "fb2": fb2,
    }


# ---------------------------------------------------------------------------
# Forward pass: one fused pallas_call, grid over batch
# ---------------------------------------------------------------------------
@jax.jit
def net_forward(kparams, x):
    B = x.shape[0]
    xf = x.reshape(B, 28 * 28)
    xf = jnp.pad(xf, ((0, 0), (0, XPAD - 28 * 28))).reshape(B, 1, XPAD)

    def full(a):
        return pl.BlockSpec(a.shape, lambda b, nd=a.ndim: (0,) * nd)

    kp = kparams
    out = pl.pallas_call(
        _net_kernel,
        out_shape=jax.ShapeDtypeStruct((B, 1, NPAD), jnp.float32),
        grid=(B,),
        in_specs=[
            pl.BlockSpec((1, 1, XPAD), lambda b: (b, 0, 0)),
            full(kp["w1"]), full(kp["b1"]), full(kp["w2"]), full(kp["b2"]),
            full(kp["s1"]), full(kp["fw1"]), full(kp["fb1"]),
            full(kp["fw2"]), full(kp["fb2"]),
        ],
        out_specs=pl.BlockSpec((1, 1, NPAD), lambda b: (b, 0, 0)),
        compiler_params=pltpu.CompilerParams(
            dimension_semantics=("parallel",),
            vmem_limit_bytes=32 * 1024 * 1024,
        ),
    )(xf, kp["w1"], kp["b1"], kp["w2"], kp["b2"], kp["s1"],
      kp["fw1"], kp["fb1"], kp["fw2"], kp["fb2"])
    return out.reshape(B, NPAD)[:, :10]


# ---------------------------------------------------------------------------
# Pure-JAX reference (for a loose numerical sanity check; kernel uses bf16 MXU)
# ---------------------------------------------------------------------------
def net_reference(params, x):
    y = lax.conv(x, params["conv1_w"], (1, 1), "VALID")
    y = jax.nn.relu(y + params["conv1_b"][None, :, None, None])
    y = lax.reduce_window(y, -jnp.inf, lax.max, (1, 1, 2, 2), (1, 1, 2, 2), "VALID")
    y = lax.conv(y, params["conv2_w"], (1, 1), "VALID")
    y = jax.nn.relu(y + params["conv2_b"][None, :, None, None])
    y = lax.reduce_window(y, -jnp.inf, lax.max, (1, 1, 2, 2), (1, 1, 2, 2), "VALID")
    y = y.reshape(x.shape[0], 64 * 5 * 5)
    y = jax.nn.relu(y @ params["fc1_w"] + params["fc1_b"])
    return y @ params["fc2_w"] + params["fc2_b"]


if __name__ == "__main__":
    key = jax.random.PRNGKey(0)
    k_params, k_x = jax.random.split(key)
    params = init_params(k_params)
    kparams = prepare_params(params)
    # fc1 (64*5*5) implies a 28x28 input: 28 -> 26 -> 13 -> 11 -> 5.
    x = jax.random.normal(k_x, (2, 1, 28, 28), jnp.float32)

    out = jax.block_until_ready(net_forward(kparams, x))
    assert out.shape == (2, 10) and out.dtype == jnp.float32

    ref = net_reference(params, x)
    assert jnp.allclose(out, ref, atol=5e-2, rtol=5e-2), (
        "max abs err vs reference: %f" % float(jnp.max(jnp.abs(out - ref))))
    print("KERNEL_OK")
</pallas_src>

<mosaic_0001>
module attributes {stable_mosaic.version = 11 : i64} {
  func.func @_net_kernel(%arg0: i32, %arg1: memref<1x1x832xf32, #tpu.memory_space<vmem>>, %arg2: memref<9x32x1xf32, #tpu.memory_space<vmem>>, %arg3: memref<32x1xf32, #tpu.memory_space<vmem>>, %arg4: memref<9x64x32xbf16, #tpu.memory_space<vmem>>, %arg5: memref<64x1xf32, #tpu.memory_space<vmem>>, %arg6: memref<704x208xbf16, #tpu.memory_space<vmem>>, %arg7: memref<25x64x128xf32, #tpu.memory_space<vmem>>, %arg8: memref<1x128xf32, #tpu.memory_space<vmem>>, %arg9: memref<128x128xf32, #tpu.memory_space<vmem>>, %arg10: memref<1x128xf32, #tpu.memory_space<vmem>>, %arg11: memref<1x1x128xf32, #tpu.memory_space<vmem>>) attributes {dimension_semantics = [#tpu.dimension_semantics<parallel>], iteration_bounds = array<i64: 2>, scalar_prefetch = 0 : i64, scratch_operands = 0 : i64, tpu.core_type = #tpu.core_type<tc>, window_params = [{transform_indices = @transform_0, window_bounds = array<i64: 1, 1, 832>}, {pipeline_mode = #tpu.pipeline_mode<synchronous>, transform_indices = @transform_1, window_bounds = array<i64: 9, 32, 1>}, {pipeline_mode = #tpu.pipeline_mode<synchronous>, transform_indices = @transform_2, window_bounds = array<i64: 32, 1>}, {pipeline_mode = #tpu.pipeline_mode<synchronous>, transform_indices = @transform_3, window_bounds = array<i64: 9, 64, 32>}, {pipeline_mode = #tpu.pipeline_mode<synchronous>, transform_indices = @transform_4, window_bounds = array<i64: 64, 1>}, {pipeline_mode = #tpu.pipeline_mode<synchronous>, transform_indices = @transform_5, window_bounds = array<i64: 704, 208>}, {pipeline_mode = #tpu.pipeline_mode<synchronous>, transform_indices = @transform_6, window_bounds = array<i64: 25, 64, 128>}, {pipeline_mode = #tpu.pipeline_mode<synchronous>, transform_indices = @transform_7, window_bounds = array<i64: 1, 128>}, {pipeline_mode = #tpu.pipeline_mode<synchronous>, transform_indices = @transform_8, window_bounds = array<i64: 128, 128>}, {pipeline_mode = #tpu.pipeline_mode<synchronous>, transform_indices = @transform_9, window_bounds = array<i64: 1, 128>}, {transform_indices = @transform_10, window_bounds = array<i64: 1, 1, 128>}]} {
    %c0 = arith.constant 0 : index
    %c0_0 = arith.constant 0 : index
    %c0_1 = arith.constant 0 : index
    %0 = vector.load %arg1[%c0, %c0_0, %c0_1] : memref<1x1x832xf32, #tpu.memory_space<vmem>>, vector<1x1x832xf32>
    %1 = vector.shape_cast %0 : vector<1x1x832xf32> to vector<1x832xf32>
    %cst = arith.constant 0.000000e+00 : f32
    %2 = vector.broadcast %cst : f32 to vector<32x768xf32>
    %c0_2 = arith.constant 0 : index
    %c0_3 = arith.constant 0 : index
    %c0_4 = arith.constant 0 : index
    %3 = vector.load %arg2[%c0_2, %c0_3, %c0_4] : memref<9x32x1xf32, #tpu.memory_space<vmem>>, vector<1x32x1xf32>
    %4 = vector.shape_cast %3 : vector<1x32x1xf32> to vector<32x1xf32>
    %5 = vector.extract_strided_slice %1 {offsets = [0, 0], sizes = [1, 768], strides = [1, 1]} : vector<1x832xf32> to vector<1x768xf32>
    %6 = vector.broadcast %4 : vector<32x1xf32> to vector<32x768xf32>
    %7 = vector.broadcast %5 : vector<1x768xf32> to vector<32x768xf32>
    %8 = arith.mulf %6, %7 : vector<32x768xf32>
    %9 = arith.addf %2, %8 : vector<32x768xf32>
    %c1 = arith.constant 1 : index
    %c0_5 = arith.constant 0 : index
    %c0_6 = arith.constant 0 : index
    %10 = vector.load %arg2[%c1, %c0_5, %c0_6] : memref<9x32x1xf32, #tpu.memory_space<vmem>>, vector<1x32x1xf32>
    %11 = vector.shape_cast %10 : vector<1x32x1xf32> to vector<32x1xf32>
    %12 = vector.extract_strided_slice %1 {offsets = [0, 1], sizes = [1, 768], strides = [1, 1]} : vector<1x832xf32> to vector<1x768xf32>
    %13 = vector.broadcast %11 : vector<32x1xf32> to vector<32x768xf32>
    %14 = vector.broadcast %12 : vector<1x768xf32> to vector<32x768xf32>
    %15 = arith.mulf %13, %14 : vector<32x768xf32>
    %16 = arith.addf %9, %15 : vector<32x768xf32>
    %c2 = arith.constant 2 : index
    %c0_7 = arith.constant 0 : index
    %c0_8 = arith.constant 0 : index
    %17 = vector.load %arg2[%c2, %c0_7, %c0_8] : memref<9x32x1xf32, #tpu.memory_space<vmem>>, vector<1x32x1xf32>
    %18 = vector.shape_cast %17 : vector<1x32x1xf32> to vector<32x1xf32>
    %19 = vector.extract_strided_slice %1 {offsets = [0, 2], sizes = [1, 768], strides = [1, 1]} : vector<1x832xf32> to vector<1x768xf32>
    %20 = vector.broadcast %18 : vector<32x1xf32> to vector<32x768xf32>
    %21 = vector.broadcast %19 : vector<1x768xf32> to vector<32x768xf32>
    %22 = arith.mulf %20, %21 : vector<32x768xf32>
    %23 = arith.addf %16, %22 : vector<32x768xf32>
    %c3 = arith.constant 3 : index
    %c0_9 = arith.constant 0 : index
    %c0_10 = arith.constant 0 : index
    %24 = vector.load %arg2[%c3, %c0_9, %c0_10] : memref<9x32x1xf32, #tpu.memory_space<vmem>>, vector<1x32x1xf32>
    %25 = vector.shape_cast %24 : vector<1x32x1xf32> to vector<32x1xf32>
    %26 = vector.extract_strided_slice %1 {offsets = [0, 28], sizes = [1, 768], strides = [1, 1]} : vector<1x832xf32> to vector<1x768xf32>
    %27 = vector.broadcast %25 : vector<32x1xf32> to vector<32x768xf32>
    %28 = vector.broadcast %26 : vector<1x768xf32> to vector<32x768xf32>
    %29 = arith.mulf %27, %28 : vector<32x768xf32>
    %30 = arith.addf %23, %29 : vector<32x768xf32>
    %c4 = arith.constant 4 : index
    %c0_11 = arith.constant 0 : index
    %c0_12 = arith.constant 0 : index
    %31 = vector.load %arg2[%c4, %c0_11, %c0_12] : memref<9x32x1xf32, #tpu.memory_space<vmem>>, vector<1x32x1xf32>
    %32 = vector.shape_cast %31 : vector<1x32x1xf32> to vector<32x1xf32>
    %33 = vector.extract_strided_slice %1 {offsets = [0, 29], sizes = [1, 768], strides = [1, 1]} : vector<1x832xf32> to vector<1x768xf32>
    %34 = vector.broadcast %32 : vector<32x1xf32> to vector<32x768xf32>
    %35 = vector.broadcast %33 : vector<1x768xf32> to vector<32x768xf32>
    %36 = arith.mulf %34, %35 : vector<32x768xf32>
    %37 = arith.addf %30, %36 : vector<32x768xf32>
    %c5 = arith.constant 5 : index
    %c0_13 = arith.constant 0 : index
    %c0_14 = arith.constant 0 : index
    %38 = vector.load %arg2[%c5, %c0_13, %c0_14] : memref<9x32x1xf32, #tpu.memory_space<vmem>>, vector<1x32x1xf32>
    %39 = vector.shape_cast %38 : vector<1x32x1xf32> to vector<32x1xf32>
    %40 = vector.extract_strided_slice %1 {offsets = [0, 30], sizes = [1, 768], strides = [1, 1]} : vector<1x832xf32> to vector<1x768xf32>
    %41 = vector.broadcast %39 : vector<32x1xf32> to vector<32x768xf32>
    %42 = vector.broadcast %40 : vector<1x768xf32> to vector<32x768xf32>
    %43 = arith.mulf %41, %42 : vector<32x768xf32>
    %44 = arith.addf %37, %43 : vector<32x768xf32>
    %c6 = arith.constant 6 : index
    %c0_15 = arith.constant 0 : index
    %c0_16 = arith.constant 0 : index
    %45 = vector.load %arg2[%c6, %c0_15, %c0_16] : memref<9x32x1xf32, #tpu.memory_space<vmem>>, vector<1x32x1xf32>
    %46 = vector.shape_cast %45 : vector<1x32x1xf32> to vector<32x1xf32>
    %47 = vector.extract_strided_slice %1 {offsets = [0, 56], sizes = [1, 768], strides = [1, 1]} : vector<1x832xf32> to vector<1x768xf32>
    %48 = vector.broadcast %46 : vector<32x1xf32> to vector<32x768xf32>
    %49 = vector.broadcast %47 : vector<1x768xf32> to vector<32x768xf32>
    %50 = arith.mulf %48, %49 : vector<32x768xf32>
    %51 = arith.addf %44, %50 : vector<32x768xf32>
    %c7 = arith.constant 7 : index
    %c0_17 = arith.constant 0 : index
    %c0_18 = arith.constant 0 : index
    %52 = vector.load %arg2[%c7, %c0_17, %c0_18] : memref<9x32x1xf32, #tpu.memory_space<vmem>>, vector<1x32x1xf32>
    %53 = vector.shape_cast %52 : vector<1x32x1xf32> to vector<32x1xf32>
    %54 = vector.extract_strided_slice %1 {offsets = [0, 57], sizes = [1, 768], strides = [1, 1]} : vector<1x832xf32> to vector<1x768xf32>
    %55 = vector.broadcast %53 : vector<32x1xf32> to vector<32x768xf32>
    %56 = vector.broadcast %54 : vector<1x768xf32> to vector<32x768xf32>
    %57 = arith.mulf %55, %56 : vector<32x768xf32>
    %58 = arith.addf %51, %57 : vector<32x768xf32>
    %c8 = arith.constant 8 : index
    %c0_19 = arith.constant 0 : index
    %c0_20 = arith.constant 0 : index
    %59 = vector.load %arg2[%c8, %c0_19, %c0_20] : memref<9x32x1xf32, #tpu.memory_space<vmem>>, vector<1x32x1xf32>
    %60 = vector.shape_cast %59 : vector<1x32x1xf32> to vector<32x1xf32>
    %61 = vector.extract_strided_slice %1 {offsets = [0, 58], sizes = [1, 768], strides = [1, 1]} : vector<1x832xf32> to vector<1x768xf32>
    %62 = vector.broadcast %60 : vector<32x1xf32> to vector<32x768xf32>
    %63 = vector.broadcast %61 : vector<1x768xf32> to vector<32x768xf32>
    %64 = arith.mulf %62, %63 : vector<32x768xf32>
    %65 = arith.addf %58, %64 : vector<32x768xf32>
    %66 = vector.extract_strided_slice %65 {offsets = [0, 0], sizes = [32, 704], strides = [1, 1]} : vector<32x768xf32> to vector<32x704xf32>
    %67 = vector.extract_strided_slice %65 {offsets = [0, 1], sizes = [32, 704], strides = [1, 1]} : vector<32x768xf32> to vector<32x704xf32>
    %68 = arith.maximumf %66, %67 : vector<32x704xf32>
    %69 = vector.extract_strided_slice %65 {offsets = [0, 28], sizes = [32, 704], strides = [1, 1]} : vector<32x768xf32> to vector<32x704xf32>
    %70 = vector.extract_strided_slice %65 {offsets = [0, 29], sizes = [32, 704], strides = [1, 1]} : vector<32x768xf32> to vector<32x704xf32>
    %71 = arith.maximumf %69, %70 : vector<32x704xf32>
    %72 = arith.maximumf %68, %71 : vector<32x704xf32>
    %73 = arith.truncf %72 : vector<32x704xf32> to vector<32x704xbf16>
    %c0_21 = arith.constant 0 : index
    %c0_22 = arith.constant 0 : index
    %74 = vector.load %arg6[%c0_21, %c0_22] : memref<704x208xbf16, #tpu.memory_space<vmem>>, vector<704x208xbf16>
    %cst_23 = arith.constant dense<0.000000e+00> : vector<32x208xf32>
    %75 = tpu.matmul %73, %74, %cst_23 {dimension_numbers = #tpu.dot_dimension_numbers<[1], [0], [0], [1], [0, 0, 1, 1], [], []>} : vector<32x704xbf16>, vector<704x208xbf16>, vector<32x208xf32> -> vector<32x208xf32>
    %c0_24 = arith.constant 0 : index
    %c0_25 = arith.constant 0 : index
    %76 = vector.load %arg3[%c0_24, %c0_25] : memref<32x1xf32, #tpu.memory_space<vmem>>, vector<32x1xf32>
    %77 = vector.broadcast %76 : vector<32x1xf32> to vector<32x208xf32>
    %78 = arith.addf %75, %77 : vector<32x208xf32>
    %cst_26 = arith.constant 0.000000e+00 : f32
    %79 = vector.broadcast %cst_26 : f32 to vector<32x208xf32>
    %80 = arith.maximumf %78, %79 : vector<32x208xf32>
    %81 = arith.truncf %80 : vector<32x208xf32> to vector<32x208xbf16>
    %cst_27 = arith.constant 0.000000e+00 : f32
    %82 = vector.broadcast %cst_27 : f32 to vector<64x176xf32>
    %c0_28 = arith.constant 0 : index
    %c0_29 = arith.constant 0 : index
    %c0_30 = arith.constant 0 : index
    %83 = vector.load %arg4[%c0_28, %c0_29, %c0_30] : memref<9x64x32xbf16, #tpu.memory_space<vmem>>, vector<1x64x32xbf16>
    %84 = vector.shape_cast %83 : vector<1x64x32xbf16> to vector<64x32xbf16>
    %85 = vector.extract_strided_slice %81 {offsets = [0, 0], sizes = [32, 176], strides = [1, 1]} : vector<32x208xbf16> to vector<32x176xbf16>
    %cst_31 = arith.constant dense<0.000000e+00> : vector<64x176xf32>
    %86 = tpu.matmul %84, %85, %cst_31 {dimension_numbers = #tpu.dot_dimension_numbers<[1], [0], [0], [1], [0, 0, 1, 1], [], []>} : vector<64x32xbf16>, vector<32x176xbf16>, vector<64x176xf32> -> vector<64x176xf32>
    %87 = arith.addf %82, %86 : vector<64x176xf32>
    %c1_32 = arith.constant 1 : index
    %c0_33 = arith.constant 0 : index
    %c0_34 = arith.constant 0 : index
    %88 = vector.load %arg4[%c1_32, %c0_33, %c0_34] : memref<9x64x32xbf16, #tpu.memory_space<vmem>>, vector<1x64x32xbf16>
    %89 = vector.shape_cast %88 : vector<1x64x32xbf16> to vector<64x32xbf16>
    %90 = vector.extract_strided_slice %81 {offsets = [0, 1], sizes = [32, 176], strides = [1, 1]} : vector<32x208xbf16> to vector<32x176xbf16>
    %cst_35 = arith.constant dense<0.000000e+00> : vector<64x176xf32>
    %91 = tpu.matmul %89, %90, %cst_35 {dimension_numbers = #tpu.dot_dimension_numbers<[1], [0], [0], [1], [0, 0, 1, 1], [], []>} : vector<64x32xbf16>, vector<32x176xbf16>, vector<64x176xf32> -> vector<64x176xf32>
    %92 = arith.addf %87, %91 : vector<64x176xf32>
    %c2_36 = arith.constant 2 : index
    %c0_37 = arith.constant 0 : index
    %c0_38 = arith.constant 0 : index
    %93 = vector.load %arg4[%c2_36, %c0_37, %c0_38] : memref<9x64x32xbf16, #tpu.memory_space<vmem>>, vector<1x64x32xbf16>
    %94 = vector.shape_cast %93 : vector<1x64x32xbf16> to vector<64x32xbf16>
    %95 = vector.extract_strided_slice %81 {offsets = [0, 2], sizes = [32, 176], strides = [1, 1]} : vector<32x208xbf16> to vector<32x176xbf16>
    %cst_39 = arith.constant dense<0.000000e+00> : vector<64x176xf32>
    %96 = tpu.matmul %94, %95, %cst_39 {dimension_numbers = #tpu.dot_dimension_numbers<[1], [0], [0], [1], [0, 0, 1, 1], [], []>} : vector<64x32xbf16>, vector<32x176xbf16>, vector<64x176xf32> -> vector<64x176xf32>
    %97 = arith.addf %92, %96 : vector<64x176xf32>
    %c3_40 = arith.constant 3 : index
    %c0_41 = arith.constant 0 : index
    %c0_42 = arith.constant 0 : index
    %98 = vector.load %arg4[%c3_40, %c0_41, %c0_42] : memref<9x64x32xbf16, #tpu.memory_space<vmem>>, vector<1x64x32xbf16>
    %99 = vector.shape_cast %98 : vector<1x64x32xbf16> to vector<64x32xbf16>
    %100 = vector.extract_strided_slice %81 {offsets = [0, 13], sizes = [32, 176], strides = [1, 1]} : vector<32x208xbf16> to vector<32x176xbf16>
    %cst_43 = arith.constant dense<0.000000e+00> : vector<64x176xf32>
    %101 = tpu.matmul %99, %100, %cst_43 {dimension_numbers = #tpu.dot_dimension_numbers<[1], [0], [0], [1], [0, 0, 1, 1], [], []>} : vector<64x32xbf16>, vector<32x176xbf16>, vector<64x176xf32> -> vector<64x176xf32>
    %102 = arith.addf %97, %101 : vector<64x176xf32>
    %c4_44 = arith.constant 4 : index
    %c0_45 = arith.constant 0 : index
    %c0_46 = arith.constant 0 : index
    %103 = vector.load %arg4[%c4_44, %c0_45, %c0_46] : memref<9x64x32xbf16, #tpu.memory_space<vmem>>, vector<1x64x32xbf16>
    %104 = vector.shape_cast %103 : vector<1x64x32xbf16> to vector<64x32xbf16>
    %105 = vector.extract_strided_slice %81 {offsets = [0, 14], sizes = [32, 176], strides = [1, 1]} : vector<32x208xbf16> to vector<32x176xbf16>
    %cst_47 = arith.constant dense<0.000000e+00> : vector<64x176xf32>
    %106 = tpu.matmul %104, %105, %cst_47 {dimension_numbers = #tpu.dot_dimension_numbers<[1], [0], [0], [1], [0, 0, 1, 1], [], []>} : vector<64x32xbf16>, vector<32x176xbf16>, vector<64x176xf32> -> vector<64x176xf32>
    %107 = arith.addf %102, %106 : vector<64x176xf32>
    %c5_48 = arith.constant 5 : index
    %c0_49 = arith.constant 0 : index
    %c0_50 = arith.constant 0 : index
    %108 = vector.load %arg4[%c5_48, %c0_49, %c0_50] : memref<9x64x32xbf16, #tpu.memory_space<vmem>>, vector<1x64x32xbf16>
    %109 = vector.shape_cast %108 : vector<1x64x32xbf16> to vector<64x32xbf16>
    %110 = vector.extract_strided_slice %81 {offsets = [0, 15], sizes = [32, 176], strides = [1, 1]} : vector<32x208xbf16> to vector<32x176xbf16>
    %cst_51 = arith.constant dense<0.000000e+00> : vector<64x176xf32>
    %111 = tpu.matmul %109, %110, %cst_51 {dimension_numbers = #tpu.dot_dimension_numbers<[1], [0], [0], [1], [0, 0, 1, 1], [], []>} : vector<64x32xbf16>, vector<32x176xbf16>, vector<64x176xf32> -> vector<64x176xf32>
    %112 = arith.addf %107, %111 : vector<64x176xf32>
    %c6_52 = arith.constant 6 : index
    %c0_53 = arith.constant 0 : index
    %c0_54 = arith.constant 0 : index
    %113 = vector.load %arg4[%c6_52, %c0_53, %c0_54] : memref<9x64x32xbf16, #tpu.memory_space<vmem>>, vector<1x64x32xbf16>
    %114 = vector.shape_cast %113 : vector<1x64x32xbf16> to vector<64x32xbf16>
    %115 = vector.extract_strided_slice %81 {offsets = [0, 26], sizes = [32, 176], strides = [1, 1]} : vector<32x208xbf16> to vector<32x176xbf16>
    %cst_55 = arith.constant dense<0.000000e+00> : vector<64x176xf32>
    %116 = tpu.matmul %114, %115, %cst_55 {dimension_numbers = #tpu.dot_dimension_numbers<[1], [0], [0], [1], [0, 0, 1, 1], [], []>} : vector<64x32xbf16>, vector<32x176xbf16>, vector<64x176xf32> -> vector<64x176xf32>
    %117 = arith.addf %112, %116 : vector<64x176xf32>
    %c7_56 = arith.constant 7 : index
    %c0_57 = arith.constant 0 : index
    %c0_58 = arith.constant 0 : index
    %118 = vector.load %arg4[%c7_56, %c0_57, %c0_58] : memref<9x64x32xbf16, #tpu.memory_space<vmem>>, vector<1x64x32xbf16>
    %119 = vector.shape_cast %118 : vector<1x64x32xbf16> to vector<64x32xbf16>
    %120 = vector.extract_strided_slice %81 {offsets = [0, 27], sizes = [32, 176], strides = [1, 1]} : vector<32x208xbf16> to vector<32x176xbf16>
    %cst_59 = arith.constant dense<0.000000e+00> : vector<64x176xf32>
    %121 = tpu.matmul %119, %120, %cst_59 {dimension_numbers = #tpu.dot_dimension_numbers<[1], [0], [0], [1], [0, 0, 1, 1], [], []>} : vector<64x32xbf16>, vector<32x176xbf16>, vector<64x176xf32> -> vector<64x176xf32>
    %122 = arith.addf %117, %121 : vector<64x176xf32>
    %c8_60 = arith.constant 8 : index
    %c0_61 = arith.constant 0 : index
    %c0_62 = arith.constant 0 : index
    %123 = vector.load %arg4[%c8_60, %c0_61, %c0_62] : memref<9x64x32xbf16, #tpu.memory_space<vmem>>, vector<1x64x32xbf16>
    %124 = vector.shape_cast %123 : vector<1x64x32xbf16> to vector<64x32xbf16>
    %125 = vector.extract_strided_slice %81 {offsets = [0, 28], sizes = [32, 176], strides = [1, 1]} : vector<32x208xbf16> to vector<32x176xbf16>
    %cst_63 = arith.constant dense<0.000000e+00> : vector<64x176xf32>
    %126 = tpu.matmul %124, %125, %cst_63 {dimension_numbers = #tpu.dot_dimension_numbers<[1], [0], [0], [1], [0, 0, 1, 1], [], []>} : vector<64x32xbf16>, vector<32x176xbf16>, vector<64x176xf32> -> vector<64x176xf32>
    %127 = arith.addf %122, %126 : vector<64x176xf32>
    %128 = vector.extract_strided_slice %127 {offsets = [0, 0], sizes = [64, 128], strides = [1, 1]} : vector<64x176xf32> to vector<64x128xf32>
    %129 = vector.extract_strided_slice %127 {offsets = [0, 1], sizes = [64, 128], strides = [1, 1]} : vector<64x176xf32> to vector<64x128xf32>
    %130 = arith.maximumf %128, %129 : vector<64x128xf32>
    %131 = vector.extract_strided_slice %127 {offsets = [0, 13], sizes = [64, 128], strides = [1, 1]} : vector<64x176xf32> to vector<64x128xf32>
    %132 = vector.extract_strided_slice %127 {offsets = [0, 14], sizes = [64, 128], strides = [1, 1]} : vector<64x176xf32> to vector<64x128xf32>
    %133 = arith.maximumf %131, %132 : vector<64x128xf32>
    %134 = arith.maximumf %130, %133 : vector<64x128xf32>
    %c0_64 = arith.constant 0 : index
    %c0_65 = arith.constant 0 : index
    %135 = vector.load %arg5[%c0_64, %c0_65] : memref<64x1xf32, #tpu.memory_space<vmem>>, vector<64x1xf32>
    %136 = vector.broadcast %135 : vector<64x1xf32> to vector<64x128xf32>
    %137 = arith.addf %134, %136 : vector<64x128xf32>
    %cst_66 = arith.constant 0.000000e+00 : f32
    %138 = vector.broadcast %cst_66 : f32 to vector<64x128xf32>
    %139 = arith.maximumf %137, %138 : vector<64x128xf32>
    %cst_67 = arith.constant 0.000000e+00 : f32
    %140 = vector.broadcast %cst_67 : f32 to vector<64x128xf32>
    %141 = vector.extract_strided_slice %139 {offsets = [0, 0], sizes = [64, 1], strides = [1, 1]} : vector<64x128xf32> to vector<64x1xf32>
    %c0_68 = arith.constant 0 : index
    %c0_69 = arith.constant 0 : index
    %c0_70 = arith.constant 0 : index
    %142 = vector.load %arg7[%c0_68, %c0_69, %c0_70] : memref<25x64x128xf32, #tpu.memory_space<vmem>>, vector<1x64x128xf32>
    %143 = vector.shape_cast %142 : vector<1x64x128xf32> to vector<64x128xf32>
    %144 = vector.broadcast %141 : vector<64x1xf32> to vector<64x128xf32>
    %145 = arith.mulf %144, %143 : vector<64x128xf32>
    %146 = arith.addf %140, %145 : vector<64x128xf32>
    %147 = vector.extract_strided_slice %139 {offsets = [0, 2], sizes = [64, 1], strides = [1, 1]} : vector<64x128xf32> to vector<64x1xf32>
    %c1_71 = arith.constant 1 : index
    %c0_72 = arith.constant 0 : index
    %c0_73 = arith.constant 0 : index
    %148 = vector.load %arg7[%c1_71, %c0_72, %c0_73] : memref<25x64x128xf32, #tpu.memory_space<vmem>>, vector<1x64x128xf32>
    %149 = vector.shape_cast %148 : vector<1x64x128xf32> to vector<64x128xf32>
    %150 = vector.broadcast %147 : vector<64x1xf32> to vector<64x128xf32>
    %151 = arith.mulf %150, %149 : vector<64x128xf32>
    %152 = arith.addf %146, %151 : vector<64x128xf32>
    %153 = vector.extract_strided_slice %139 {offsets = [0, 4], sizes = [64, 1], strides = [1, 1]} : vector<64x128xf32> to vector<64x1xf32>
    %c2_74 = arith.constant 2 : index
    %c0_75 = arith.constant 0 : index
    %c0_76 = arith.constant 0 : index
    %154 = vector.load %arg7[%c2_74, %c0_75, %c0_76] : memref<25x64x128xf32, #tpu.memory_space<vmem>>, vector<1x64x128xf32>
    %155 = vector.shape_cast %154 : vector<1x64x128xf32> to vector<64x128xf32>
    %156 = vector.broadcast %153 : vector<64x1xf32> to vector<64x128xf32>
    %157 = arith.mulf %156, %155 : vector<64x128xf32>
    %158 = arith.addf %152, %157 : vector<64x128xf32>
    %159 = vector.extract_strided_slice %139 {offsets = [0, 6], sizes = [64, 1], strides = [1, 1]} : vector<64x128xf32> to vector<64x1xf32>
    %c3_77 = arith.constant 3 : index
    %c0_78 = arith.constant 0 : index
    %c0_79 = arith.constant 0 : index
    %160 = vector.load %arg7[%c3_77, %c0_78, %c0_79] : memref<25x64x128xf32, #tpu.memory_space<vmem>>, vector<1x64x128xf32>
    %161 = vector.shape_cast %160 : vector<1x64x128xf32> to vector<64x128xf32>
    %162 = vector.broadcast %159 : vector<64x1xf32> to vector<64x128xf32>
    %163 = arith.mulf %162, %161 : vector<64x128xf32>
    %164 = arith.addf %158, %163 : vector<64x128xf32>
    %165 = vector.extract_strided_slice %139 {offsets = [0, 8], sizes = [64, 1], strides = [1, 1]} : vector<64x128xf32> to vector<64x1xf32>
    %c4_80 = arith.constant 4 : index
    %c0_81 = arith.constant 0 : index
    %c0_82 = arith.constant 0 : index
    %166 = vector.load %arg7[%c4_80, %c0_81, %c0_82] : memref<25x64x128xf32, #tpu.memory_space<vmem>>, vector<1x64x128xf32>
    %167 = vector.shape_cast %166 : vector<1x64x128xf32> to vector<64x128xf32>
    %168 = vector.broadcast %165 : vector<64x1xf32> to vector<64x128xf32>
    %169 = arith.mulf %168, %167 : vector<64x128xf32>
    %170 = arith.addf %164, %169 : vector<64x128xf32>
    %171 = vector.extract_strided_slice %139 {offsets = [0, 26], sizes = [64, 1], strides = [1, 1]} : vector<64x128xf32> to vector<64x1xf32>
    %c5_83 = arith.constant 5 : index
    %c0_84 = arith.constant 0 : index
    %c0_85 = arith.constant 0 : index
    %172 = vector.load %arg7[%c5_83, %c0_84, %c0_85] : memref<25x64x128xf32, #tpu.memory_space<vmem>>, vector<1x64x128xf32>
    %173 = vector.shape_cast %172 : vector<1x64x128xf32> to vector<64x128xf32>
    %174 = vector.broadcast %171 : vector<64x1xf32> to vector<64x128xf32>
    %175 = arith.mulf %174, %173 : vector<64x128xf32>
    %176 = arith.addf %170, %175 : vector<64x128xf32>
    %177 = vector.extract_strided_slice %139 {offsets = [0, 28], sizes = [64, 1], strides = [1, 1]} : vector<64x128xf32> to vector<64x1xf32>
    %c6_86 = arith.constant 6 : index
    %c0_87 = arith.constant 0 : index
    %c0_88 = arith.constant 0 : index
    %178 = vector.load %arg7[%c6_86, %c0_87, %c0_88] : memref<25x64x128xf32, #tpu.memory_space<vmem>>, vector<1x64x128xf32>
    %179 = vector.shape_cast %178 : vector<1x64x128xf32> to vector<64x128xf32>
    %180 = vector.broadcast %177 : vector<64x1xf32> to vector<64x128xf32>
    %181 = arith.mulf %180, %179 : vector<64x128xf32>
    %182 = arith.addf %176, %181 : vector<64x128xf32>
    %183 = vector.extract_strided_slice %139 {offsets = [0, 30], sizes = [64, 1], strides = [1, 1]} : vector<64x128xf32> to vector<64x1xf32>
    %c7_89 = arith.constant 7 : index
    %c0_90 = arith.constant 0 : index
    %c0_91 = arith.constant 0 : index
    %184 = vector.load %arg7[%c7_89, %c0_90, %c0_91] : memref<25x64x128xf32, #tpu.memory_space<vmem>>, vector<1x64x128xf32>
    %185 = vector.shape_cast %184 : vector<1x64x128xf32> to vector<64x128xf32>
    %186 = vector.broadcast %183 : vector<64x1xf32> to vector<64x128xf32>
    %187 = arith.mulf %186, %185 : vector<64x128xf32>
    %188 = arith.addf %182, %187 : vector<64x128xf32>
    %189 = vector.extract_strided_slice %139 {offsets = [0, 32], sizes = [64, 1], strides = [1, 1]} : vector<64x128xf32> to vector<64x1xf32>
    %c8_92 = arith.constant 8 : index
    %c0_93 = arith.constant 0 : index
    %c0_94 = arith.constant 0 : index
    %190 = vector.load %arg7[%c8_92, %c0_93, %c0_94] : memref<25x64x128xf32, #tpu.memory_space<vmem>>, vector<1x64x128xf32>
    %191 = vector.shape_cast %190 : vector<1x64x128xf32> to vector<64x128xf32>
    %192 = vector.broadcast %189 : vector<64x1xf32> to vector<64x128xf32>
    %193 = arith.mulf %192, %191 : vector<64x128xf32>
    %194 = arith.addf %188, %193 : vector<64x128xf32>
    %195 = vector.extract_strided_slice %139 {offsets = [0, 34], sizes = [64, 1], strides = [1, 1]} : vector<64x128xf32> to vector<64x1xf32>
    %c9 = arith.constant 9 : index
    %c0_95 = arith.constant 0 : index
    %c0_96 = arith.constant 0 : index
    %196 = vector.load %arg7[%c9, %c0_95, %c0_96] : memref<25x64x128xf32, #tpu.memory_space<vmem>>, vector<1x64x128xf32>
    %197 = vector.shape_cast %196 : vector<1x64x128xf32> to vector<64x128xf32>
    %198 = vector.broadcast %195 : vector<64x1xf32> to vector<64x128xf32>
    %199 = arith.mulf %198, %197 : vector<64x128xf32>
    %200 = arith.addf %194, %199 : vector<64x128xf32>
    %201 = vector.extract_strided_slice %139 {offsets = [0, 52], sizes = [64, 1], strides = [1, 1]} : vector<64x128xf32> to vector<64x1xf32>
    %c10 = arith.constant 10 : index
    %c0_97 = arith.constant 0 : index
    %c0_98 = arith.constant 0 : index
    %202 = vector.load %arg7[%c10, %c0_97, %c0_98] : memref<25x64x128xf32, #tpu.memory_space<vmem>>, vector<1x64x128xf32>
    %203 = vector.shape_cast %202 : vector<1x64x128xf32> to vector<64x128xf32>
    %204 = vector.broadcast %201 : vector<64x1xf32> to vector<64x128xf32>
    %205 = arith.mulf %204, %203 : vector<64x128xf32>
    %206 = arith.addf %200, %205 : vector<64x128xf32>
    %207 = vector.extract_strided_slice %139 {offsets = [0, 54], sizes = [64, 1], strides = [1, 1]} : vector<64x128xf32> to vector<64x1xf32>
    %c11 = arith.constant 11 : index
    %c0_99 = arith.constant 0 : index
    %c0_100 = arith.constant 0 : index
    %208 = vector.load %arg7[%c11, %c0_99, %c0_100] : memref<25x64x128xf32, #tpu.memory_space<vmem>>, vector<1x64x128xf32>
    %209 = vector.shape_cast %208 : vector<1x64x128xf32> to vector<64x128xf32>
    %210 = vector.broadcast %207 : vector<64x1xf32> to vector<64x128xf32>
    %211 = arith.mulf %210, %209 : vector<64x128xf32>
    %212 = arith.addf %206, %211 : vector<64x128xf32>
    %213 = vector.extract_strided_slice %139 {offsets = [0, 56], sizes = [64, 1], strides = [1, 1]} : vector<64x128xf32> to vector<64x1xf32>
    %c12 = arith.constant 12 : index
    %c0_101 = arith.constant 0 : index
    %c0_102 = arith.constant 0 : index
    %214 = vector.load %arg7[%c12, %c0_101, %c0_102] : memref<25x64x128xf32, #tpu.memory_space<vmem>>, vector<1x64x128xf32>
    %215 = vector.shape_cast %214 : vector<1x64x128xf32> to vector<64x128xf32>
    %216 = vector.broadcast %213 : vector<64x1xf32> to vector<64x128xf32>
    %217 = arith.mulf %216, %215 : vector<64x128xf32>
    %218 = arith.addf %212, %217 : vector<64x128xf32>
    %219 = vector.extract_strided_slice %139 {offsets = [0, 58], sizes = [64, 1], strides = [1, 1]} : vector<64x128xf32> to vector<64x1xf32>
    %c13 = arith.constant 13 : index
    %c0_103 = arith.constant 0 : index
    %c0_104 = arith.constant 0 : index
    %220 = vector.load %arg7[%c13, %c0_103, %c0_104] : memref<25x64x128xf32, #tpu.memory_space<vmem>>, vector<1x64x128xf32>
    %221 = vector.shape_cast %220 : vector<1x64x128xf32> to vector<64x128xf32>
    %222 = vector.broadcast %219 : vector<64x1xf32> to vector<64x128xf32>
    %223 = arith.mulf %222, %221 : vector<64x128xf32>
    %224 = arith.addf %218, %223 : vector<64x128xf32>
    %225 = vector.extract_strided_slice %139 {offsets = [0, 60], sizes = [64, 1], strides = [1, 1]} : vector<64x128xf32> to vector<64x1xf32>
    %c14 = arith.constant 14 : index
    %c0_105 = arith.constant 0 : index
    %c0_106 = arith.constant 0 : index
    %226 = vector.load %arg7[%c14, %c0_105, %c0_106] : memref<25x64x128xf32, #tpu.memory_space<vmem>>, vector<1x64x128xf32>
    %227 = vector.shape_cast %226 : vector<1x64x128xf32> to vector<64x128xf32>
    %228 = vector.broadcast %225 : vector<64x1xf32> to vector<64x128xf32>
    %229 = arith.mulf %228, %227 : vector<64x128xf32>
    %230 = arith.addf %224, %229 : vector<64x128xf32>
    %231 = vector.extract_strided_slice %139 {offsets = [0, 78], sizes = [64, 1], strides = [1, 1]} : vector<64x128xf32> to vector<64x1xf32>
    %c15 = arith.constant 15 : index
    %c0_107 = arith.constant 0 : index
    %c0_108 = arith.constant 0 : index
    %232 = vector.load %arg7[%c15, %c0_107, %c0_108] : memref<25x64x128xf32, #tpu.memory_space<vmem>>, vector<1x64x128xf32>
    %233 = vector.shape_cast %232 : vector<1x64x128xf32> to vector<64x128xf32>
    %234 = vector.broadcast %231 : vector<64x1xf32> to vector<64x128xf32>
    %235 = arith.mulf %234, %233 : vector<64x128xf32>
    %236 = arith.addf %230, %235 : vector<64x128xf32>
    %237 = vector.extract_strided_slice %139 {offsets = [0, 80], sizes = [64, 1], strides = [1, 1]} : vector<64x128xf32> to vector<64x1xf32>
    %c16 = arith.constant 16 : index
    %c0_109 = arith.constant 0 : index
    %c0_110 = arith.constant 0 : index
    %238 = vector.load %arg7[%c16, %c0_109, %c0_110] : memref<25x64x128xf32, #tpu.memory_space<vmem>>, vector<1x64x128xf32>
    %239 = vector.shape_cast %238 : vector<1x64x128xf32> to vector<64x128xf32>
    %240 = vector.broadcast %237 : vector<64x1xf32> to vector<64x128xf32>
    %241 = arith.mulf %240, %239 : vector<64x128xf32>
    %242 = arith.addf %236, %241 : vector<64x128xf32>
    %243 = vector.extract_strided_slice %139 {offsets = [0, 82], sizes = [64, 1], strides = [1, 1]} : vector<64x128xf32> to vector<64x1xf32>
    %c17 = arith.constant 17 : index
    %c0_111 = arith.constant 0 : index
    %c0_112 = arith.constant 0 : index
    %244 = vector.load %arg7[%c17, %c0_111, %c0_112] : memref<25x64x128xf32, #tpu.memory_space<vmem>>, vector<1x64x128xf32>
    %245 = vector.shape_cast %244 : vector<1x64x128xf32> to vector<64x128xf32>
    %246 = vector.broadcast %243 : vector<64x1xf32> to vector<64x128xf32>
    %247 = arith.mulf %246, %245 : vector<64x128xf32>
    %248 = arith.addf %242, %247 : vector<64x128xf32>
    %249 = vector.extract_strided_slice %139 {offsets = [0, 84], sizes = [64, 1], strides = [1, 1]} : vector<64x128xf32> to vector<64x1xf32>
    %c18 = arith.constant 18 : index
    %c0_113 = arith.constant 0 : index
    %c0_114 = arith.constant 0 : index
    %250 = vector.load %arg7[%c18, %c0_113, %c0_114] : memref<25x64x128xf32, #tpu.memory_space<vmem>>, vector<1x64x128xf32>
    %251 = vector.shape_cast %250 : vector<1x64x128xf32> to vector<64x128xf32>
    %252 = vector.broadcast %249 : vector<64x1xf32> to vector<64x128xf32>
    %253 = arith.mulf %252, %251 : vector<64x128xf32>
    %254 = arith.addf %248, %253 : vector<64x128xf32>
    %255 = vector.extract_strided_slice %139 {offsets = [0, 86], sizes = [64, 1], strides = [1, 1]} : vector<64x128xf32> to vector<64x1xf32>
    %c19 = arith.constant 19 : index
    %c0_115 = arith.constant 0 : index
    %c0_116 = arith.constant 0 : index
    %256 = vector.load %arg7[%c19, %c0_115, %c0_116] : memref<25x64x128xf32, #tpu.memory_space<vmem>>, vector<1x64x128xf32>
    %257 = vector.shape_cast %256 : vector<1x64x128xf32> to vector<64x128xf32>
    %258 = vector.broadcast %255 : vector<64x1xf32> to vector<64x128xf32>
    %259 = arith.mulf %258, %257 : vector<64x128xf32>
    %260 = arith.addf %254, %259 : vector<64x128xf32>
    %261 = vector.extract_strided_slice %139 {offsets = [0, 104], sizes = [64, 1], strides = [1, 1]} : vector<64x128xf32> to vector<64x1xf32>
    %c20 = arith.constant 20 : index
    %c0_117 = arith.constant 0 : index
    %c0_118 = arith.constant 0 : index
    %262 = vector.load %arg7[%c20, %c0_117, %c0_118] : memref<25x64x128xf32, #tpu.memory_space<vmem>>, vector<1x64x128xf32>
    %263 = vector.shape_cast %262 : vector<1x64x128xf32> to vector<64x128xf32>
    %264 = vector.broadcast %261 : vector<64x1xf32> to vector<64x128xf32>
    %265 = arith.mulf %264, %263 : vector<64x128xf32>
    %266 = arith.addf %260, %265 : vector<64x128xf32>
    %267 = vector.extract_strided_slice %139 {offsets = [0, 106], sizes = [64, 1], strides = [1, 1]} : vector<64x128xf32> to vector<64x1xf32>
    %c21 = arith.constant 21 : index
    %c0_119 = arith.constant 0 : index
    %c0_120 = arith.constant 0 : index
    %268 = vector.load %arg7[%c21, %c0_119, %c0_120] : memref<25x64x128xf32, #tpu.memory_space<vmem>>, vector<1x64x128xf32>
    %269 = vector.shape_cast %268 : vector<1x64x128xf32> to vector<64x128xf32>
    %270 = vector.broadcast %267 : vector<64x1xf32> to vector<64x128xf32>
    %271 = arith.mulf %270, %269 : vector<64x128xf32>
    %272 = arith.addf %266, %271 : vector<64x128xf32>
    %273 = vector.extract_strided_slice %139 {offsets = [0, 108], sizes = [64, 1], strides = [1, 1]} : vector<64x128xf32> to vector<64x1xf32>
    %c22 = arith.constant 22 : index
    %c0_121 = arith.constant 0 : index
    %c0_122 = arith.constant 0 : index
    %274 = vector.load %arg7[%c22, %c0_121, %c0_122] : memref<25x64x128xf32, #tpu.memory_space<vmem>>, vector<1x64x128xf32>
    %275 = vector.shape_cast %274 : vector<1x64x128xf32> to vector<64x128xf32>
    %276 = vector.broadcast %273 : vector<64x1xf32> to vector<64x128xf32>
    %277 = arith.mulf %276, %275 : vector<64x128xf32>
    %278 = arith.addf %272, %277 : vector<64x128xf32>
    %279 = vector.extract_strided_slice %139 {offsets = [0, 110], sizes = [64, 1], strides = [1, 1]} : vector<64x128xf32> to vector<64x1xf32>
    %c23 = arith.constant 23 : index
    %c0_123 = arith.constant 0 : index
    %c0_124 = arith.constant 0 : index
    %280 = vector.load %arg7[%c23, %c0_123, %c0_124] : memref<25x64x128xf32, #tpu.memory_space<vmem>>, vector<1x64x128xf32>
    %281 = vector.shape_cast %280 : vector<1x64x128xf32> to vector<64x128xf32>
    %282 = vector.broadcast %279 : vector<64x1xf32> to vector<64x128xf32>
    %283 = arith.mulf %282, %281 : vector<64x128xf32>
    %284 = arith.addf %278, %283 : vector<64x128xf32>
    %285 = vector.extract_strided_slice %139 {offsets = [0, 112], sizes = [64, 1], strides = [1, 1]} : vector<64x128xf32> to vector<64x1xf32>
    %c24 = arith.constant 24 : index
    %c0_125 = arith.constant 0 : index
    %c0_126 = arith.constant 0 : index
    %286 = vector.load %arg7[%c24, %c0_125, %c0_126] : memref<25x64x128xf32, #tpu.memory_space<vmem>>, vector<1x64x128xf32>
    %287 = vector.shape_cast %286 : vector<1x64x128xf32> to vector<64x128xf32>
    %288 = vector.broadcast %285 : vector<64x1xf32> to vector<64x128xf32>
    %289 = arith.mulf %288, %287 : vector<64x128xf32>
    %290 = arith.addf %284, %289 : vector<64x128xf32>
    %cst_127 = arith.constant dense<0.000000e+00> : vector<128xf32>
    %291 = vector.multi_reduction <add>, %290, %cst_127 [0] : vector<64x128xf32> to vector<128xf32>
    %292 = vector.shape_cast %291 : vector<128xf32> to vector<1x128xf32>
    %c0_128 = arith.constant 0 : index
    %c0_129 = arith.constant 0 : index
    %293 = vector.load %arg8[%c0_128, %c0_129] : memref<1x128xf32, #tpu.memory_space<vmem>>, vector<1x128xf32>
    %294 = arith.addf %292, %293 : vector<1x128xf32>
    %cst_130 = arith.constant 0.000000e+00 : f32
    %295 = vector.broadcast %cst_130 : f32 to vector<1x128xf32>
    %296 = arith.maximumf %294, %295 : vector<1x128xf32>
    %c0_131 = arith.constant 0 : index
    %c0_132 = arith.constant 0 : index
    %297 = vector.load %arg9[%c0_131, %c0_132] : memref<128x128xf32, #tpu.memory_space<vmem>>, vector<128x128xf32>
    %cst_133 = arith.constant dense<0.000000e+00> : vector<1x128xf32>
    %298 = tpu.matmul %296, %297, %cst_133 {dimension_numbers = #tpu.dot_dimension_numbers<[1], [0], [0], [1], [0, 0, 1, 1], [], []>} : vector<1x128xf32>, vector<128x128xf32>, vector<1x128xf32> -> vector<1x128xf32>
    %c0_134 = arith.constant 0 : index
    %c0_135 = arith.constant 0 : index
    %299 = vector.load %arg10[%c0_134, %c0_135] : memref<1x128xf32, #tpu.memory_space<vmem>>, vector<1x128xf32>
    %300 = arith.addf %298, %299 : vector<1x128xf32>
    %301 = vector.shape_cast %300 : vector<1x128xf32> to vector<1x1x128xf32>
    %c0_136 = arith.constant 0 : index
    %c0_137 = arith.constant 0 : index
    %c0_138 = arith.constant 0 : index
    %302 = vector.load %arg11[%c0_136, %c0_137, %c0_138] : memref<1x1x128xf32, #tpu.memory_space<vmem>>, vector<1x1x128xf32>
    tpu.vector_store %arg11[%c0_136, %c0_137, %c0_138], %301 {strides = array<i32>} : memref<1x1x128xf32, #tpu.memory_space<vmem>>, vector<1x1x128xf32>,
    return
  }
  func.func @transform_0(%arg0: i32) -> (i32, i32, i32) {
    %c0_i32 = arith.constant 0 : i32
    %c0_i32_0 = arith.constant 0 : i32
    %c0_i32_1 = arith.constant 0 : i32
    return %arg0, %c0_i32, %c0_i32_0 : i32, i32, i32
  }
  func.func @transform_1(%arg0: i32) -> (i32, i32, i32) {
    %c0_i32 = arith.constant 0 : i32
    %c0_i32_0 = arith.constant 0 : i32
    %c0_i32_1 = arith.constant 0 : i32
    %c0_i32_2 = arith.constant 0 : i32
    return %c0_i32, %c0_i32_0, %c0_i32_1 : i32, i32, i32
  }
  func.func @transform_2(%arg0: i32) -> (i32, i32) {
    %c0_i32 = arith.constant 0 : i32
    %c0_i32_0 = arith.constant 0 : i32
    %c0_i32_1 = arith.constant 0 : i32
    return %c0_i32, %c0_i32_0 : i32, i32
  }
  func.func @transform_3(%arg0: i32) -> (i32, i32, i32) {
    %c0_i32 = arith.constant 0 : i32
    %c0_i32_0 = arith.constant 0 : i32
    %c0_i32_1 = arith.constant 0 : i32
    %c0_i32_2 = arith.constant 0 : i32
    return %c0_i32, %c0_i32_0, %c0_i32_1 : i32, i32, i32
  }
  func.func @transform_4(%arg0: i32) -> (i32, i32) {
    %c0_i32 = arith.constant 0 : i32
    %c0_i32_0 = arith.constant 0 : i32
    %c0_i32_1 = arith.constant 0 : i32
    return %c0_i32, %c0_i32_0 : i32, i32
  }
  func.func @transform_5(%arg0: i32) -> (i32, i32) {
    %c0_i32 = arith.constant 0 : i32
    %c0_i32_0 = arith.constant 0 : i32
    %c0_i32_1 = arith.constant 0 : i32
    return %c0_i32, %c0_i32_0 : i32, i32
  }
  func.func @transform_6(%arg0: i32) -> (i32, i32, i32) {
    %c0_i32 = arith.constant 0 : i32
    %c0_i32_0 = arith.constant 0 : i32
    %c0_i32_1 = arith.constant 0 : i32
    %c0_i32_2 = arith.constant 0 : i32
    return %c0_i32, %c0_i32_0, %c0_i32_1 : i32, i32, i32
  }
  func.func @transform_7(%arg0: i32) -> (i32, i32) {
    %c0_i32 = arith.constant 0 : i32
    %c0_i32_0 = arith.constant 0 : i32
    %c0_i32_1 = arith.constant 0 : i32
    return %c0_i32, %c0_i32_0 : i32, i32
  }
  func.func @transform_8(%arg0: i32) -> (i32, i32) {
    %c0_i32 = arith.constant 0 : i32
    %c0_i32_0 = arith.constant 0 : i32
    %c0_i32_1 = arith.constant 0 : i32
    return %c0_i32, %c0_i32_0 : i32, i32
  }
  func.func @transform_9(%arg0: i32) -> (i32, i32) {
    %c0_i32 = arith.constant 0 : i32
    %c0_i32_0 = arith.constant 0 : i32
    %c0_i32_1 = arith.constant 0 : i32
    return %c0_i32, %c0_i32_0 : i32, i32
  }
  func.func @transform_10(%arg0: i32) -> (i32, i32, i32) {
    %c0_i32 = arith.constant 0 : i32
    %c0_i32_0 = arith.constant 0 : i32
    %c0_i32_1 = arith.constant 0 : i32
    return %arg0, %c0_i32, %c0_i32_0 : i32, i32, i32
  }
}

</mosaic_0001>

<llo_original>
// kernel: net_forward.1
$region0: #{net_forward.1}
  #allocation0 [shape = 'u32[]', space=smem, size = 0x4, offset = 0x4, fixed_abs, tag = 'smem constant byte address 0x4 - core index']
  #allocation1 [shape = 'u32[72,128]{1,0:T(1,128)}', space=vmem, size = 0x9000, scoped, tag = 'internal scratch']
  %s0 = inlined_call_operand.vmem [shape: f32[2,1,832], index: 0, kind: input, shape index: {}]
  %s1 = inlined_call_operand.vmem [shape: f32[9,32,1], index: 1, kind: input, shape index: {}]
  %s2 = inlined_call_operand.vmem [shape: f32[32,1], index: 2, kind: input, shape index: {}]
  %s3 = inlined_call_operand.vmem [shape: bf16[9,64,32], index: 3, kind: input, shape index: {}]
  %s4 = inlined_call_operand.vmem [shape: f32[64,1], index: 4, kind: input, shape index: {}]
  %s5 = inlined_call_operand.vmem [shape: bf16[704,208], index: 5, kind: input, shape index: {}]
  %s6 = inlined_call_operand.hbm [shape: f32[25,64,128], index: 6, kind: input, shape index: {}]
  %s7 = inlined_call_operand.vmem [shape: f32[1,128], index: 7, kind: input, shape index: {}]
  %s8 = inlined_call_operand.vmem [shape: f32[128,128], index: 8, kind: input, shape index: {}]
  %s9 = inlined_call_operand.vmem [shape: f32[1,128], index: 9, kind: input, shape index: {}]
  %s10 = inlined_call_operand.hbm [shape: f32[2,1,128], index: 10, kind: output, shape index: {}]
  %s11 = sld [smem:[#allocation0]]
  $region77: #{net_forward.1} parent=0
    _
  %s13 = ssub.s32 1, %s11
  %s14 = scalar_select 0, %s13, %s11
  $region1: #{net_forward.1} parent=0
    #allocation2 [shape = 'u8[819200]{0}', space=vmem, size = 0xc8000, scoped, tag = 'input window, operand 6, single buffered']
    #allocation3 [shape = 's32[2]{0}', space=sflag, size = 0x8, scoped, tag = 'scoped memory for net_forward.1']
    #allocation4 [shape = 's32[2]{0}', space=sflag, size = 0x8, scoped, tag = 'scoped memory for net_forward.1']
    #allocation5 [shape = 'u8[1024]{0}', space=vmem, size = 0x400, scoped, tag = 'output window, operand 0']
    %15 = vsyncpa [#allocation3], 0
    %16 = vsyncpa [#allocation4], 0
    %s17 = scalar_lea.sflag [#allocation4], 1
    %18 = vsyncpa %s17, 0
    loop: start=0, step=1, limit=4
    $region2: #{net_forward.1} parent=1 // loop_pre_header
      _
    $region3: #{net_forward.1} parent=1 // loop_header
      %s20 = sphi 0, %s24
      %p21 = scmp.ge.s32.totalorder %s20, 4
      %s30 = sphi 0, %s32
      %s33 = sphi 0, %s30
      %s34 = sphi 0, %s33
      %s50 = sphi 0, %s34
      %s54 = sphi 0, %s54
      %s56 = sphi 0, %s54
      %s57 = sphi 0, %s56
      %s71 = sphi 0, %s57
      %s75 = sphi 0, %s75
      %s77 = sphi 0, %s75
      %s78 = sphi 0, %s77
      %s92 = sphi 0, %s78
      %s96 = sphi 0, %s96
      %s98 = sphi 0, %s96
      %s99 = sphi 0, %s98
      %s113 = sphi 0, %s99
      %s117 = sphi 0, %s117
      %s119 = sphi 0, %s117
      %s120 = sphi 0, %s119
      %s134 = sphi 0, %s120
      %s138 = sphi 0, %s138
      %s140 = sphi 0, %s138
      %s141 = sphi 0, %s140
      %s155 = sphi 0, %s141
      %s159 = sphi 0, %s159
      %s161 = sphi 0, %s159
      %s162 = sphi 0, %s161
      %s176 = sphi 0, %s162
      %s180 = sphi 0, %s180
      %s182 = sphi 0, %s180
      %s183 = sphi 0, %s182
      %s197 = sphi 0, %s183
      %s201 = sphi 0, %s201
      %s203 = sphi 0, %s201
      %s204 = sphi 0, %s203
      %s218 = sphi 0, %s204
      %s222 = sphi 0, %s222
      %s224 = sphi 0, %s222
      %s225 = sphi 0, %s224
      %s239 = sphi 0, %s225
      %s245 = sphi 0, %s247
      %s248 = sphi 0, %s245
      %s249 = sphi 0, %s248
      %s265 = sphi 0, %s249
    $region4: #{net_forward.1} parent=1 // loop_header_branch
      %23 = sbr.rel (%p21) target = $region8
    $region5: #{net_forward.1} parent=1 // loop_body
      %s25 = ssub.s32 %s20, 1
      %s26 = ssub.s32 %s20, 2
      %s27 = sadd.s32 %s20, 1
      %s28 = ssub.s32 %s20, %s27
      %p29 = scmp.eq.s32.totalorder %s28, 0
      %s31 = sadd.s32 %s30, 1
      %s32 = scalar_select %p29, %s30, %s31
      %p35 = pneg %p29
      %p36 = scmp.eq.s32.totalorder %s20, 1
      %p37 = por %p35, %p36
      %p38 = scmp.ne.s32.totalorder %s30, %s33
      %p39 = scmp.eq.s32.totalorder %s20, 0
      %p40 = por %p38, %p39
      %p41 = scmp.ne.s32.totalorder %s30, %s33
      %p42 = scmp.eq.s32.totalorder %s25, 1
      %p43 = por %p41, %p42
      %p44 = scmp.ne.s32.totalorder %s33, %s34
      %p45 = scmp.eq.s32.totalorder %s25, 0
      %p46 = por %p44, %p45
      %p47 = scmp.ne.s32.totalorder %s33, %s34
      %p48 = scmp.eq.s32.totalorder %s26, 1
      %p49 = por %p47, %p48
      %p51 = scmp.ne.s32.totalorder %s34, %s50
      %p52 = scmp.eq.s32.totalorder %s26, 0
      %p53 = por %p51, %p52
      %s55 = sadd.s32 %s54, 1
      %p58 = scmp.eq.s32.totalorder %s20, 1
      %p59 = scmp.ne.s32.totalorder %s54, %s56
      %p60 = scmp.eq.s32.totalorder %s20, 0
      %p61 = por %p59, %p60
      %p62 = scmp.ne.s32.totalorder %s54, %s56
      %p63 = scmp.eq.s32.totalorder %s25, 1
      %p64 = por %p62, %p63
      %p65 = scmp.ne.s32.totalorder %s56, %s57
      %p66 = scmp.eq.s32.totalorder %s25, 0
      %p67 = por %p65, %p66
      %p68 = scmp.ne.s32.totalorder %s56, %s57
      %p69 = scmp.eq.s32.totalorder %s26, 1
      %p70 = por %p68, %p69
      %p72 = scmp.ne.s32.totalorder %s57, %s71
      %p73 = scmp.eq.s32.totalorder %s26, 0
      %p74 = por %p72, %p73
      %s76 = sadd.s32 %s75, 1
      %p79 = scmp.eq.s32.totalorder %s20, 1
      %p80 = scmp.ne.s32.totalorder %s75, %s77
      %p81 = scmp.eq.s32.totalorder %s20, 0
      %p82 = por %p80, %p81
      %p83 = scmp.ne.s32.totalorder %s75, %s77
      %p84 = scmp.eq.s32.totalorder %s25, 1
      %p85 = por %p83, %p84
      %p86 = scmp.ne.s32.totalorder %s77, %s78
      %p87 = scmp.eq.s32.totalorder %s25, 0
      %p88 = por %p86, %p87
      %p89 = scmp.ne.s32.totalorder %s77, %s78
      %p90 = scmp.eq.s32.totalorder %s26, 1
      %p91 = por %p89, %p90
      %p93 = scmp.ne.s32.totalorder %s78, %s92
      %p94 = scmp.eq.s32.totalorder %s26, 0
      %p95 = por %p93, %p94
      %s97 = sadd.s32 %s96, 1
      %p100 = scmp.eq.s32.totalorder %s20, 1
      %p101 = scmp.ne.s32.totalorder %s96, %s98
      %p102 = scmp.eq.s32.totalorder %s20, 0
      %p103 = por %p101, %p102
      %p104 = scmp.ne.s32.totalorder %s96, %s98
      %p105 = scmp.eq.s32.totalorder %s25, 1
      %p106 = por %p104, %p105
      %p107 = scmp.ne.s32.totalorder %s98, %s99
      %p108 = scmp.eq.s32.totalorder %s25, 0
      %p109 = por %p107, %p108
      %p110 = scmp.ne.s32.totalorder %s98, %s99
      %p111 = scmp.eq.s32.totalorder %s26, 1
      %p112 = por %p110, %p111
      %p114 = scmp.ne.s32.totalorder %s99, %s113
      %p115 = scmp.eq.s32.totalorder %s26, 0
      %p116 = por %p114, %p115
      %s118 = sadd.s32 %s117, 1
      %p121 = scmp.eq.s32.totalorder %s20, 1
      %p122 = scmp.ne.s32.totalorder %s117, %s119
      %p123 = scmp.eq.s32.totalorder %s20, 0
      %p124 = por %p122, %p123
      %p125 = scmp.ne.s32.totalorder %s117, %s119
      %p126 = scmp.eq.s32.totalorder %s25, 1
      %p127 = por %p125, %p126
      %p128 = scmp.ne.s32.totalorder %s119, %s120
      %p129 = scmp.eq.s32.totalorder %s25, 0
      %p130 = por %p128, %p129
      %p131 = scmp.ne.s32.totalorder %s119, %s120
      %p132 = scmp.eq.s32.totalorder %s26, 1
      %p133 = por %p131, %p132
      %p135 = scmp.ne.s32.totalorder %s120, %s134
      %p136 = scmp.eq.s32.totalorder %s26, 0
      %p137 = por %p135, %p136
      %s139 = sadd.s32 %s138, 1
      %p142 = scmp.eq.s32.totalorder %s20, 1
      %p143 = scmp.ne.s32.totalorder %s138, %s140
      %p144 = scmp.eq.s32.totalorder %s20, 0
      %p145 = por %p143, %p144
      %p146 = scmp.ne.s32.totalorder %s138, %s140
      %p147 = scmp.eq.s32.totalorder %s25, 1
      %p148 = por %p146, %p147
      %p149 = scmp.ne.s32.totalorder %s140, %s141
      %p150 = scmp.eq.s32.totalorder %s25, 0
      %p151 = por %p149, %p150
      %p152 = scmp.ne.s32.totalorder %s140, %s141
      %p153 = scmp.eq.s32.totalorder %s26, 1
      %p154 = por %p152, %p153
      %p156 = scmp.ne.s32.totalorder %s141, %s155
      %p157 = scmp.eq.s32.totalorder %s26, 0
      %p158 = por %p156, %p157
      %s160 = sadd.s32 %s159, 1
      %p163 = scmp.eq.s32.totalorder %s20, 1
      %p164 = scmp.ne.s32.totalorder %s159, %s161
      %p165 = scmp.eq.s32.totalorder %s20, 0
      %p166 = por %p164, %p165
      %p167 = scmp.ne.s32.totalorder %s159, %s161
      %p168 = scmp.eq.s32.totalorder %s25, 1
      %p169 = por %p167, %p168
      %p170 = scmp.ne.s32.totalorder %s161, %s162
      %p171 = scmp.eq.s32.totalorder %s25, 0
      %p172 = por %p170, %p171
      %p173 = scmp.ne.s32.totalorder %s161, %s162
      %p174 = scmp.eq.s32.totalorder %s26, 1
      %p175 = por %p173, %p174
      %p177 = scmp.ne.s32.totalorder %s162, %s176
      %p178 = scmp.eq.s32.totalorder %s26, 0
      %p179 = por %p177, %p178
      %s181 = sadd.s32 %s180, 1
      %p184 = scmp.eq.s32.totalorder %s20, 1
      %p185 = scmp.ne.s32.totalorder %s180, %s182
      %p186 = scmp.eq.s32.totalorder %s20, 0
      %p187 = por %p185, %p186
      %p188 = scmp.ne.s32.totalorder %s180, %s182
      %p189 = scmp.eq.s32.totalorder %s25, 1
      %p190 = por %p188, %p189
      %p191 = scmp.ne.s32.totalorder %s182, %s183
      %p192 = scmp.eq.s32.totalorder %s25, 0
      %p193 = por %p191, %p192
      %p194 = scmp.ne.s32.totalorder %s182, %s183
      %p195 = scmp.eq.s32.totalorder %s26, 1
      %p196 = por %p194, %p195
      %p198 = scmp.ne.s32.totalorder %s183, %s197
      %p199 = scmp.eq.s32.totalorder %s26, 0
      %p200 = por %p198, %p199
      %s202 = sadd.s32 %s201, 1
      %p205 = scmp.eq.s32.totalorder %s20, 1
      %p206 = scmp.ne.s32.totalorder %s201, %s203
      %p207 = scmp.eq.s32.totalorder %s20, 0
      %p208 = por %p206, %p207
      %p209 = scmp.ne.s32.totalorder %s201, %s203
      %p210 = scmp.eq.s32.totalorder %s25, 1
      %p211 = por %p209, %p210
      %p212 = scmp.ne.s32.totalorder %s203, %s204
      %p213 = scmp.eq.s32.totalorder %s25, 0
      %p214 = por %p212, %p213
      %p215 = scmp.ne.s32.totalorder %s203, %s204
      %p216 = scmp.eq.s32.totalorder %s26, 1
      %p217 = por %p215, %p216
      %p219 = scmp.ne.s32.totalorder %s204, %s218
      %p220 = scmp.eq.s32.totalorder %s26, 0
      %p221 = por %p219, %p220
      %s223 = sadd.s32 %s222, 1
      %p226 = scmp.eq.s32.totalorder %s20, 1
      %p227 = scmp.ne.s32.totalorder %s222, %s224
      %p228 = scmp.eq.s32.totalorder %s20, 0
      %p229 = por %p227, %p228
      %p230 = scmp.ne.s32.totalorder %s222, %s224
      %p231 = scmp.eq.s32.totalorder %s25, 1
      %p232 = por %p230, %p231
      %p233 = scmp.ne.s32.totalorder %s224, %s225
      %p234 = scmp.eq.s32.totalorder %s25, 0
      %p235 = por %p233, %p234
      %p236 = scmp.ne.s32.totalorder %s224, %s225
      %p237 = scmp.eq.s32.totalorder %s26, 1
      %p238 = por %p236, %p237
      %p240 = scmp.ne.s32.totalorder %s225, %s239
      %p241 = scmp.eq.s32.totalorder %s26, 0
      %p242 = por %p240, %p241
      %s243 = ssub.s32 %s20, %s27
      %p244 = scmp.eq.s32.totalorder %s243, 0
      %s246 = sadd.s32 %s245, 1
      %s247 = scalar_select %p244, %s245, %s246
      %p250 = pneg %p244
      %p251 = scmp.eq.s32.totalorder %s20, 1
      %p252 = por %p250, %p251
      %p253 = scmp.ne.s32.totalorder %s245, %s248
      %p254 = scmp.eq.s32.totalorder %s20, 0
      %p255 = por %p253, %p254
      %p256 = scmp.ne.s32.totalorder %s245, %s248
      %p257 = scmp.eq.s32.totalorder %s25, 1
      %p258 = por %p256, %p257
      %p259 = scmp.ne.s32.totalorder %s248, %s249
      %p260 = scmp.eq.s32.totalorder %s25, 0
      %p261 = por %p259, %p260
      %p262 = scmp.ne.s32.totalorder %s248, %s249
      %p263 = scmp.eq.s32.totalorder %s26, 1
      %p264 = por %p262, %p263
      %p266 = scmp.ne.s32.totalorder %s249, %s265
      %p267 = scmp.eq.s32.totalorder %s26, 0
      %p268 = por %p266, %p267
      %p269 = scmp.le.s32.totalorder 1, %s20
      %p270 = scmp.lt.s32.totalorder %s20, 3
      %p271 = pnand %p269, %p270
      %p272 = pneg %p271
      // Predicated region
      $region9: #{net_forward.1} parent=5 // pred_check
        _
      $region10: #{net_forward.1} parent=5 // pred_check_branch
        %274 = sbr.rel (%p271) target = $region12
      $region11: #{net_forward.1} parent=5 // pred_region
        %s275 = ssub.s32 %s20, 1
        // Predicated region
        $region13: #{net_forward.1} parent=11 // pred_check
          %p276 = pneg %p67
        $region14: #{net_forward.1} parent=11 // pred_check_branch
          %278 = sbr.rel (%p276) target = $region16
        $region15: #{net_forward.1} parent=11 // pred_region
          _
        $region16: #{net_forward.1} parent=11 // pred_fallthru
          _
        // Predicated region
        $region17: #{net_forward.1} parent=11 // pred_check
          %p279 = pneg %p88
        $region18: #{net_forward.1} parent=11 // pred_check_branch
          %281 = sbr.rel (%p279) target = $region20
        $region19: #{net_forward.1} parent=11 // pred_region
          _
        $region20: #{net_forward.1} parent=11 // pred_fallthru
          _
        // Predicated region
        $region21: #{net_forward.1} parent=11 // pred_check
          %p282 = pneg %p109
        $region22: #{net_forward.1} parent=11 // pred_check_branch
          %284 = sbr.rel (%p282) target = $region24
        $region23: #{net_forward.1} parent=11 // pred_region
          _
        $region24: #{net_forward.1} parent=11 // pred_fallthru
          _
        // Predicated region
        $region25: #{net_forward.1} parent=11 // pred_check
          %p285 = pneg %p130
        $region26: #{net_forward.1} parent=11 // pred_check_branch
          %287 = sbr.rel (%p285) target = $region28
        $region27: #{net_forward.1} parent=11 // pred_region
          _
        $region28: #{net_forward.1} parent=11 // pred_fallthru
          _
        // Predicated region
        $region29: #{net_forward.1} parent=11 // pred_check
          %p288 = pneg %p151
        $region30: #{net_forward.1} parent=11 // pred_check_branch
          %290 = sbr.rel (%p288) target = $region32
        $region31: #{net_forward.1} parent=11 // pred_region
          _
        $region32: #{net_forward.1} parent=11 // pred_fallthru
          _
        // Predicated region
        $region33: #{net_forward.1} parent=11 // pred_check
          %p291 = pneg %p172
        $region34: #{net_forward.1} parent=11 // pred_check_branch
          %293 = sbr.rel (%p291) target = $region36
        $region35: #{net_forward.1} parent=11 // pred_region
          %295 = vsyncadd [#allocation3], 0
          %s296 = sshll.u32 %s6, 4
          %s297 = int_to_ptr.hbm [resolvable:$true] %s296
          %s298 = sshll.u32 [#allocation2], 4
          %s299 = int_to_ptr.vmem [resolvable:$true] %s298
          %304 = dma.hbm_to_vmem [thread:$0]  %s297, 25600, %s299, [#allocation3], 128, 128, 8
        $region36: #{net_forward.1} parent=11 // pred_fallthru
          _
        // Predicated region
        $region37: #{net_forward.1} parent=11 // pred_check
          %p305 = pneg %p193
        $region38: #{net_forward.1} parent=11 // pred_check_branch
          %307 = sbr.rel (%p305) target = $region40
        $region39: #{net_forward.1} parent=11 // pred_region
          _
        $region40: #{net_forward.1} parent=11 // pred_fallthru
          _
        // Predicated region
        $region41: #{net_forward.1} parent=11 // pred_check
          %p308 = pneg %p214
        $region42: #{net_forward.1} parent=11 // pred_check_branch
          %310 = sbr.rel (%p308) target = $region44
        $region43: #{net_forward.1} parent=11 // pred_region
          _
        $region44: #{net_forward.1} parent=11 // pred_fallthru
          _
        // Predicated region
        $region45: #{net_forward.1} parent=11 // pred_check
          %p311 = pneg %p235
        $region46: #{net_forward.1} parent=11 // pred_check_branch
          %313 = sbr.rel (%p311) target = $region48
        $region47: #{net_forward.1} parent=11 // pred_region
          _
        $region48: #{net_forward.1} parent=11 // pred_fallthru
          _
      $region12: #{net_forward.1} parent=5 // pred_fallthru
        _
      %p314 = scmp.lt.s32.totalorder %s20, 2
      // Predicated region
      $region49: #{net_forward.1} parent=5 // pred_check
        %p315 = pneg %p314
      $region50: #{net_forward.1} parent=5 // pred_check_branch
        %317 = sbr.rel (%p315) target = $region52
      $region51: #{net_forward.1} parent=5 // pred_region
        // Predicated region
        $region53: #{net_forward.1} parent=51 // pred_check
          %p318 = pneg %p40
        $region54: #{net_forward.1} parent=51 // pred_check_branch
          %320 = sbr.rel (%p318) target = $region56
        $region55: #{net_forward.1} parent=51 // pred_region
          %p321 = scmp.lt.s32.totalorder %s20, 1
          %s322 = scalar_select %p321, %s20, 1
          %s323 = smul.addr %s322, 7
          %s324 = scalar_lea.vmem %s0, %s323
        $region56: #{net_forward.1} parent=51 // pred_fallthru
          _
      $region52: #{net_forward.1} parent=5 // pred_fallthru
        _
      %p325 = scmp.le.s32.totalorder 1, %s20
      %p326 = scmp.lt.s32.totalorder %s20, 3
      %p327 = pnand %p325, %p326
      %p328 = pneg %p327
      // Predicated region
      $region57: #{net_forward.1} parent=5 // pred_check
        _
      $region58: #{net_forward.1} parent=5 // pred_check_branch
        %330 = sbr.rel (%p327) target = $region60
      $region59: #{net_forward.1} parent=5 // pred_region
        %s331 = ssub.s32 %s20, 1
        // Predicated region
        $region61: #{net_forward.1} parent=59 // pred_check
          %p332 = pneg %p172
        $region62: #{net_forward.1} parent=59 // pred_check_branch
          %334 = sbr.rel (%p332) target = $region64
        $region63: #{net_forward.1} parent=59 // pred_region
          %336 = dma.done [#allocation3], 25600
        $region64: #{net_forward.1} parent=59 // pred_fallthru
          _
        %p337 = scmp.lt.s32.totalorder %s25, 1
        %s338 = scalar_select %p337, %s25, 1
        %s339 = smul.addr %s338, 7
        %s340 = scalar_lea.vmem %s0, %s339
        %p341 = pneg %p46
        %p342 = pneg %p43
        %p343 = pneg %p67
        %p344 = pneg %p64
        %p345 = pneg %p88
        %p346 = pneg %p85
        %p347 = pneg %p109
        %p348 = pneg %p106
        %p349 = pneg %p130
        %p350 = pneg %p127
        %p351 = pneg %p151
        %p352 = pneg %p148
        %p353 = pneg %p172
        %p354 = pneg %p169
        %p355 = pneg %p193
        %p356 = pneg %p190
        %p357 = pneg %p214
        %p358 = pneg %p211
        %p359 = pneg %p235
        %p360 = pneg %p232
        %p361 = pneg %p261
        %p362 = pneg %p258
        %s363 = sand.u32 %s248, 1
        %s364 = scalar_lea.sflag [#allocation4], %s363
        %s365 = sand.u32 %s248, 1
        %s366 = scalar_lea.vmem [#allocation5], %s365
        %p367 = scmp.lt.s32.totalorder %s25, 1
        %s368 = scalar_select %p367, %s25, 1
        %s369 = smul.addr %s368, 7
        %s370 = scalar_lea.vmem %s0, %s369
        %v372 = vld [vmem:[%s370] sm:$0x7f]
        %v373 = vld [vmem:[%s1] sm:$0xff]
        %v374 = vld [vmem:[%s1 + $0x8] sm:$0xff]
        %v375 = vld [vmem:[%s1 + $0x10] sm:$0xff]
        %v376 = vld [vmem:[%s1 + $0x18] sm:$0xff]
        %378 = vset.pattern.permute.xlu0 0
        %379 = vperm.xlu0 %378, %v373
        %v380 = vpop.permute.xlu0 %379
        %383 = vset.pattern.permute.xlu0 0
        %384 = vperm.xlu0 %383, %v374
        %v385 = vpop.permute.xlu0 %384
        %388 = vset.pattern.permute.xlu0 0
        %389 = vperm.xlu0 %388, %v375
        %v390 = vpop.permute.xlu0 %389
        %393 = vset.pattern.permute.xlu0 0
        %394 = vperm.xlu0 %393, %v376
        %v395 = vpop.permute.xlu0 %394
        %v398 = vperm.slane %v372, 0
        %v399 = vperm.slane %v372, 1
        %v400 = vperm.slane %v372, 2
        %v401 = vperm.slane %v372, 3
        %v402 = vperm.slane %v372, 4
        %v403 = vperm.slane %v372, 5
        %v410 = vmul.f32 %v380, %v398
        %v411 = vmul.f32 %v380, %v399
        %v412 = vmul.f32 %v380, %v400
        %v413 = vmul.f32 %v380, %v401
        %v414 = vmul.f32 %v380, %v402
        %v415 = vmul.f32 %v380, %v403
        %v416 = vmul.f32 %v385, %v398
        %v417 = vmul.f32 %v385, %v399
        %v418 = vmul.f32 %v385, %v400
        %v419 = vmul.f32 %v385, %v401
        %v420 = vmul.f32 %v385, %v402
        %v421 = vmul.f32 %v385, %v403
        %v422 = vmul.f32 %v390, %v398
        %v423 = vmul.f32 %v390, %v399
        %v424 = vmul.f32 %v390, %v400
        %v425 = vmul.f32 %v390, %v401
        %v426 = vmul.f32 %v390, %v402
        %v427 = vmul.f32 %v390, %v403
        %v428 = vmul.f32 %v395, %v398
        %v429 = vmul.f32 %v395, %v399
        %v430 = vmul.f32 %v395, %v400
        %v431 = vmul.f32 %v395, %v401
        %v432 = vmul.f32 %v395, %v402
        %v433 = vmul.f32 %v395, %v403
        %v434 = vadd.f32 %v410, 0.0
        %v435 = vadd.f32 %v411, 0.0
        %v436 = vadd.f32 %v412, 0.0
        %v437 = vadd.f32 %v413, 0.0
        %v438 = vadd.f32 %v414, 0.0
        %v439 = vadd.f32 %v415, 0.0
        %v440 = vadd.f32 %v416, 0.0
        %v441 = vadd.f32 %v417, 0.0
        %v442 = vadd.f32 %v418, 0.0
        %v443 = vadd.f32 %v419, 0.0
        %v444 = vadd.f32 %v420, 0.0
        %v445 = vadd.f32 %v421, 0.0
        %v446 = vadd.f32 %v422, 0.0
        %v447 = vadd.f32 %v423, 0.0
        %v448 = vadd.f32 %v424, 0.0
        %v449 = vadd.f32 %v425, 0.0
        %v450 = vadd.f32 %v426, 0.0
        %v451 = vadd.f32 %v427, 0.0
        %v452 = vadd.f32 %v428, 0.0
        %v453 = vadd.f32 %v429, 0.0
        %v454 = vadd.f32 %v430, 0.0
        %v455 = vadd.f32 %v431, 0.0
        %v456 = vadd.f32 %v432, 0.0
        %v457 = vadd.f32 %v433, 0.0
        %s458 = scalar_lea.vmem %s1, 32
        %v459 = vld [vmem:[%s458] sm:$0xff]
        %v460 = vld [vmem:[%s458 + $0x8] sm:$0xff]
        %v461 = vld [vmem:[%s458 + $0x10] sm:$0xff]
        %v462 = vld [vmem:[%s458 + $0x18] sm:$0xff]
        %464 = vset.pattern.permute.xlu0 0
        %465 = vperm.xlu0 %464, %v459
        %v466 = vpop.permute.xlu0 %465
        %469 = vset.pattern.permute.xlu0 0
        %470 = vperm.xlu0 %469, %v460
        %v471 = vpop.permute.xlu0 %470
        %474 = vset.pattern.permute.xlu0 0
        %475 = vperm.xlu0 %474, %v461
        %v476 = vpop.permute.xlu0 %475
        %479 = vset.pattern.permute.xlu0 0
        %480 = vperm.xlu0 %479, %v462
        %v481 = vpop.permute.xlu0 %480
        %v483 = vperm.slane %v372, 6
        %v485 = vmul.f32 %v466, %v398
        %v486 = vmul.f32 %v466, %v399
        %v487 = vmul.f32 %v466, %v400
        %v488 = vmul.f32 %v466, %v401
        %v489 = vmul.f32 %v466, %v402
        %v490 = vmul.f32 %v466, %v403
        %v491 = vmul.f32 %v466, %v483
        %v492 = vmul.f32 %v471, %v398
        %v493 = vmul.f32 %v471, %v399
        %v494 = vmul.f32 %v471, %v400
        %v495 = vmul.f32 %v471, %v401
        %v496 = vmul.f32 %v471, %v402
        %v497 = vmul.f32 %v471, %v403
        %v498 = vmul.f32 %v471, %v483
        %v499 = vmul.f32 %v476, %v398
        %v500 = vmul.f32 %v476, %v399
        %v501 = vmul.f32 %v476, %v400
        %v502 = vmul.f32 %v476, %v401
        %v503 = vmul.f32 %v476, %v402
        %v504 = vmul.f32 %v476, %v403
        %v505 = vmul.f32 %v476, %v483
        %v506 = vmul.f32 %v481, %v398
        %v507 = vmul.f32 %v481, %v399
        %v508 = vmul.f32 %v481, %v400
        %v509 = vmul.f32 %v481, %v401
        %v510 = vmul.f32 %v481, %v402
        %v511 = vmul.f32 %v481, %v403
        %v512 = vmul.f32 %v481, %v483
        %541 = vrot.lane.b32.xlu0 %v485, 127
        %v542 = vpop.permute.xlu0 %541
        %543 = vrot.lane.b32.xlu0 %v486, 127
        %v544 = vpop.permute.xlu0 %543
        %545 = vrot.lane.b32.xlu0 %v487, 127
        %v546 = vpop.permute.xlu0 %545
        %547 = vrot.lane.b32.xlu0 %v488, 127
        %v548 = vpop.permute.xlu0 %547
        %549 = vrot.lane.b32.xlu0 %v489, 127
        %v550 = vpop.permute.xlu0 %549
        %551 = vrot.lane.b32.xlu0 %v490, 127
        %v552 = vpop.permute.xlu0 %551
        %553 = vrot.lane.b32.xlu0 %v491, 127
        %v554 = vpop.permute.xlu0 %553
        %555 = vrot.lane.b32.xlu0 %v492, 127
        %v556 = vpop.permute.xlu0 %555
        %557 = vrot.lane.b32.xlu0 %v493, 127
        %v558 = vpop.permute.xlu0 %557
        %559 = vrot.lane.b32.xlu0 %v494, 127
        %v560 = vpop.permute.xlu0 %559
        %561 = vrot.lane.b32.xlu0 %v495, 127
        %v562 = vpop.permute.xlu0 %561
        %563 = vrot.lane.b32.xlu0 %v496, 127
        %v564 = vpop.permute.xlu0 %563
        %565 = vrot.lane.b32.xlu0 %v497, 127
        %v566 = vpop.permute.xlu0 %565
        %567 = vrot.lane.b32.xlu0 %v498, 127
        %v568 = vpop.permute.xlu0 %567
        %569 = vrot.lane.b32.xlu0 %v499, 127
        %v570 = vpop.permute.xlu0 %569
        %571 = vrot.lane.b32.xlu0 %v500, 127
        %v572 = vpop.permute.xlu0 %571
        %573 = vrot.lane.b32.xlu0 %v501, 127
        %v574 = vpop.permute.xlu0 %573
        %575 = vrot.lane.b32.xlu0 %v502, 127
        %v576 = vpop.permute.xlu0 %575
        %577 = vrot.lane.b32.xlu0 %v503, 127
        %v578 = vpop.permute.xlu0 %577
        %579 = vrot.lane.b32.xlu0 %v504, 127
        %v580 = vpop.permute.xlu0 %579
        %581 = vrot.lane.b32.xlu0 %v505, 127
        %v582 = vpop.permute.xlu0 %581
        %583 = vrot.lane.b32.xlu0 %v506, 127
        %v584 = vpop.permute.xlu0 %583
        %585 = vrot.lane.b32.xlu0 %v507, 127
        %v586 = vpop.permute.xlu0 %585
        %587 = vrot.lane.b32.xlu0 %v508, 127
        %v588 = vpop.permute.xlu0 %587
        %589 = vrot.lane.b32.xlu0 %v509, 127
        %v590 = vpop.permute.xlu0 %589
        %591 = vrot.lane.b32.xlu0 %v510, 127
        %v592 = vpop.permute.xlu0 %591
        %593 = vrot.lane.b32.xlu0 %v511, 127
        %v594 = vpop.permute.xlu0 %593
        %595 = vrot.lane.b32.xlu0 %v512, 127
        %v596 = vpop.permute.xlu0 %595
        %vm597 = vcmask 1039360
        %v598 = vsel %vm597, %v542, %v544
        %v599 = vsel %vm597, %v544, %v546
        %v600 = vsel %vm597, %v546, %v548
        %v601 = vsel %vm597, %v548, %v550
        %v602 = vsel %vm597, %v550, %v552
        %v603 = vsel %vm597, %v552, %v554
        %v604 = vsel %vm597, %v556, %v558
        %v605 = vsel %vm597, %v558, %v560
        %v606 = vsel %vm597, %v560, %v562
        %v607 = vsel %vm597, %v562, %v564
        %v608 = vsel %vm597, %v564, %v566
        %v609 = vsel %vm597, %v566, %v568
        %v610 = vsel %vm597, %v570, %v572
        %v611 = vsel %vm597, %v572, %v574
        %v612 = vsel %vm597, %v574, %v576
        %v613 = vsel %vm597, %v576, %v578
        %v614 = vsel %vm597, %v578, %v580
        %v615 = vsel %vm597, %v580, %v582
        %v616 = vsel %vm597, %v584, %v586
        %v617 = vsel %vm597, %v586, %v588
        %v618 = vsel %vm597, %v588, %v590
        %v619 = vsel %vm597, %v590, %v592
        %v620 = vsel %vm597, %v592, %v594
        %v621 = vsel %vm597, %v594, %v596
        %v646 = vadd.f32 %v434, %v598
        %v647 = vadd.f32 %v435, %v599
        %v648 = vadd.f32 %v436, %v600
        %v649 = vadd.f32 %v437, %v601
        %v650 = vadd.f32 %v438, %v602
        %v651 = vadd.f32 %v439, %v603
        %v652 = vadd.f32 %v440, %v604
        %v653 = vadd.f32 %v441, %v605
        %v654 = vadd.f32 %v442, %v606
        %v655 = vadd.f32 %v443, %v607
        %v656 = vadd.f32 %v444, %v608
        %v657 = vadd.f32 %v445, %v609
        %v658 = vadd.f32 %v446, %v610
        %v659 = vadd.f32 %v447, %v611
        %v660 = vadd.f32 %v448, %v612
        %v661 = vadd.f32 %v449, %v613
        %v662 = vadd.f32 %v450, %v614
        %v663 = vadd.f32 %v451, %v615
        %v664 = vadd.f32 %v452, %v616
        %v665 = vadd.f32 %v453, %v617
        %v666 = vadd.f32 %v454, %v618
        %v667 = vadd.f32 %v455, %v619
        %v668 = vadd.f32 %v456, %v620
        %v669 = vadd.f32 %v457, %v621
        %s670 = scalar_lea.vmem %s1, 64
        %v671 = vld [vmem:[%s670] sm:$0xff]
        %v672 = vld [vmem:[%s670 + $0x8] sm:$0xff]
        %v673 = vld [vmem:[%s670 + $0x10] sm:$0xff]
        %v674 = vld [vmem:[%s670 + $0x18] sm:$0xff]
        %676 = vset.pattern.permute.xlu0 0
        %677 = vperm.xlu0 %676, %v671
        %v678 = vpop.permute.xlu0 %677
        %681 = vset.pattern.permute.xlu0 0
        %682 = vperm.xlu0 %681, %v672
        %v683 = vpop.permute.xlu0 %682
        %686 = vset.pattern.permute.xlu0 0
        %687 = vperm.xlu0 %686, %v673
        %v688 = vpop.permute.xlu0 %687
        %691 = vset.pattern.permute.xlu0 0
        %692 = vperm.xlu0 %691, %v674
        %v693 = vpop.permute.xlu0 %692
        %v695 = vmul.f32 %v678, %v398
        %v696 = vmul.f32 %v678, %v399
        %v697 = vmul.f32 %v678, %v400
        %v698 = vmul.f32 %v678, %v401
        %v699 = vmul.f32 %v678, %v402
        %v700 = vmul.f32 %v678, %v403
        %v701 = vmul.f32 %v678, %v483
        %v702 = vmul.f32 %v683, %v398
        %v703 = vmul.f32 %v683, %v399
        %v704 = vmul.f32 %v683, %v400
        %v705 = vmul.f32 %v683, %v401
        %v706 = vmul.f32 %v683, %v402
        %v707 = vmul.f32 %v683, %v403
        %v708 = vmul.f32 %v683, %v483
        %v709 = vmul.f32 %v688, %v398
        %v710 = vmul.f32 %v688, %v399
        %v711 = vmul.f32 %v688, %v400
        %v712 = vmul.f32 %v688, %v401
        %v713 = vmul.f32 %v688, %v402
        %v714 = vmul.f32 %v688, %v403
        %v715 = vmul.f32 %v688, %v483
        %v716 = vmul.f32 %v693, %v398
        %v717 = vmul.f32 %v693, %v399
        %v718 = vmul.f32 %v693, %v400
        %v719 = vmul.f32 %v693, %v401
        %v720 = vmul.f32 %v693, %v402
        %v721 = vmul.f32 %v693, %v403
        %v722 = vmul.f32 %v693, %v483
        %751 = vrot.lane.b32.xlu0 %v695, 126
        %v752 = vpop.permute.xlu0 %751
        %753 = vrot.lane.b32.xlu0 %v696, 126
        %v754 = vpop.permute.xlu0 %753
        %755 = vrot.lane.b32.xlu0 %v697, 126
        %v756 = vpop.permute.xlu0 %755
        %757 = vrot.lane.b32.xlu0 %v698, 126
        %v758 = vpop.permute.xlu0 %757
        %759 = vrot.lane.b32.xlu0 %v699, 126
        %v760 = vpop.permute.xlu0 %759
        %761 = vrot.lane.b32.xlu0 %v700, 126
        %v762 = vpop.permute.xlu0 %761
        %763 = vrot.lane.b32.xlu0 %v701, 126
        %v764 = vpop.permute.xlu0 %763
        %765 = vrot.lane.b32.xlu0 %v702, 126
        %v766 = vpop.permute.xlu0 %765
        %767 = vrot.lane.b32.xlu0 %v703, 126
        %v768 = vpop.permute.xlu0 %767
        %769 = vrot.lane.b32.xlu0 %v704, 126
        %v770 = vpop.permute.xlu0 %769
        %771 = vrot.lane.b32.xlu0 %v705, 126
        %v772 = vpop.permute.xlu0 %771
        %773 = vrot.lane.b32.xlu0 %v706, 126
        %v774 = vpop.permute.xlu0 %773
        %775 = vrot.lane.b32.xlu0 %v707, 126
        %v776 = vpop.permute.xlu0 %775
        %777 = vrot.lane.b32.xlu0 %v708, 126
        %v778 = vpop.permute.xlu0 %777
        %779 = vrot.lane.b32.xlu0 %v709, 126
        %v780 = vpop.permute.xlu0 %779
        %781 = vrot.lane.b32.xlu0 %v710, 126
        %v782 = vpop.permute.xlu0 %781
        %783 = vrot.lane.b32.xlu0 %v711, 126
        %v784 = vpop.permute.xlu0 %783
        %785 = vrot.lane.b32.xlu0 %v712, 126
        %v786 = vpop.permute.xlu0 %785
        %787 = vrot.lane.b32.xlu0 %v713, 126
        %v788 = vpop.permute.xlu0 %787
        %789 = vrot.lane.b32.xlu0 %v714, 126
        %v790 = vpop.permute.xlu0 %789
        %791 = vrot.lane.b32.xlu0 %v715, 126
        %v792 = vpop.permute.xlu0 %791
        %793 = vrot.lane.b32.xlu0 %v716, 126
        %v794 = vpop.permute.xlu0 %793
        %795 = vrot.lane.b32.xlu0 %v717, 126
        %v796 = vpop.permute.xlu0 %795
        %797 = vrot.lane.b32.xlu0 %v718, 126
        %v798 = vpop.permute.xlu0 %797
        %799 = vrot.lane.b32.xlu0 %v719, 126
        %v800 = vpop.permute.xlu0 %799
        %801 = vrot.lane.b32.xlu0 %v720, 126
        %v802 = vpop.permute.xlu0 %801
        %803 = vrot.lane.b32.xlu0 %v721, 126
        %v804 = vpop.permute.xlu0 %803
        %805 = vrot.lane.b32.xlu0 %v722, 126
        %v806 = vpop.permute.xlu0 %805
        %vm807 = vcmask 1031168
        %v808 = vsel %vm807, %v752, %v754
        %v809 = vsel %vm807, %v754, %v756
        %v810 = vsel %vm807, %v756, %v758
        %v811 = vsel %vm807, %v758, %v760
        %v812 = vsel %vm807, %v760, %v762
        %v813 = vsel %vm807, %v762, %v764
        %v814 = vsel %vm807, %v766, %v768
        %v815 = vsel %vm807, %v768, %v770
        %v816 = vsel %vm807, %v770, %v772
        %v817 = vsel %vm807, %v772, %v774
        %v818 = vsel %vm807, %v774, %v776
        %v819 = vsel %vm807, %v776, %v778
        %v820 = vsel %vm807, %v780, %v782
        %v821 = vsel %vm807, %v782, %v784
        %v822 = vsel %vm807, %v784, %v786
        %v823 = vsel %vm807, %v786, %v788
        %v824 = vsel %vm807, %v788, %v790
        %v825 = vsel %vm807, %v790, %v792
        %v826 = vsel %vm807, %v794, %v796
        %v827 = vsel %vm807, %v796, %v798
        %v828 = vsel %vm807, %v798, %v800
        %v829 = vsel %vm807, %v800, %v802
        %v830 = vsel %vm807, %v802, %v804
        %v831 = vsel %vm807, %v804, %v806
        %v856 = vadd.f32 %v646, %v808
        %v857 = vadd.f32 %v647, %v809
        %v858 = vadd.f32 %v648, %v810
        %v859 = vadd.f32 %v649, %v811
        %v860 = vadd.f32 %v650, %v812
        %v861 = vadd.f32 %v651, %v813
        %v862 = vadd.f32 %v652, %v814
        %v863 = vadd.f32 %v653, %v815
        %v864 = vadd.f32 %v654, %v816
        %v865 = vadd.f32 %v655, %v817
        %v866 = vadd.f32 %v656, %v818
        %v867 = vadd.f32 %v657, %v819
        %v868 = vadd.f32 %v658, %v820
        %v869 = vadd.f32 %v659, %v821
        %v870 = vadd.f32 %v660, %v822
        %v871 = vadd.f32 %v661, %v823
        %v872 = vadd.f32 %v662, %v824
        %v873 = vadd.f32 %v663, %v825
        %v874 = vadd.f32 %v664, %v826
        %v875 = vadd.f32 %v665, %v827
        %v876 = vadd.f32 %v666, %v828
        %v877 = vadd.f32 %v667, %v829
        %v878 = vadd.f32 %v668, %v830
        %v879 = vadd.f32 %v669, %v831
        %s880 = scalar_lea.vmem %s1, 96
        %v881 = vld [vmem:[%s880] sm:$0xff]
        %v882 = vld [vmem:[%s880 + $0x8] sm:$0xff]
        %v883 = vld [vmem:[%s880 + $0x10] sm:$0xff]
        %v884 = vld [vmem:[%s880 + $0x18] sm:$0xff]
        %886 = vset.pattern.permute.xlu0 0
        %887 = vperm.xlu0 %886, %v881
        %v888 = vpop.permute.xlu0 %887
        %891 = vset.pattern.permute.xlu0 0
        %892 = vperm.xlu0 %891, %v882
        %v893 = vpop.permute.xlu0 %892
        %896 = vset.pattern.permute.xlu0 0
        %897 = vperm.xlu0 %896, %v883
        %v898 = vpop.permute.xlu0 %897
        %901 = vset.pattern.permute.xlu0 0
        %902 = vperm.xlu0 %901, %v884
        %v903 = vpop.permute.xlu0 %902
        %v905 = vmul.f32 %v888, %v398
        %v906 = vmul.f32 %v888, %v399
        %v907 = vmul.f32 %v888, %v400
        %v908 = vmul.f32 %v888, %v401
        %v909 = vmul.f32 %v888, %v402
        %v910 = vmul.f32 %v888, %v403
        %v911 = vmul.f32 %v888, %v483
        %v912 = vmul.f32 %v893, %v398
        %v913 = vmul.f32 %v893, %v399
        %v914 = vmul.f32 %v893, %v400
        %v915 = vmul.f32 %v893, %v401
        %v916 = vmul.f32 %v893, %v402
        %v917 = vmul.f32 %v893, %v403
        %v918 = vmul.f32 %v893, %v483
        %v919 = vmul.f32 %v898, %v398
        %v920 = vmul.f32 %v898, %v399
        %v921 = vmul.f32 %v898, %v400
        %v922 = vmul.f32 %v898, %v401
        %v923 = vmul.f32 %v898, %v402
        %v924 = vmul.f32 %v898, %v403
        %v925 = vmul.f32 %v898, %v483
        %v926 = vmul.f32 %v903, %v398
        %v927 = vmul.f32 %v903, %v399
        %v928 = vmul.f32 %v903, %v400
        %v929 = vmul.f32 %v903, %v401
        %v930 = vmul.f32 %v903, %v402
        %v931 = vmul.f32 %v903, %v403
        %v932 = vmul.f32 %v903, %v483
        %961 = vrot.lane.b32.xlu0 %v905, 100
        %v962 = vpop.permute.xlu0 %961
        %963 = vrot.lane.b32.xlu0 %v906, 100
        %v964 = vpop.permute.xlu0 %963
        %965 = vrot.lane.b32.xlu0 %v907, 100
        %v966 = vpop.permute.xlu0 %965
        %967 = vrot.lane.b32.xlu0 %v908, 100
        %v968 = vpop.permute.xlu0 %967
        %969 = vrot.lane.b32.xlu0 %v909, 100
        %v970 = vpop.permute.xlu0 %969
        %971 = vrot.lane.b32.xlu0 %v910, 100
        %v972 = vpop.permute.xlu0 %971
        %973 = vrot.lane.b32.xlu0 %v911, 100
        %v974 = vpop.permute.xlu0 %973
        %975 = vrot.lane.b32.xlu0 %v912, 100
        %v976 = vpop.permute.xlu0 %975
        %977 = vrot.lane.b32.xlu0 %v913, 100
        %v978 = vpop.permute.xlu0 %977
        %979 = vrot.lane.b32.xlu0 %v914, 100
        %v980 = vpop.permute.xlu0 %979
        %981 = vrot.lane.b32.xlu0 %v915, 100
        %v982 = vpop.permute.xlu0 %981
        %983 = vrot.lane.b32.xlu0 %v916, 100
        %v984 = vpop.permute.xlu0 %983
        %985 = vrot.lane.b32.xlu0 %v917, 100
        %v986 = vpop.permute.xlu0 %985
        %987 = vrot.lane.b32.xlu0 %v918, 100
        %v988 = vpop.permute.xlu0 %987
        %989 = vrot.lane.b32.xlu0 %v919, 100
        %v990 = vpop.permute.xlu0 %989
        %991 = vrot.lane.b32.xlu0 %v920, 100
        %v992 = vpop.permute.xlu0 %991
        %993 = vrot.lane.b32.xlu0 %v921, 100
        %v994 = vpop.permute.xlu0 %993
        %995 = vrot.lane.b32.xlu0 %v922, 100
        %v996 = vpop.permute.xlu0 %995
        %997 = vrot.lane.b32.xlu0 %v923, 100
        %v998 = vpop.permute.xlu0 %997
        %999 = vrot.lane.b32.xlu0 %v924, 100
        %v1000 = vpop.permute.xlu0 %999
        %1001 = vrot.lane.b32.xlu0 %v925, 100
        %v1002 = vpop.permute.xlu0 %1001
        %1003 = vrot.lane.b32.xlu0 %v926, 100
        %v1004 = vpop.permute.xlu0 %1003
        %1005 = vrot.lane.b32.xlu0 %v927, 100
        %v1006 = vpop.permute.xlu0 %1005
        %1007 = vrot.lane.b32.xlu0 %v928, 100
        %v1008 = vpop.permute.xlu0 %1007
        %1009 = vrot.lane.b32.xlu0 %v929, 100
        %v1010 = vpop.permute.xlu0 %1009
        %1011 = vrot.lane.b32.xlu0 %v930, 100
        %v1012 = vpop.permute.xlu0 %1011
        %1013 = vrot.lane.b32.xlu0 %v931, 100
        %v1014 = vpop.permute.xlu0 %1013
        %1015 = vrot.lane.b32.xlu0 %v932, 100
        %v1016 = vpop.permute.xlu0 %1015
        %vm1017 = vcmask 818176
        %v1018 = vsel %vm1017, %v962, %v964
        %v1019 = vsel %vm1017, %v964, %v966
        %v1020 = vsel %vm1017, %v966, %v968
        %v1021 = vsel %vm1017, %v968, %v970
        %v1022 = vsel %vm1017, %v970, %v972
        %v1023 = vsel %vm1017, %v972, %v974
        %v1024 = vsel %vm1017, %v976, %v978
        %v1025 = vsel %vm1017, %v978, %v980
        %v1026 = vsel %vm1017, %v980, %v982
        %v1027 = vsel %vm1017, %v982, %v984
        %v1028 = vsel %vm1017, %v984, %v986
        %v1029 = vsel %vm1017, %v986, %v988
        %v1030 = vsel %vm1017, %v990, %v992
        %v1031 = vsel %vm1017, %v992, %v994
        %v1032 = vsel %vm1017, %v994, %v996
        %v1033 = vsel %vm1017, %v996, %v998
        %v1034 = vsel %vm1017, %v998, %v1000
        %v1035 = vsel %vm1017, %v1000, %v1002
        %v1036 = vsel %vm1017, %v1004, %v1006
        %v1037 = vsel %vm1017, %v1006, %v1008
        %v1038 = vsel %vm1017, %v1008, %v1010
        %v1039 = vsel %vm1017, %v1010, %v1012
        %v1040 = vsel %vm1017, %v1012, %v1014
        %v1041 = vsel %vm1017, %v1014, %v1016
        %v1066 = vadd.f32 %v856, %v1018
        %v1067 = vadd.f32 %v857, %v1019
        %v1068 = vadd.f32 %v858, %v1020
        %v1069 = vadd.f32 %v859, %v1021
        %v1070 = vadd.f32 %v860, %v1022
        %v1071 = vadd.f32 %v861, %v1023
        %v1072 = vadd.f32 %v862, %v1024
        %v1073 = vadd.f32 %v863, %v1025
        %v1074 = vadd.f32 %v864, %v1026
        %v1075 = vadd.f32 %v865, %v1027
        %v1076 = vadd.f32 %v866, %v1028
        %v1077 = vadd.f32 %v867, %v1029
        %v1078 = vadd.f32 %v868, %v1030
        %v1079 = vadd.f32 %v869, %v1031
        %v1080 = vadd.f32 %v870, %v1032
        %v1081 = vadd.f32 %v871, %v1033
        %v1082 = vadd.f32 %v872, %v1034
        %v1083 = vadd.f32 %v873, %v1035
        %v1084 = vadd.f32 %v874, %v1036
        %v1085 = vadd.f32 %v875, %v1037
        %v1086 = vadd.f32 %v876, %v1038
        %v1087 = vadd.f32 %v877, %v1039
        %v1088 = vadd.f32 %v878, %v1040
        %v1089 = vadd.f32 %v879, %v1041
        %s1090 = scalar_lea.vmem %s1, 128
        %v1091 = vld [vmem:[%s1090] sm:$0xff]
        %v1092 = vld [vmem:[%s1090 + $0x8] sm:$0xff]
        %v1093 = vld [vmem:[%s1090 + $0x10] sm:$0xff]
        %v1094 = vld [vmem:[%s1090 + $0x18] sm:$0xff]
        %1096 = vset.pattern.permute.xlu0 0
        %1097 = vperm.xlu0 %1096, %v1091
        %v1098 = vpop.permute.xlu0 %1097
        %1101 = vset.pattern.permute.xlu0 0
        %1102 = vperm.xlu0 %1101, %v1092
        %v1103 = vpop.permute.xlu0 %1102
        %1106 = vset.pattern.permute.xlu0 0
        %1107 = vperm.xlu0 %1106, %v1093
        %v1108 = vpop.permute.xlu0 %1107
        %1111 = vset.pattern.permute.xlu0 0
        %1112 = vperm.xlu0 %1111, %v1094
        %v1113 = vpop.permute.xlu0 %1112
        %v1115 = vmul.f32 %v1098, %v398
        %v1116 = vmul.f32 %v1098, %v399
        %v1117 = vmul.f32 %v1098, %v400
        %v1118 = vmul.f32 %v1098, %v401
        %v1119 = vmul.f32 %v1098, %v402
        %v1120 = vmul.f32 %v1098, %v403
        %v1121 = vmul.f32 %v1098, %v483
        %v1122 = vmul.f32 %v1103, %v398
        %v1123 = vmul.f32 %v1103, %v399
        %v1124 = vmul.f32 %v1103, %v400
        %v1125 = vmul.f32 %v1103, %v401
        %v1126 = vmul.f32 %v1103, %v402
        %v1127 = vmul.f32 %v1103, %v403
        %v1128 = vmul.f32 %v1103, %v483
        %v1129 = vmul.f32 %v1108, %v398
        %v1130 = vmul.f32 %v1108, %v399
        %v1131 = vmul.f32 %v1108, %v400
        %v1132 = vmul.f32 %v1108, %v401
        %v1133 = vmul.f32 %v1108, %v402
        %v1134 = vmul.f32 %v1108, %v403
        %v1135 = vmul.f32 %v1108, %v483
        %v1136 = vmul.f32 %v1113, %v398
        %v1137 = vmul.f32 %v1113, %v399
        %v1138 = vmul.f32 %v1113, %v400
        %v1139 = vmul.f32 %v1113, %v401
        %v1140 = vmul.f32 %v1113, %v402
        %v1141 = vmul.f32 %v1113, %v403
        %v1142 = vmul.f32 %v1113, %v483
        %1171 = vrot.lane.b32.xlu0 %v1115, 99
        %v1172 = vpop.permute.xlu0 %1171
        %1173 = vrot.lane.b32.xlu0 %v1116, 99
        %v1174 = vpop.permute.xlu0 %1173
        %1175 = vrot.lane.b32.xlu0 %v1117, 99
        %v1176 = vpop.permute.xlu0 %1175
        %1177 = vrot.lane.b32.xlu0 %v1118, 99
        %v1178 = vpop.permute.xlu0 %1177
        %1179 = vrot.lane.b32.xlu0 %v1119, 99
        %v1180 = vpop.permute.xlu0 %1179
        %1181 = vrot.lane.b32.xlu0 %v1120, 99
        %v1182 = vpop.permute.xlu0 %1181
        %1183 = vrot.lane.b32.xlu0 %v1121, 99
        %v1184 = vpop.permute.xlu0 %1183
        %1185 = vrot.lane.b32.xlu0 %v1122, 99
        %v1186 = vpop.permute.xlu0 %1185
        %1187 = vrot.lane.b32.xlu0 %v1123, 99
        %v1188 = vpop.permute.xlu0 %1187
        %1189 = vrot.lane.b32.xlu0 %v1124, 99
        %v1190 = vpop.permute.xlu0 %1189
        %1191 = vrot.lane.b32.xlu0 %v1125, 99
        %v1192 = vpop.permute.xlu0 %1191
        %1193 = vrot.lane.b32.xlu0 %v1126, 99
        %v1194 = vpop.permute.xlu0 %1193
        %1195 = vrot.lane.b32.xlu0 %v1127, 99
        %v1196 = vpop.permute.xlu0 %1195
        %1197 = vrot.lane.b32.xlu0 %v1128, 99
        %v1198 = vpop.permute.xlu0 %1197
        %1199 = vrot.lane.b32.xlu0 %v1129, 99
        %v1200 = vpop.permute.xlu0 %1199
        %1201 = vrot.lane.b32.xlu0 %v1130, 99
        %v1202 = vpop.permute.xlu0 %1201
        %1203 = vrot.lane.b32.xlu0 %v1131, 99
        %v1204 = vpop.permute.xlu0 %1203
        %1205 = vrot.lane.b32.xlu0 %v1132, 99
        %v1206 = vpop.permute.xlu0 %1205
        %1207 = vrot.lane.b32.xlu0 %v1133, 99
        %v1208 = vpop.permute.xlu0 %1207
        %1209 = vrot.lane.b32.xlu0 %v1134, 99
        %v1210 = vpop.permute.xlu0 %1209
        %1211 = vrot.lane.b32.xlu0 %v1135, 99
        %v1212 = vpop.permute.xlu0 %1211
        %1213 = vrot.lane.b32.xlu0 %v1136, 99
        %v1214 = vpop.permute.xlu0 %1213
        %1215 = vrot.lane.b32.xlu0 %v1137, 99
        %v1216 = vpop.permute.xlu0 %1215
        %1217 = vrot.lane.b32.xlu0 %v1138, 99
        %v1218 = vpop.permute.xlu0 %1217
        %1219 = vrot.lane.b32.xlu0 %v1139, 99
        %v1220 = vpop.permute.xlu0 %1219
        %1221 = vrot.lane.b32.xlu0 %v1140, 99
        %v1222 = vpop.permute.xlu0 %1221
        %1223 = vrot.lane.b32.xlu0 %v1141, 99
        %v1224 = vpop.permute.xlu0 %1223
        %1225 = vrot.lane.b32.xlu0 %v1142, 99
        %v1226 = vpop.permute.xlu0 %1225
        %vm1227 = vcmask 809984
        %v1228 = vsel %vm1227, %v1172, %v1174
        %v1229 = vsel %vm1227, %v1174, %v1176
        %v1230 = vsel %vm1227, %v1176, %v1178
        %v1231 = vsel %vm1227, %v1178, %v1180
        %v1232 = vsel %vm1227, %v1180, %v1182
        %v1233 = vsel %vm1227, %v1182, %v1184
        %v1234 = vsel %vm1227, %v1186, %v1188
        %v1235 = vsel %vm1227, %v1188, %v1190
        %v1236 = vsel %vm1227, %v1190, %v1192
        %v1237 = vsel %vm1227, %v1192, %v1194
        %v1238 = vsel %vm1227, %v1194, %v1196
        %v1239 = vsel %vm1227, %v1196, %v1198
        %v1240 = vsel %vm1227, %v1200, %v1202
        %v1241 = vsel %vm1227, %v1202, %v1204
        %v1242 = vsel %vm1227, %v1204, %v1206
        %v1243 = vsel %vm1227, %v1206, %v1208
        %v1244 = vsel %vm1227, %v1208, %v1210
        %v1245 = vsel %vm1227, %v1210, %v1212
        %v1246 = vsel %vm1227, %v1214, %v1216
        %v1247 = vsel %vm1227, %v1216, %v1218
        %v1248 = vsel %vm1227, %v1218, %v1220
        %v1249 = vsel %vm1227, %v1220, %v1222
        %v1250 = vsel %vm1227, %v1222, %v1224
        %v1251 = vsel %vm1227, %v1224, %v1226
        %v1276 = vadd.f32 %v1066, %v1228
        %v1277 = vadd.f32 %v1067, %v1229
        %v1278 = vadd.f32 %v1068, %v1230
        %v1279 = vadd.f32 %v1069, %v1231
        %v1280 = vadd.f32 %v1070, %v1232
        %v1281 = vadd.f32 %v1071, %v1233
        %v1282 = vadd.f32 %v1072, %v1234
        %v1283 = vadd.f32 %v1073, %v1235
        %v1284 = vadd.f32 %v1074, %v1236
        %v1285 = vadd.f32 %v1075, %v1237
        %v1286 = vadd.f32 %v1076, %v1238
        %v1287 = vadd.f32 %v1077, %v1239
        %v1288 = vadd.f32 %v1078, %v1240
        %v1289 = vadd.f32 %v1079, %v1241
        %v1290 = vadd.f32 %v1080, %v1242
        %v1291 = vadd.f32 %v1081, %v1243
        %v1292 = vadd.f32 %v1082, %v1244
        %v1293 = vadd.f32 %v1083, %v1245
        %v1294 = vadd.f32 %v1084, %v1246
        %v1295 = vadd.f32 %v1085, %v1247
        %v1296 = vadd.f32 %v1086, %v1248
        %v1297 = vadd.f32 %v1087, %v1249
        %v1298 = vadd.f32 %v1088, %v1250
        %v1299 = vadd.f32 %v1089, %v1251
        %s1300 = scalar_lea.vmem %s1, 160
        %v1301 = vld [vmem:[%s1300] sm:$0xff]
        %v1302 = vld [vmem:[%s1300 + $0x8] sm:$0xff]
        %v1303 = vld [vmem:[%s1300 + $0x10] sm:$0xff]
        %v1304 = vld [vmem:[%s1300 + $0x18] sm:$0xff]
        %1306 = vset.pattern.permute.xlu0 0
        %1307 = vperm.xlu0 %1306, %v1301
        %v1308 = vpop.permute.xlu0 %1307
        %1311 = vset.pattern.permute.xlu0 0
        %1312 = vperm.xlu0 %1311, %v1302
        %v1313 = vpop.permute.xlu0 %1312
        %1316 = vset.pattern.permute.xlu0 0
        %1317 = vperm.xlu0 %1316, %v1303
        %v1318 = vpop.permute.xlu0 %1317
        %1321 = vset.pattern.permute.xlu0 0
        %1322 = vperm.xlu0 %1321, %v1304
        %v1323 = vpop.permute.xlu0 %1322
        %v1325 = vmul.f32 %v1308, %v398
        %v1326 = vmul.f32 %v1308, %v399
        %v1327 = vmul.f32 %v1308, %v400
        %v1328 = vmul.f32 %v1308, %v401
        %v1329 = vmul.f32 %v1308, %v402
        %v1330 = vmul.f32 %v1308, %v403
        %v1331 = vmul.f32 %v1308, %v483
        %v1332 = vmul.f32 %v1313, %v398
        %v1333 = vmul.f32 %v1313, %v399
        %v1334 = vmul.f32 %v1313, %v400
        %v1335 = vmul.f32 %v1313, %v401
        %v1336 = vmul.f32 %v1313, %v402
        %v1337 = vmul.f32 %v1313, %v403
        %v1338 = vmul.f32 %v1313, %v483
        %v1339 = vmul.f32 %v1318, %v398
        %v1340 = vmul.f32 %v1318, %v399
        %v1341 = vmul.f32 %v1318, %v400
        %v1342 = vmul.f32 %v1318, %v401
        %v1343 = vmul.f32 %v1318, %v402
        %v1344 = vmul.f32 %v1318, %v403
        %v1345 = vmul.f32 %v1318, %v483
        %v1346 = vmul.f32 %v1323, %v398
        %v1347 = vmul.f32 %v1323, %v399
        %v1348 = vmul.f32 %v1323, %v400
        %v1349 = vmul.f32 %v1323, %v401
        %v1350 = vmul.f32 %v1323, %v402
        %v1351 = vmul.f32 %v1323, %v403
        %v1352 = vmul.f32 %v1323, %v483
        %1381 = vrot.lane.b32.xlu0 %v1325, 98
        %v1382 = vpop.permute.xlu0 %1381
        %1383 = vrot.lane.b32.xlu0 %v1326, 98
        %v1384 = vpop.permute.xlu0 %1383
        %1385 = vrot.lane.b32.xlu0 %v1327, 98
        %v1386 = vpop.permute.xlu0 %1385
        %1387 = vrot.lane.b32.xlu0 %v1328, 98
        %v1388 = vpop.permute.xlu0 %1387
        %1389 = vrot.lane.b32.xlu0 %v1329, 98
        %v1390 = vpop.permute.xlu0 %1389
        %1391 = vrot.lane.b32.xlu0 %v1330, 98
        %v1392 = vpop.permute.xlu0 %1391
        %1393 = vrot.lane.b32.xlu0 %v1331, 98
        %v1394 = vpop.permute.xlu0 %1393
        %1395 = vrot.lane.b32.xlu0 %v1332, 98
        %v1396 = vpop.permute.xlu0 %1395
        %1397 = vrot.lane.b32.xlu0 %v1333, 98
        %v1398 = vpop.permute.xlu0 %1397
        %1399 = vrot.lane.b32.xlu0 %v1334, 98
        %v1400 = vpop.permute.xlu0 %1399
        %1401 = vrot.lane.b32.xlu0 %v1335, 98
        %v1402 = vpop.permute.xlu0 %1401
        %1403 = vrot.lane.b32.xlu0 %v1336, 98
        %v1404 = vpop.permute.xlu0 %1403
        %1405 = vrot.lane.b32.xlu0 %v1337, 98
        %v1406 = vpop.permute.xlu0 %1405
        %1407 = vrot.lane.b32.xlu0 %v1338, 98
        %v1408 = vpop.permute.xlu0 %1407
        %1409 = vrot.lane.b32.xlu0 %v1339, 98
        %v1410 = vpop.permute.xlu0 %1409
        %1411 = vrot.lane.b32.xlu0 %v1340, 98
        %v1412 = vpop.permute.xlu0 %1411
        %1413 = vrot.lane.b32.xlu0 %v1341, 98
        %v1414 = vpop.permute.xlu0 %1413
        %1415 = vrot.lane.b32.xlu0 %v1342, 98
        %v1416 = vpop.permute.xlu0 %1415
        %1417 = vrot.lane.b32.xlu0 %v1343, 98
        %v1418 = vpop.permute.xlu0 %1417
        %1419 = vrot.lane.b32.xlu0 %v1344, 98
        %v1420 = vpop.permute.xlu0 %1419
        %1421 = vrot.lane.b32.xlu0 %v1345, 98
        %v1422 = vpop.permute.xlu0 %1421
        %1423 = vrot.lane.b32.xlu0 %v1346, 98
        %v1424 = vpop.permute.xlu0 %1423
        %1425 = vrot.lane.b32.xlu0 %v1347, 98
        %v1426 = vpop.permute.xlu0 %1425
        %1427 = vrot.lane.b32.xlu0 %v1348, 98
        %v1428 = vpop.permute.xlu0 %1427
        %1429 = vrot.lane.b32.xlu0 %v1349, 98
        %v1430 = vpop.permute.xlu0 %1429
        %1431 = vrot.lane.b32.xlu0 %v1350, 98
        %v1432 = vpop.permute.xlu0 %1431
        %1433 = vrot.lane.b32.xlu0 %v1351, 98
        %v1434 = vpop.permute.xlu0 %1433
        %1435 = vrot.lane.b32.xlu0 %v1352, 98
        %v1436 = vpop.permute.xlu0 %1435
        %vm1437 = vcmask 801792
        %v1438 = vsel %vm1437, %v1382, %v1384
        %v1439 = vsel %vm1437, %v1384, %v1386
        %v1440 = vsel %vm1437, %v1386, %v1388
        %v1441 = vsel %vm1437, %v1388, %v1390
        %v1442 = vsel %vm1437, %v1390, %v1392
        %v1443 = vsel %vm1437, %v1392, %v1394
        %v1444 = vsel %vm1437, %v1396, %v1398
        %v1445 = vsel %vm1437, %v1398, %v1400
        %v1446 = vsel %vm1437, %v1400, %v1402
        %v1447 = vsel %vm1437, %v1402, %v1404
        %v1448 = vsel %vm1437, %v1404, %v1406
        %v1449 = vsel %vm1437, %v1406, %v1408
        %v1450 = vsel %vm1437, %v1410, %v1412
        %v1451 = vsel %vm1437, %v1412, %v1414
        %v1452 = vsel %vm1437, %v1414, %v1416
        %v1453 = vsel %vm1437, %v1416, %v1418
        %v1454 = vsel %vm1437, %v1418, %v1420
        %v1455 = vsel %vm1437, %v1420, %v1422
        %v1456 = vsel %vm1437, %v1424, %v1426
        %v1457 = vsel %vm1437, %v1426, %v1428
        %v1458 = vsel %vm1437, %v1428, %v1430
        %v1459 = vsel %vm1437, %v1430, %v1432
        %v1460 = vsel %vm1437, %v1432, %v1434
        %v1461 = vsel %vm1437, %v1434, %v1436
        %v1486 = vadd.f32 %v1276, %v1438
        %v1487 = vadd.f32 %v1277, %v1439
        %v1488 = vadd.f32 %v1278, %v1440
        %v1489 = vadd.f32 %v1279, %v1441
        %v1490 = vadd.f32 %v1280, %v1442
        %v1491 = vadd.f32 %v1281, %v1443
        %v1492 = vadd.f32 %v1282, %v1444
        %v1493 = vadd.f32 %v1283, %v1445
        %v1494 = vadd.f32 %v1284, %v1446
        %v1495 = vadd.f32 %v1285, %v1447
        %v1496 = vadd.f32 %v1286, %v1448
        %v1497 = vadd.f32 %v1287, %v1449
        %v1498 = vadd.f32 %v1288, %v1450
        %v1499 = vadd.f32 %v1289, %v1451
        %v1500 = vadd.f32 %v1290, %v1452
        %v1501 = vadd.f32 %v1291, %v1453
        %v1502 = vadd.f32 %v1292, %v1454
        %v1503 = vadd.f32 %v1293, %v1455
        %v1504 = vadd.f32 %v1294, %v1456
        %v1505 = vadd.f32 %v1295, %v1457
        %v1506 = vadd.f32 %v1296, %v1458
        %v1507 = vadd.f32 %v1297, %v1459
        %v1508 = vadd.f32 %v1298, %v1460
        %v1509 = vadd.f32 %v1299, %v1461
        %s1510 = scalar_lea.vmem %s1, 192
        %v1511 = vld [vmem:[%s1510] sm:$0xff]
        %v1512 = vld [vmem:[%s1510 + $0x8] sm:$0xff]
        %v1513 = vld [vmem:[%s1510 + $0x10] sm:$0xff]
        %v1514 = vld [vmem:[%s1510 + $0x18] sm:$0xff]
        %1516 = vset.pattern.permute.xlu0 0
        %1517 = vperm.xlu0 %1516, %v1511
        %v1518 = vpop.permute.xlu0 %1517
        %1521 = vset.pattern.permute.xlu0 0
        %1522 = vperm.xlu0 %1521, %v1512
        %v1523 = vpop.permute.xlu0 %1522
        %1526 = vset.pattern.permute.xlu0 0
        %1527 = vperm.xlu0 %1526, %v1513
        %v1528 = vpop.permute.xlu0 %1527
        %1531 = vset.pattern.permute.xlu0 0
        %1532 = vperm.xlu0 %1531, %v1514
        %v1533 = vpop.permute.xlu0 %1532
        %v1535 = vmul.f32 %v1518, %v398
        %v1536 = vmul.f32 %v1518, %v399
        %v1537 = vmul.f32 %v1518, %v400
        %v1538 = vmul.f32 %v1518, %v401
        %v1539 = vmul.f32 %v1518, %v402
        %v1540 = vmul.f32 %v1518, %v403
        %v1541 = vmul.f32 %v1518, %v483
        %v1542 = vmul.f32 %v1523, %v398
        %v1543 = vmul.f32 %v1523, %v399
        %v1544 = vmul.f32 %v1523, %v400
        %v1545 = vmul.f32 %v1523, %v401
        %v1546 = vmul.f32 %v1523, %v402
        %v1547 = vmul.f32 %v1523, %v403
        %v1548 = vmul.f32 %v1523, %v483
        %v1549 = vmul.f32 %v1528, %v398
        %v1550 = vmul.f32 %v1528, %v399
        %v1551 = vmul.f32 %v1528, %v400
        %v1552 = vmul.f32 %v1528, %v401
        %v1553 = vmul.f32 %v1528, %v402
        %v1554 = vmul.f32 %v1528, %v403
        %v1555 = vmul.f32 %v1528, %v483
        %v1556 = vmul.f32 %v1533, %v398
        %v1557 = vmul.f32 %v1533, %v399
        %v1558 = vmul.f32 %v1533, %v400
        %v1559 = vmul.f32 %v1533, %v401
        %v1560 = vmul.f32 %v1533, %v402
        %v1561 = vmul.f32 %v1533, %v403
        %v1562 = vmul.f32 %v1533, %v483
        %1591 = vrot.lane.b32.xlu0 %v1535, 72
        %v1592 = vpop.permute.xlu0 %1591
        %1593 = vrot.lane.b32.xlu0 %v1536, 72
        %v1594 = vpop.permute.xlu0 %1593
        %1595 = vrot.lane.b32.xlu0 %v1537, 72
        %v1596 = vpop.permute.xlu0 %1595
        %1597 = vrot.lane.b32.xlu0 %v1538, 72
        %v1598 = vpop.permute.xlu0 %1597
        %1599 = vrot.lane.b32.xlu0 %v1539, 72
        %v1600 = vpop.permute.xlu0 %1599
        %1601 = vrot.lane.b32.xlu0 %v1540, 72
        %v1602 = vpop.permute.xlu0 %1601
        %1603 = vrot.lane.b32.xlu0 %v1541, 72
        %v1604 = vpop.permute.xlu0 %1603
        %1605 = vrot.lane.b32.xlu0 %v1542, 72
        %v1606 = vpop.permute.xlu0 %1605
        %1607 = vrot.lane.b32.xlu0 %v1543, 72
        %v1608 = vpop.permute.xlu0 %1607
        %1609 = vrot.lane.b32.xlu0 %v1544, 72
        %v1610 = vpop.permute.xlu0 %1609
        %1611 = vrot.lane.b32.xlu0 %v1545, 72
        %v1612 = vpop.permute.xlu0 %1611
        %1613 = vrot.lane.b32.xlu0 %v1546, 72
        %v1614 = vpop.permute.xlu0 %1613
        %1615 = vrot.lane.b32.xlu0 %v1547, 72
        %v1616 = vpop.permute.xlu0 %1615
        %1617 = vrot.lane.b32.xlu0 %v1548, 72
        %v1618 = vpop.permute.xlu0 %1617
        %1619 = vrot.lane.b32.xlu0 %v1549, 72
        %v1620 = vpop.permute.xlu0 %1619
        %1621 = vrot.lane.b32.xlu0 %v1550, 72
        %v1622 = vpop.permute.xlu0 %1621
        %1623 = vrot.lane.b32.xlu0 %v1551, 72
        %v1624 = vpop.permute.xlu0 %1623
        %1625 = vrot.lane.b32.xlu0 %v1552, 72
        %v1626 = vpop.permute.xlu0 %1625
        %1627 = vrot.lane.b32.xlu0 %v1553, 72
        %v1628 = vpop.permute.xlu0 %1627
        %1629 = vrot.lane.b32.xlu0 %v1554, 72
        %v1630 = vpop.permute.xlu0 %1629
        %1631 = vrot.lane.b32.xlu0 %v1555, 72
        %v1632 = vpop.permute.xlu0 %1631
        %1633 = vrot.lane.b32.xlu0 %v1556, 72
        %v1634 = vpop.permute.xlu0 %1633
        %1635 = vrot.lane.b32.xlu0 %v1557, 72
        %v1636 = vpop.permute.xlu0 %1635
        %1637 = vrot.lane.b32.xlu0 %v1558, 72
        %v1638 = vpop.permute.xlu0 %1637
        %1639 = vrot.lane.b32.xlu0 %v1559, 72
        %v1640 = vpop.permute.xlu0 %1639
        %1641 = vrot.lane.b32.xlu0 %v1560, 72
        %v1642 = vpop.permute.xlu0 %1641
        %1643 = vrot.lane.b32.xlu0 %v1561, 72
        %v1644 = vpop.permute.xlu0 %1643
        %1645 = vrot.lane.b32.xlu0 %v1562, 72
        %v1646 = vpop.permute.xlu0 %1645
        %vm1647 = vcmask 588800
        %v1648 = vsel %vm1647, %v1592, %v1594
        %v1649 = vsel %vm1647, %v1594, %v1596
        %v1650 = vsel %vm1647, %v1596, %v1598
        %v1651 = vsel %vm1647, %v1598, %v1600
        %v1652 = vsel %vm1647, %v1600, %v1602
        %v1653 = vsel %vm1647, %v1602, %v1604
        %v1654 = vsel %vm1647, %v1606, %v1608
        %v1655 = vsel %vm1647, %v1608, %v1610
        %v1656 = vsel %vm1647, %v1610, %v1612
        %v1657 = vsel %vm1647, %v1612, %v1614
        %v1658 = vsel %vm1647, %v1614, %v1616
        %v1659 = vsel %vm1647, %v1616, %v1618
        %v1660 = vsel %vm1647, %v1620, %v1622
        %v1661 = vsel %vm1647, %v1622, %v1624
        %v1662 = vsel %vm1647, %v1624, %v1626
        %v1663 = vsel %vm1647, %v1626, %v1628
        %v1664 = vsel %vm1647, %v1628, %v1630
        %v1665 = vsel %vm1647, %v1630, %v1632
        %v1666 = vsel %vm1647, %v1634, %v1636
        %v1667 = vsel %vm1647, %v1636, %v1638
        %v1668 = vsel %vm1647, %v1638, %v1640
        %v1669 = vsel %vm1647, %v1640, %v1642
        %v1670 = vsel %vm1647, %v1642, %v1644
        %v1671 = vsel %vm1647, %v1644, %v1646
        %v1696 = vadd.f32 %v1486, %v1648
        %v1697 = vadd.f32 %v1487, %v1649
        %v1698 = vadd.f32 %v1488, %v1650
        %v1699 = vadd.f32 %v1489, %v1651
        %v1700 = vadd.f32 %v1490, %v1652
        %v1701 = vadd.f32 %v1491, %v1653
        %v1702 = vadd.f32 %v1492, %v1654
        %v1703 = vadd.f32 %v1493, %v1655
        %v1704 = vadd.f32 %v1494, %v1656
        %v1705 = vadd.f32 %v1495, %v1657
        %v1706 = vadd.f32 %v1496, %v1658
        %v1707 = vadd.f32 %v1497, %v1659
        %v1708 = vadd.f32 %v1498, %v1660
        %v1709 = vadd.f32 %v1499, %v1661
        %v1710 = vadd.f32 %v1500, %v1662
        %v1711 = vadd.f32 %v1501, %v1663
        %v1712 = vadd.f32 %v1502, %v1664
        %v1713 = vadd.f32 %v1503, %v1665
        %v1714 = vadd.f32 %v1504, %v1666
        %v1715 = vadd.f32 %v1505, %v1667
        %v1716 = vadd.f32 %v1506, %v1668
        %v1717 = vadd.f32 %v1507, %v1669
        %v1718 = vadd.f32 %v1508, %v1670
        %v1719 = vadd.f32 %v1509, %v1671
        %s1720 = scalar_lea.vmem %s1, 224
        %v1721 = vld [vmem:[%s1720] sm:$0xff]
        %v1722 = vld [vmem:[%s1720 + $0x8] sm:$0xff]
        %v1723 = vld [vmem:[%s1720 + $0x10] sm:$0xff]
        %v1724 = vld [vmem:[%s1720 + $0x18] sm:$0xff]
        %1726 = vset.pattern.permute.xlu0 0
        %1727 = vperm.xlu0 %1726, %v1721
        %v1728 = vpop.permute.xlu0 %1727
        %1731 = vset.pattern.permute.xlu0 0
        %1732 = vperm.xlu0 %1731, %v1722
        %v1733 = vpop.permute.xlu0 %1732
        %1736 = vset.pattern.permute.xlu0 0
        %1737 = vperm.xlu0 %1736, %v1723
        %v1738 = vpop.permute.xlu0 %1737
        %1741 = vset.pattern.permute.xlu0 0
        %1742 = vperm.xlu0 %1741, %v1724
        %v1743 = vpop.permute.xlu0 %1742
        %v1745 = vmul.f32 %v1728, %v398
        %v1746 = vmul.f32 %v1728, %v399
        %v1747 = vmul.f32 %v1728, %v400
        %v1748 = vmul.f32 %v1728, %v401
        %v1749 = vmul.f32 %v1728, %v402
        %v1750 = vmul.f32 %v1728, %v403
        %v1751 = vmul.f32 %v1728, %v483
        %v1752 = vmul.f32 %v1733, %v398
        %v1753 = vmul.f32 %v1733, %v399
        %v1754 = vmul.f32 %v1733, %v400
        %v1755 = vmul.f32 %v1733, %v401
        %v1756 = vmul.f32 %v1733, %v402
        %v1757 = vmul.f32 %v1733, %v403
        %v1758 = vmul.f32 %v1733, %v483
        %v1759 = vmul.f32 %v1738, %v398
        %v1760 = vmul.f32 %v1738, %v399
        %v1761 = vmul.f32 %v1738, %v400
        %v1762 = vmul.f32 %v1738, %v401
        %v1763 = vmul.f32 %v1738, %v402
        %v1764 = vmul.f32 %v1738, %v403
        %v1765 = vmul.f32 %v1738, %v483
        %v1766 = vmul.f32 %v1743, %v398
        %v1767 = vmul.f32 %v1743, %v399
        %v1768 = vmul.f32 %v1743, %v400
        %v1769 = vmul.f32 %v1743, %v401
        %v1770 = vmul.f32 %v1743, %v402
        %v1771 = vmul.f32 %v1743, %v403
        %v1772 = vmul.f32 %v1743, %v483
        %1801 = vrot.lane.b32.xlu0 %v1745, 71
        %v1802 = vpop.permute.xlu0 %1801
        %1803 = vrot.lane.b32.xlu0 %v1746, 71
        %v1804 = vpop.permute.xlu0 %1803
        %1805 = vrot.lane.b32.xlu0 %v1747, 71
        %v1806 = vpop.permute.xlu0 %1805
        %1807 = vrot.lane.b32.xlu0 %v1748, 71
        %v1808 = vpop.permute.xlu0 %1807
        %1809 = vrot.lane.b32.xlu0 %v1749, 71
        %v1810 = vpop.permute.xlu0 %1809
        %1811 = vrot.lane.b32.xlu0 %v1750, 71
        %v1812 = vpop.permute.xlu0 %1811
        %1813 = vrot.lane.b32.xlu0 %v1751, 71
        %v1814 = vpop.permute.xlu0 %1813
        %1815 = vrot.lane.b32.xlu0 %v1752, 71
        %v1816 = vpop.permute.xlu0 %1815
        %1817 = vrot.lane.b32.xlu0 %v1753, 71
        %v1818 = vpop.permute.xlu0 %1817
        %1819 = vrot.lane.b32.xlu0 %v1754, 71
        %v1820 = vpop.permute.xlu0 %1819
        %1821 = vrot.lane.b32.xlu0 %v1755, 71
        %v1822 = vpop.permute.xlu0 %1821
        %1823 = vrot.lane.b32.xlu0 %v1756, 71
        %v1824 = vpop.permute.xlu0 %1823
        %1825 = vrot.lane.b32.xlu0 %v1757, 71
        %v1826 = vpop.permute.xlu0 %1825
        %1827 = vrot.lane.b32.xlu0 %v1758, 71
        %v1828 = vpop.permute.xlu0 %1827
        %1829 = vrot.lane.b32.xlu0 %v1759, 71
        %v1830 = vpop.permute.xlu0 %1829
        %1831 = vrot.lane.b32.xlu0 %v1760, 71
        %v1832 = vpop.permute.xlu0 %1831
        %1833 = vrot.lane.b32.xlu0 %v1761, 71
        %v1834 = vpop.permute.xlu0 %1833
        %1835 = vrot.lane.b32.xlu0 %v1762, 71
        %v1836 = vpop.permute.xlu0 %1835
        %1837 = vrot.lane.b32.xlu0 %v1763, 71
        %v1838 = vpop.permute.xlu0 %1837
        %1839 = vrot.lane.b32.xlu0 %v1764, 71
        %v1840 = vpop.permute.xlu0 %1839
        %1841 = vrot.lane.b32.xlu0 %v1765, 71
        %v1842 = vpop.permute.xlu0 %1841
        %1843 = vrot.lane.b32.xlu0 %v1766, 71
        %v1844 = vpop.permute.xlu0 %1843
        %1845 = vrot.lane.b32.xlu0 %v1767, 71
        %v1846 = vpop.permute.xlu0 %1845
        %1847 = vrot.lane.b32.xlu0 %v1768, 71
        %v1848 = vpop.permute.xlu0 %1847
        %1849 = vrot.lane.b32.xlu0 %v1769, 71
        %v1850 = vpop.permute.xlu0 %1849
        %1851 = vrot.lane.b32.xlu0 %v1770, 71
        %v1852 = vpop.permute.xlu0 %1851
        %1853 = vrot.lane.b32.xlu0 %v1771, 71
        %v1854 = vpop.permute.xlu0 %1853
        %1855 = vrot.lane.b32.xlu0 %v1772, 71
        %v1856 = vpop.permute.xlu0 %1855
        %vm1857 = vcmask 580608
        %v1858 = vsel %vm1857, %v1802, %v1804
        %v1859 = vsel %vm1857, %v1804, %v1806
        %v1860 = vsel %vm1857, %v1806, %v1808
        %v1861 = vsel %vm1857, %v1808, %v1810
        %v1862 = vsel %vm1857, %v1810, %v1812
        %v1863 = vsel %vm1857, %v1812, %v1814
        %v1864 = vsel %vm1857, %v1816, %v1818
        %v1865 = vsel %vm1857, %v1818, %v1820
        %v1866 = vsel %vm1857, %v1820, %v1822
        %v1867 = vsel %vm1857, %v1822, %v1824
        %v1868 = vsel %vm1857, %v1824, %v1826
        %v1869 = vsel %vm1857, %v1826, %v1828
        %v1870 = vsel %vm1857, %v1830, %v1832
        %v1871 = vsel %vm1857, %v1832, %v1834
        %v1872 = vsel %vm1857, %v1834, %v1836
        %v1873 = vsel %vm1857, %v1836, %v1838
        %v1874 = vsel %vm1857, %v1838, %v1840
        %v1875 = vsel %vm1857, %v1840, %v1842
        %v1876 = vsel %vm1857, %v1844, %v1846
        %v1877 = vsel %vm1857, %v1846, %v1848
        %v1878 = vsel %vm1857, %v1848, %v1850
        %v1879 = vsel %vm1857, %v1850, %v1852
        %v1880 = vsel %vm1857, %v1852, %v1854
        %v1881 = vsel %vm1857, %v1854, %v1856
        %v1906 = vadd.f32 %v1696, %v1858
        %v1907 = vadd.f32 %v1697, %v1859
        %v1908 = vadd.f32 %v1698, %v1860
        %v1909 = vadd.f32 %v1699, %v1861
        %v1910 = vadd.f32 %v1700, %v1862
        %v1911 = vadd.f32 %v1701, %v1863
        %v1912 = vadd.f32 %v1702, %v1864
        %v1913 = vadd.f32 %v1703, %v1865
        %v1914 = vadd.f32 %v1704, %v1866
        %v1915 = vadd.f32 %v1705, %v1867
        %v1916 = vadd.f32 %v1706, %v1868
        %v1917 = vadd.f32 %v1707, %v1869
        %v1918 = vadd.f32 %v1708, %v1870
        %v1919 = vadd.f32 %v1709, %v1871
        %v1920 = vadd.f32 %v1710, %v1872
        %v1921 = vadd.f32 %v1711, %v1873
        %v1922 = vadd.f32 %v1712, %v1874
        %v1923 = vadd.f32 %v1713, %v1875
        %v1924 = vadd.f32 %v1714, %v1876
        %v1925 = vadd.f32 %v1715, %v1877
        %v1926 = vadd.f32 %v1716, %v1878
        %v1927 = vadd.f32 %v1717, %v1879
        %v1928 = vadd.f32 %v1718, %v1880
        %v1929 = vadd.f32 %v1719, %v1881
        %s1930 = scalar_lea.vmem %s1, 256
        %v1931 = vld [vmem:[%s1930] sm:$0xff]
        %v1932 = vld [vmem:[%s1930 + $0x8] sm:$0xff]
        %v1933 = vld [vmem:[%s1930 + $0x10] sm:$0xff]
        %v1934 = vld [vmem:[%s1930 + $0x18] sm:$0xff]
        %1936 = vset.pattern.permute.xlu0 0
        %1937 = vperm.xlu0 %1936, %v1931
        %v1938 = vpop.permute.xlu0 %1937
        %1941 = vset.pattern.permute.xlu0 0
        %1942 = vperm.xlu0 %1941, %v1932
        %v1943 = vpop.permute.xlu0 %1942
        %1946 = vset.pattern.permute.xlu0 0
        %1947 = vperm.xlu0 %1946, %v1933
        %v1948 = vpop.permute.xlu0 %1947
        %1951 = vset.pattern.permute.xlu0 0
        %1952 = vperm.xlu0 %1951, %v1934
        %v1953 = vpop.permute.xlu0 %1952
        %v1955 = vmul.f32 %v1938, %v398
        %v1956 = vmul.f32 %v1938, %v399
        %v1957 = vmul.f32 %v1938, %v400
        %v1958 = vmul.f32 %v1938, %v401
        %v1959 = vmul.f32 %v1938, %v402
        %v1960 = vmul.f32 %v1938, %v403
        %v1961 = vmul.f32 %v1938, %v483
        %v1962 = vmul.f32 %v1943, %v398
        %v1963 = vmul.f32 %v1943, %v399
        %v1964 = vmul.f32 %v1943, %v400
        %v1965 = vmul.f32 %v1943, %v401
        %v1966 = vmul.f32 %v1943, %v402
        %v1967 = vmul.f32 %v1943, %v403
        %v1968 = vmul.f32 %v1943, %v483
        %v1969 = vmul.f32 %v1948, %v398
        %v1970 = vmul.f32 %v1948, %v399
        %v1971 = vmul.f32 %v1948, %v400
        %v1972 = vmul.f32 %v1948, %v401
        %v1973 = vmul.f32 %v1948, %v402
        %v1974 = vmul.f32 %v1948, %v403
        %v1975 = vmul.f32 %v1948, %v483
        %v1976 = vmul.f32 %v1953, %v398
        %v1977 = vmul.f32 %v1953, %v399
        %v1978 = vmul.f32 %v1953, %v400
        %v1979 = vmul.f32 %v1953, %v401
        %v1980 = vmul.f32 %v1953, %v402
        %v1981 = vmul.f32 %v1953, %v403
        %v1982 = vmul.f32 %v1953, %v483
        %2011 = vrot.lane.b32.xlu0 %v1955, 70
        %v2012 = vpop.permute.xlu0 %2011
        %2013 = vrot.lane.b32.xlu0 %v1956, 70
        %v2014 = vpop.permute.xlu0 %2013
        %2015 = vrot.lane.b32.xlu0 %v1957, 70
        %v2016 = vpop.permute.xlu0 %2015
        %2017 = vrot.lane.b32.xlu0 %v1958, 70
        %v2018 = vpop.permute.xlu0 %2017
        %2019 = vrot.lane.b32.xlu0 %v1959, 70
        %v2020 = vpop.permute.xlu0 %2019
        %2021 = vrot.lane.b32.xlu0 %v1960, 70
        %v2022 = vpop.permute.xlu0 %2021
        %2023 = vrot.lane.b32.xlu0 %v1961, 70
        %v2024 = vpop.permute.xlu0 %2023
        %2025 = vrot.lane.b32.xlu0 %v1962, 70
        %v2026 = vpop.permute.xlu0 %2025
        %2027 = vrot.lane.b32.xlu0 %v1963, 70
        %v2028 = vpop.permute.xlu0 %2027
        %2029 = vrot.lane.b32.xlu0 %v1964, 70
        %v2030 = vpop.permute.xlu0 %2029
        %2031 = vrot.lane.b32.xlu0 %v1965, 70
        %v2032 = vpop.permute.xlu0 %2031
        %2033 = vrot.lane.b32.xlu0 %v1966, 70
        %v2034 = vpop.permute.xlu0 %2033
        %2035 = vrot.lane.b32.xlu0 %v1967, 70
        %v2036 = vpop.permute.xlu0 %2035
        %2037 = vrot.lane.b32.xlu0 %v1968, 70
        %v2038 = vpop.permute.xlu0 %2037
        %2039 = vrot.lane.b32.xlu0 %v1969, 70
        %v2040 = vpop.permute.xlu0 %2039
        %2041 = vrot.lane.b32.xlu0 %v1970, 70
        %v2042 = vpop.permute.xlu0 %2041
        %2043 = vrot.lane.b32.xlu0 %v1971, 70
        %v2044 = vpop.permute.xlu0 %2043
        %2045 = vrot.lane.b32.xlu0 %v1972, 70
        %v2046 = vpop.permute.xlu0 %2045
        %2047 = vrot.lane.b32.xlu0 %v1973, 70
        %v2048 = vpop.permute.xlu0 %2047
        %2049 = vrot.lane.b32.xlu0 %v1974, 70
        %v2050 = vpop.permute.xlu0 %2049
        %2051 = vrot.lane.b32.xlu0 %v1975, 70
        %v2052 = vpop.permute.xlu0 %2051
        %2053 = vrot.lane.b32.xlu0 %v1976, 70
        %v2054 = vpop.permute.xlu0 %2053
        %2055 = vrot.lane.b32.xlu0 %v1977, 70
        %v2056 = vpop.permute.xlu0 %2055
        %2057 = vrot.lane.b32.xlu0 %v1978, 70
        %v2058 = vpop.permute.xlu0 %2057
        %2059 = vrot.lane.b32.xlu0 %v1979, 70
        %v2060 = vpop.permute.xlu0 %2059
        %2061 = vrot.lane.b32.xlu0 %v1980, 70
        %v2062 = vpop.permute.xlu0 %2061
        %2063 = vrot.lane.b32.xlu0 %v1981, 70
        %v2064 = vpop.permute.xlu0 %2063
        %2065 = vrot.lane.b32.xlu0 %v1982, 70
        %v2066 = vpop.permute.xlu0 %2065
        %vm2067 = vcmask 572416
        %v2068 = vsel %vm2067, %v2012, %v2014
        %v2069 = vsel %vm2067, %v2014, %v2016
        %v2070 = vsel %vm2067, %v2016, %v2018
        %v2071 = vsel %vm2067, %v2018, %v2020
        %v2072 = vsel %vm2067, %v2020, %v2022
        %v2073 = vsel %vm2067, %v2022, %v2024
        %v2074 = vsel %vm2067, %v2026, %v2028
        %v2075 = vsel %vm2067, %v2028, %v2030
        %v2076 = vsel %vm2067, %v2030, %v2032
        %v2077 = vsel %vm2067, %v2032, %v2034
        %v2078 = vsel %vm2067, %v2034, %v2036
        %v2079 = vsel %vm2067, %v2036, %v2038
        %v2080 = vsel %vm2067, %v2040, %v2042
        %v2081 = vsel %vm2067, %v2042, %v2044
        %v2082 = vsel %vm2067, %v2044, %v2046
        %v2083 = vsel %vm2067, %v2046, %v2048
        %v2084 = vsel %vm2067, %v2048, %v2050
        %v2085 = vsel %vm2067, %v2050, %v2052
        %v2086 = vsel %vm2067, %v2054, %v2056
        %v2087 = vsel %vm2067, %v2056, %v2058
        %v2088 = vsel %vm2067, %v2058, %v2060
        %v2089 = vsel %vm2067, %v2060, %v2062
        %v2090 = vsel %vm2067, %v2062, %v2064
        %v2091 = vsel %vm2067, %v2064, %v2066
        %v2116 = vadd.f32 %v1906, %v2068
        %v2117 = vadd.f32 %v1907, %v2069
        %v2118 = vadd.f32 %v1908, %v2070
        %v2119 = vadd.f32 %v1909, %v2071
        %v2120 = vadd.f32 %v1910, %v2072
        %v2121 = vadd.f32 %v1911, %v2073
        %v2122 = vadd.f32 %v1912, %v2074
        %v2123 = vadd.f32 %v1913, %v2075
        %v2124 = vadd.f32 %v1914, %v2076
        %v2125 = vadd.f32 %v1915, %v2077
        %v2126 = vadd.f32 %v1916, %v2078
        %v2127 = vadd.f32 %v1917, %v2079
        %v2128 = vadd.f32 %v1918, %v2080
        %v2129 = vadd.f32 %v1919, %v2081
        %v2130 = vadd.f32 %v1920, %v2082
        %v2131 = vadd.f32 %v1921, %v2083
        %v2132 = vadd.f32 %v1922, %v2084
        %v2133 = vadd.f32 %v1923, %v2085
        %v2134 = vadd.f32 %v1924, %v2086
        %v2135 = vadd.f32 %v1925, %v2087
        %v2136 = vadd.f32 %v1926, %v2088
        %v2137 = vadd.f32 %v1927, %v2089
        %v2138 = vadd.f32 %v1928, %v2090
        %v2139 = vadd.f32 %v1929, %v2091
        %2164 = vrot.lane.b32.xlu0 %v2116, 127
        %v2165 = vpop.permute.xlu0 %2164
        %2166 = vrot.lane.b32.xlu0 %v2117, 127
        %v2167 = vpop.permute.xlu0 %2166
        %2168 = vrot.lane.b32.xlu0 %v2118, 127
        %v2169 = vpop.permute.xlu0 %2168
        %2170 = vrot.lane.b32.xlu0 %v2119, 127
        %v2171 = vpop.permute.xlu0 %2170
        %2172 = vrot.lane.b32.xlu0 %v2120, 127
        %v2173 = vpop.permute.xlu0 %2172
        %2174 = vrot.lane.b32.xlu0 %v2121, 127
        %v2175 = vpop.permute.xlu0 %2174
        %2176 = vrot.lane.b32.xlu0 %v2122, 127
        %v2177 = vpop.permute.xlu0 %2176
        %2178 = vrot.lane.b32.xlu0 %v2123, 127
        %v2179 = vpop.permute.xlu0 %2178
        %2180 = vrot.lane.b32.xlu0 %v2124, 127
        %v2181 = vpop.permute.xlu0 %2180
        %2182 = vrot.lane.b32.xlu0 %v2125, 127
        %v2183 = vpop.permute.xlu0 %2182
        %2184 = vrot.lane.b32.xlu0 %v2126, 127
        %v2185 = vpop.permute.xlu0 %2184
        %2186 = vrot.lane.b32.xlu0 %v2127, 127
        %v2187 = vpop.permute.xlu0 %2186
        %2188 = vrot.lane.b32.xlu0 %v2128, 127
        %v2189 = vpop.permute.xlu0 %2188
        %2190 = vrot.lane.b32.xlu0 %v2129, 127
        %v2191 = vpop.permute.xlu0 %2190
        %2192 = vrot.lane.b32.xlu0 %v2130, 127
        %v2193 = vpop.permute.xlu0 %2192
        %2194 = vrot.lane.b32.xlu0 %v2131, 127
        %v2195 = vpop.permute.xlu0 %2194
        %2196 = vrot.lane.b32.xlu0 %v2132, 127
        %v2197 = vpop.permute.xlu0 %2196
        %2198 = vrot.lane.b32.xlu0 %v2133, 127
        %v2199 = vpop.permute.xlu0 %2198
        %2200 = vrot.lane.b32.xlu0 %v2134, 127
        %v2201 = vpop.permute.xlu0 %2200
        %2202 = vrot.lane.b32.xlu0 %v2135, 127
        %v2203 = vpop.permute.xlu0 %2202
        %2204 = vrot.lane.b32.xlu0 %v2136, 127
        %v2205 = vpop.permute.xlu0 %2204
        %2206 = vrot.lane.b32.xlu0 %v2137, 127
        %v2207 = vpop.permute.xlu0 %2206
        %2208 = vrot.lane.b32.xlu0 %v2138, 127
        %v2209 = vpop.permute.xlu0 %2208
        %2210 = vrot.lane.b32.xlu0 %v2139, 127
        %v2211 = vpop.permute.xlu0 %2210
        %v2212 = vsel %vm597, %v2165, %v2167
        %v2213 = vsel %vm597, %v2167, %v2169
        %v2214 = vsel %vm597, %v2169, %v2171
        %v2215 = vsel %vm597, %v2171, %v2173
        %v2216 = vsel %vm597, %v2173, %v2175
        %v2217 = vsel %vm597, %v2177, %v2179
        %v2218 = vsel %vm597, %v2179, %v2181
        %v2219 = vsel %vm597, %v2181, %v2183
        %v2220 = vsel %vm597, %v2183, %v2185
        %v2221 = vsel %vm597, %v2185, %v2187
        %v2222 = vsel %vm597, %v2189, %v2191
        %v2223 = vsel %vm597, %v2191, %v2193
        %v2224 = vsel %vm597, %v2193, %v2195
        %v2225 = vsel %vm597, %v2195, %v2197
        %v2226 = vsel %vm597, %v2197, %v2199
        %v2227 = vsel %vm597, %v2201, %v2203
        %v2228 = vsel %vm597, %v2203, %v2205
        %v2229 = vsel %vm597, %v2205, %v2207
        %v2230 = vsel %vm597, %v2207, %v2209
        %v2231 = vsel %vm597, %v2209, %v2211
        %v2256 = vmax.f32 %v2116, %v2212
        %v2257 = vmax.f32 %v2117, %v2213
        %v2258 = vmax.f32 %v2118, %v2214
        %v2259 = vmax.f32 %v2119, %v2215
        %v2260 = vmax.f32 %v2120, %v2216
        %v2261 = vmax.f32 %v2121, %v2175
        %v2262 = vmax.f32 %v2122, %v2217
        %v2263 = vmax.f32 %v2123, %v2218
        %v2264 = vmax.f32 %v2124, %v2219
        %v2265 = vmax.f32 %v2125, %v2220
        %v2266 = vmax.f32 %v2126, %v2221
        %v2267 = vmax.f32 %v2127, %v2187
        %v2268 = vmax.f32 %v2128, %v2222
        %v2269 = vmax.f32 %v2129, %v2223
        %v2270 = vmax.f32 %v2130, %v2224
        %v2271 = vmax.f32 %v2131, %v2225
        %v2272 = vmax.f32 %v2132, %v2226
        %v2273 = vmax.f32 %v2133, %v2199
        %v2274 = vmax.f32 %v2134, %v2227
        %v2275 = vmax.f32 %v2135, %v2228
        %v2276 = vmax.f32 %v2136, %v2229
        %v2277 = vmax.f32 %v2137, %v2230
        %v2278 = vmax.f32 %v2138, %v2231
        %v2279 = vmax.f32 %v2139, %v2211
        %2304 = vrot.lane.b32.xlu0 %v2256, 100
        %v2305 = vpop.permute.xlu0 %2304
        %2306 = vrot.lane.b32.xlu0 %v2257, 100
        %v2307 = vpop.permute.xlu0 %2306
        %2308 = vrot.lane.b32.xlu0 %v2258, 100
        %v2309 = vpop.permute.xlu0 %2308
        %2310 = vrot.lane.b32.xlu0 %v2259, 100
        %v2311 = vpop.permute.xlu0 %2310
        %2312 = vrot.lane.b32.xlu0 %v2260, 100
        %v2313 = vpop.permute.xlu0 %2312
        %2314 = vrot.lane.b32.xlu0 %v2261, 100
        %v2315 = vpop.permute.xlu0 %2314
        %2316 = vrot.lane.b32.xlu0 %v2262, 100
        %v2317 = vpop.permute.xlu0 %2316
        %2318 = vrot.lane.b32.xlu0 %v2263, 100
        %v2319 = vpop.permute.xlu0 %2318
        %2320 = vrot.lane.b32.xlu0 %v2264, 100
        %v2321 = vpop.permute.xlu0 %2320
        %2322 = vrot.lane.b32.xlu0 %v2265, 100
        %v2323 = vpop.permute.xlu0 %2322
        %2324 = vrot.lane.b32.xlu0 %v2266, 100
        %v2325 = vpop.permute.xlu0 %2324
        %2326 = vrot.lane.b32.xlu0 %v2267, 100
        %v2327 = vpop.permute.xlu0 %2326
        %2328 = vrot.lane.b32.xlu0 %v2268, 100
        %v2329 = vpop.permute.xlu0 %2328
        %2330 = vrot.lane.b32.xlu0 %v2269, 100
        %v2331 = vpop.permute.xlu0 %2330
        %2332 = vrot.lane.b32.xlu0 %v2270, 100
        %v2333 = vpop.permute.xlu0 %2332
        %2334 = vrot.lane.b32.xlu0 %v2271, 100
        %v2335 = vpop.permute.xlu0 %2334
        %2336 = vrot.lane.b32.xlu0 %v2272, 100
        %v2337 = vpop.permute.xlu0 %2336
        %2338 = vrot.lane.b32.xlu0 %v2273, 100
        %v2339 = vpop.permute.xlu0 %2338
        %2340 = vrot.lane.b32.xlu0 %v2274, 100
        %v2341 = vpop.permute.xlu0 %2340
        %2342 = vrot.lane.b32.xlu0 %v2275, 100
        %v2343 = vpop.permute.xlu0 %2342
        %2344 = vrot.lane.b32.xlu0 %v2276, 100
        %v2345 = vpop.permute.xlu0 %2344
        %2346 = vrot.lane.b32.xlu0 %v2277, 100
        %v2347 = vpop.permute.xlu0 %2346
        %2348 = vrot.lane.b32.xlu0 %v2278, 100
        %v2349 = vpop.permute.xlu0 %2348
        %2350 = vrot.lane.b32.xlu0 %v2279, 100
        %v2351 = vpop.permute.xlu0 %2350
        %v2352 = vsel %vm1017, %v2305, %v2307
        %v2353 = vsel %vm1017, %v2307, %v2309
        %v2354 = vsel %vm1017, %v2309, %v2311
        %v2355 = vsel %vm1017, %v2311, %v2313
        %v2356 = vsel %vm1017, %v2313, %v2315
        %v2357 = vsel %vm1017, %v2317, %v2319
        %v2358 = vsel %vm1017, %v2319, %v2321
        %v2359 = vsel %vm1017, %v2321, %v2323
        %v2360 = vsel %vm1017, %v2323, %v2325
        %v2361 = vsel %vm1017, %v2325, %v2327
        %v2362 = vsel %vm1017, %v2329, %v2331
        %v2363 = vsel %vm1017, %v2331, %v2333
        %v2364 = vsel %vm1017, %v2333, %v2335
        %v2365 = vsel %vm1017, %v2335, %v2337
        %v2366 = vsel %vm1017, %v2337, %v2339
        %v2367 = vsel %vm1017, %v2341, %v2343
        %v2368 = vsel %vm1017, %v2343, %v2345
        %v2369 = vsel %vm1017, %v2345, %v2347
        %v2370 = vsel %vm1017, %v2347, %v2349
        %v2371 = vsel %vm1017, %v2349, %v2351
        %v2396 = vmax.f32 %v2256, %v2352
        %v2397 = vmax.f32 %v2257, %v2353
        %v2398 = vmax.f32 %v2258, %v2354
        %v2399 = vmax.f32 %v2259, %v2355
        %v2400 = vmax.f32 %v2260, %v2356
        %v2401 = vmax.f32 %v2261, %v2315
        %v2402 = vmax.f32 %v2262, %v2357
        %v2403 = vmax.f32 %v2263, %v2358
        %v2404 = vmax.f32 %v2264, %v2359
        %v2405 = vmax.f32 %v2265, %v2360
        %v2406 = vmax.f32 %v2266, %v2361
        %v2407 = vmax.f32 %v2267, %v2327
        %v2408 = vmax.f32 %v2268, %v2362
        %v2409 = vmax.f32 %v2269, %v2363
        %v2410 = vmax.f32 %v2270, %v2364
        %v2411 = vmax.f32 %v2271, %v2365
        %v2412 = vmax.f32 %v2272, %v2366
        %v2413 = vmax.f32 %v2273, %v2339
        %v2414 = vmax.f32 %v2274, %v2367
        %v2415 = vmax.f32 %v2275, %v2368
        %v2416 = vmax.f32 %v2276, %v2369
        %v2417 = vmax.f32 %v2277, %v2370
        %v2418 = vmax.f32 %v2278, %v2371
        %v2419 = vmax.f32 %v2279, %v2351
        %v2420 = vpack.c.bf16 %v2402, %v2396
        %v2421 = vpack.c.bf16 %v2403, %v2397
        %v2422 = vpack.c.bf16 %v2404, %v2398
        %v2423 = vpack.c.bf16 %v2405, %v2399
        %v2424 = vpack.c.bf16 %v2406, %v2400
        %v2425 = vpack.c.bf16 %v2407, %v2401
        %v2426 = vpack.c.bf16 %v2414, %v2408
        %v2427 = vpack.c.bf16 %v2415, %v2409
        %v2428 = vpack.c.bf16 %v2416, %v2410
        %v2429 = vpack.c.bf16 %v2417, %v2411
        %v2430 = vpack.c.bf16 %v2418, %v2412
        %v2431 = vpack.c.bf16 %v2419, %v2413
        %v2432 = vld [vmem:[%s5] sm:$0xff]
        %v2433 = vld [vmem:[%s5 + $0x8] sm:$0xff]
        %v2434 = vld [vmem:[%s5 + $0x10] sm:$0xff]
        %v2435 = vld [vmem:[%s5 + $0x18] sm:$0xff]
        %v2436 = vld [vmem:[%s5 + $0x20] sm:$0xff]
        %v2437 = vld [vmem:[%s5 + $0x28] sm:$0xff]
        %v2438 = vld [vmem:[%s5 + $0x30] sm:$0xff]
        %v2439 = vld [vmem:[%s5 + $0x38] sm:$0xff]
        %v2440 = vld [vmem:[%s5 + $0x40] sm:$0xff]
        %v2441 = vld [vmem:[%s5 + $0x48] sm:$0xff]
        %v2442 = vld [vmem:[%s5 + $0x50] sm:$0xff]
        %v2443 = vld [vmem:[%s5 + $0x58] sm:$0xff]
        %v2444 = vld [vmem:[%s5 + $0x60] sm:$0xff]
        %v2445 = vld [vmem:[%s5 + $0x68] sm:$0xff]
        %v2446 = vld [vmem:[%s5 + $0x70] sm:$0xff]
        %v2447 = vld [vmem:[%s5 + $0x78] sm:$0xff]
        %v2448 = vld [vmem:[%s5 + $0x80] sm:$0xff]
        %v2449 = vld [vmem:[%s5 + $0x88] sm:$0xff]
        %v2450 = vld [vmem:[%s5 + $0x90] sm:$0xff]
        %v2451 = vld [vmem:[%s5 + $0x98] sm:$0xff]
        %v2452 = vld [vmem:[%s5 + $0xa0] sm:$0xff]
        %v2453 = vld [vmem:[%s5 + $0xa8] sm:$0xff]
        %v2454 = vld [vmem:[%s5 + $0xb0] sm:$0xff]
        %v2455 = vld [vmem:[%s5 + $0xb8] sm:$0xff]
        %v2456 = vld [vmem:[%s5 + $0xc0] sm:$0xff]
        %v2457 = vld [vmem:[%s5 + $0xc8] sm:$0xff]
        %v2458 = vld [vmem:[%s5 + $0xd0] sm:$0xff]
        %v2459 = vld [vmem:[%s5 + $0xd8] sm:$0xff]
        %v2460 = vld [vmem:[%s5 + $0xe0] sm:$0xff]
        %v2461 = vld [vmem:[%s5 + $0xe8] sm:$0xff]
        %v2462 = vld [vmem:[%s5 + $0xf0] sm:$0xff]
        %v2463 = vld [vmem:[%s5 + $0xf8] sm:$0xff]
        %v2464 = vld [vmem:[%s5 + $0x100] sm:$0xff]
        %v2465 = vld [vmem:[%s5 + $0x108] sm:$0xff]
        %v2466 = vld [vmem:[%s5 + $0x110] sm:$0xff]
        %v2467 = vld [vmem:[%s5 + $0x118] sm:$0xff]
        %v2468 = vld [vmem:[%s5 + $0x120] sm:$0xff]
        %v2469 = vld [vmem:[%s5 + $0x128] sm:$0xff]
        %v2470 = vld [vmem:[%s5 + $0x130] sm:$0xff]
        %v2471 = vld [vmem:[%s5 + $0x138] sm:$0xff]
        %v2472 = vld [vmem:[%s5 + $0x140] sm:$0xff]
        %v2473 = vld [vmem:[%s5 + $0x148] sm:$0xff]
        %v2474 = vld [vmem:[%s5 + $0x150] sm:$0xff]
        %v2475 = vld [vmem:[%s5 + $0x158] sm:$0xff]
        %v2476 = vld [vmem:[%s5 + $0x160] sm:$0xff]
        %v2477 = vld [vmem:[%s5 + $0x168] sm:$0xff]
        %v2478 = vld [vmem:[%s5 + $0x170] sm:$0xff]
        %v2479 = vld [vmem:[%s5 + $0x178] sm:$0xff]
        %v2480 = vld [vmem:[%s5 + $0x180] sm:$0xff]
        %v2481 = vld [vmem:[%s5 + $0x188] sm:$0xff]
        %v2482 = vld [vmem:[%s5 + $0x190] sm:$0xff]
        %v2483 = vld [vmem:[%s5 + $0x198] sm:$0xff]
        %v2484 = vld [vmem:[%s5 + $0x1a0] sm:$0xff]
        %v2485 = vld [vmem:[%s5 + $0x1a8] sm:$0xff]
        %v2486 = vld [vmem:[%s5 + $0x1b0] sm:$0xff]
        %v2487 = vld [vmem:[%s5 + $0x1b8] sm:$0xff]
        %v2488 = vld [vmem:[%s5 + $0x1c0] sm:$0xff]
        %v2489 = vld [vmem:[%s5 + $0x1c8] sm:$0xff]
        %v2490 = vld [vmem:[%s5 + $0x1d0] sm:$0xff]
        %v2491 = vld [vmem:[%s5 + $0x1d8] sm:$0xff]
        %v2492 = vld [vmem:[%s5 + $0x1e0] sm:$0xff]
        %v2493 = vld [vmem:[%s5 + $0x1e8] sm:$0xff]
        %v2494 = vld [vmem:[%s5 + $0x1f0] sm:$0xff]
        %v2495 = vld [vmem:[%s5 + $0x1f8] sm:$0xff]
        %v2496 = vld [vmem:[%s5 + $0x200] sm:$0xff]
        %v2497 = vld [vmem:[%s5 + $0x208] sm:$0xff]
        %v2498 = vld [vmem:[%s5 + $0x210] sm:$0xff]
        %v2499 = vld [vmem:[%s5 + $0x218] sm:$0xff]
        %v2500 = vld [vmem:[%s5 + $0x220] sm:$0xff]
        %v2501 = vld [vmem:[%s5 + $0x228] sm:$0xff]
        %v2502 = vld [vmem:[%s5 + $0x230] sm:$0xff]
        %v2503 = vld [vmem:[%s5 + $0x238] sm:$0xff]
        %v2504 = vld [vmem:[%s5 + $0x240] sm:$0xff]
        %v2505 = vld [vmem:[%s5 + $0x248] sm:$0xff]
        %v2506 = vld [vmem:[%s5 + $0x250] sm:$0xff]
        %v2507 = vld [vmem:[%s5 + $0x258] sm:$0xff]
        %v2508 = vld [vmem:[%s5 + $0x260] sm:$0xff]
        %v2509 = vld [vmem:[%s5 + $0x268] sm:$0xff]
        %v2510 = vld [vmem:[%s5 + $0x270] sm:$0xff]
        %v2511 = vld [vmem:[%s5 + $0x278] sm:$0xff]
        %v2512 = vld [vmem:[%s5 + $0x280] sm:$0xff]
        %v2513 = vld [vmem:[%s5 + $0x288] sm:$0xff]
        %v2514 = vld [vmem:[%s5 + $0x290] sm:$0xff]
        %v2515 = vld [vmem:[%s5 + $0x298] sm:$0xff]
        %v2516 = vld [vmem:[%s5 + $0x2a0] sm:$0xff]
        %v2517 = vld [vmem:[%s5 + $0x2a8] sm:$0xff]
        %v2518 = vld [vmem:[%s5 + $0x2b0] sm:$0xff]
        %v2519 = vld [vmem:[%s5 + $0x2b8] sm:$0xff]
        %v2520 = vld [vmem:[%s2] sm:$0xff]
        %v2521 = vld [vmem:[%s2 + $0x8] sm:$0xff]
        %v2522 = vld [vmem:[%s2 + $0x10] sm:$0xff]
        %v2523 = vld [vmem:[%s2 + $0x18] sm:$0xff]
        %2525 = vset.pattern.permute.xlu0 0
        %2526 = vperm.xlu0 %2525, %v2520
        %v2527 = vpop.permute.xlu0 %2526
        %2530 = vset.pattern.permute.xlu0 0
        %2531 = vperm.xlu0 %2530, %v2521
        %v2532 = vpop.permute.xlu0 %2531
        %2535 = vset.pattern.permute.xlu0 0
        %2536 = vperm.xlu0 %2535, %v2522
        %v2537 = vpop.permute.xlu0 %2536
        %2540 = vset.pattern.permute.xlu0 0
        %2541 = vperm.xlu0 %2540, %v2523
        %v2542 = vpop.permute.xlu0 %2541
        %v2632 = vunpack.c.l.b16 %v2432
        %v2633 = vunpack.c.h.b16 %v2432
        %v2634 = vunpack.c.l.b16 %v2433
        %v2635 = vunpack.c.h.b16 %v2433
        %v2636 = vunpack.c.l.b16 %v2434
        %v2637 = vunpack.c.h.b16 %v2434
        %v2638 = vunpack.c.l.b16 %v2435
        %v2639 = vunpack.c.h.b16 %v2435
        %v2640 = vunpack.c.l.b16 %v2436
        %v2641 = vunpack.c.h.b16 %v2436
        %v2642 = vunpack.c.l.b16 %v2437
        %v2643 = vunpack.c.h.b16 %v2437
        %v2644 = vunpack.c.l.b16 %v2438
        %v2645 = vunpack.c.h.b16 %v2438
        %v2646 = vunpack.c.l.b16 %v2439
        %v2647 = vunpack.c.h.b16 %v2439
        %v2648 = vunpack.c.l.b16 %v2440
        %v2649 = vunpack.c.h.b16 %v2440
        %v2650 = vunpack.c.l.b16 %v2441
        %v2651 = vunpack.c.h.b16 %v2441
        %v2652 = vunpack.c.l.b16 %v2442
        %v2653 = vunpack.c.h.b16 %v2442
        %v2654 = vunpack.c.l.b16 %v2443
        %v2655 = vunpack.c.h.b16 %v2443
        %v2656 = vunpack.c.l.b16 %v2444
        %v2657 = vunpack.c.h.b16 %v2444
        %v2658 = vunpack.c.l.b16 %v2445
        %v2659 = vunpack.c.h.b16 %v2445
        %v2660 = vunpack.c.l.b16 %v2446
        %v2661 = vunpack.c.h.b16 %v2446
        %v2662 = vunpack.c.l.b16 %v2447
        %v2663 = vunpack.c.h.b16 %v2447
        %v2664 = vunpack.c.l.b16 %v2448
        %v2665 = vunpack.c.h.b16 %v2448
        %v2666 = vunpack.c.l.b16 %v2449
        %v2667 = vunpack.c.h.b16 %v2449
        %v2668 = vunpack.c.l.b16 %v2450
        %v2669 = vunpack.c.h.b16 %v2450
        %v2670 = vunpack.c.l.b16 %v2451
        %v2671 = vunpack.c.h.b16 %v2451
        %v2672 = vunpack.c.l.b16 %v2452
        %v2673 = vunpack.c.h.b16 %v2452
        %v2674 = vunpack.c.l.b16 %v2453
        %v2675 = vunpack.c.h.b16 %v2453
        %v2676 = vunpack.c.l.b16 %v2454
        %v2677 = vunpack.c.h.b16 %v2454
        %v2678 = vunpack.c.l.b16 %v2455
        %v2679 = vunpack.c.h.b16 %v2455
        %v2680 = vunpack.c.l.b16 %v2456
        %v2681 = vunpack.c.h.b16 %v2456
        %v2682 = vunpack.c.l.b16 %v2457
        %v2683 = vunpack.c.h.b16 %v2457
        %v2684 = vunpack.c.l.b16 %v2458
        %v2685 = vunpack.c.h.b16 %v2458
        %v2686 = vunpack.c.l.b16 %v2459
        %v2687 = vunpack.c.h.b16 %v2459
        %v2688 = vunpack.c.l.b16 %v2460
        %v2689 = vunpack.c.h.b16 %v2460
        %v2690 = vunpack.c.l.b16 %v2461
        %v2691 = vunpack.c.h.b16 %v2461
        %v2692 = vunpack.c.l.b16 %v2462
        %v2693 = vunpack.c.h.b16 %v2462
        %v2694 = vunpack.c.l.b16 %v2463
        %v2695 = vunpack.c.h.b16 %v2463
        %v2696 = vunpack.c.l.b16 %v2464
        %v2697 = vunpack.c.h.b16 %v2464
        %v2698 = vunpack.c.l.b16 %v2465
        %v2699 = vunpack.c.h.b16 %v2465
        %v2700 = vunpack.c.l.b16 %v2466
        %v2701 = vunpack.c.h.b16 %v2466
        %v2702 = vunpack.c.l.b16 %v2467
        %v2703 = vunpack.c.h.b16 %v2467
        %v2704 = vunpack.c.l.b16 %v2468
        %v2705 = vunpack.c.h.b16 %v2468
        %v2706 = vunpack.c.l.b16 %v2469
        %v2707 = vunpack.c.h.b16 %v2469
        %v2708 = vunpack.c.l.b16 %v2470
        %v2709 = vunpack.c.h.b16 %v2470
        %v2710 = vunpack.c.l.b16 %v2471
        %v2711 = vunpack.c.h.b16 %v2471
        %v2712 = vunpack.c.l.b16 %v2472
        %v2713 = vunpack.c.h.b16 %v2472
        %v2714 = vunpack.c.l.b16 %v2473
        %v2715 = vunpack.c.h.b16 %v2473
        %v2716 = vunpack.c.l.b16 %v2474
        %v2717 = vunpack.c.h.b16 %v2474
        %v2718 = vunpack.c.l.b16 %v2475
        %v2719 = vunpack.c.h.b16 %v2475
        %v2720 = vunpack.c.l.b16 %v2476
        %v2721 = vunpack.c.h.b16 %v2476
        %v2722 = vunpack.c.l.b16 %v2477
        %v2723 = vunpack.c.h.b16 %v2477
        %v2724 = vunpack.c.l.b16 %v2478
        %v2725 = vunpack.c.h.b16 %v2478
        %v2726 = vunpack.c.l.b16 %v2479
        %v2727 = vunpack.c.h.b16 %v2479
        %v2728 = vunpack.c.l.b16 %v2480
        %v2729 = vunpack.c.h.b16 %v2480
        %v2730 = vunpack.c.l.b16 %v2481
        %v2731 = vunpack.c.h.b16 %v2481
        %v2732 = vunpack.c.l.b16 %v2482
        %v2733 = vunpack.c.h.b16 %v2482
        %v2734 = vunpack.c.l.b16 %v2483
        %v2735 = vunpack.c.h.b16 %v2483
        %v2736 = vunpack.c.l.b16 %v2484
        %v2737 = vunpack.c.h.b16 %v2484
        %v2738 = vunpack.c.l.b16 %v2485
        %v2739 = vunpack.c.h.b16 %v2485
        %v2740 = vunpack.c.l.b16 %v2486
        %v2741 = vunpack.c.h.b16 %v2486
        %v2742 = vunpack.c.l.b16 %v2487
        %v2743 = vunpack.c.h.b16 %v2487
        %v2744 = vunpack.c.l.b16 %v2488
        %v2745 = vunpack.c.h.b16 %v2488
        %v2746 = vunpack.c.l.b16 %v2489
        %v2747 = vunpack.c.h.b16 %v2489
        %v2748 = vunpack.c.l.b16 %v2490
        %v2749 = vunpack.c.h.b16 %v2490
        %v2750 = vunpack.c.l.b16 %v2491
        %v2751 = vunpack.c.h.b16 %v2491
        %v2752 = vunpack.c.l.b16 %v2492
        %v2753 = vunpack.c.h.b16 %v2492
        %v2754 = vunpack.c.l.b16 %v2493
        %v2755 = vunpack.c.h.b16 %v2493
        %v2756 = vunpack.c.l.b16 %v2494
        %v2757 = vunpack.c.h.b16 %v2494
        %v2758 = vunpack.c.l.b16 %v2495
        %v2759 = vunpack.c.h.b16 %v2495
        %v2760 = vunpack.c.l.b16 %v2496
        %v2761 = vunpack.c.h.b16 %v2496
        %v2762 = vunpack.c.l.b16 %v2497
        %v2763 = vunpack.c.h.b16 %v2497
        %v2764 = vunpack.c.l.b16 %v2498
        %v2765 = vunpack.c.h.b16 %v2498
        %v2766 = vunpack.c.l.b16 %v2499
        %v2767 = vunpack.c.h.b16 %v2499
        %v2768 = vunpack.c.l.b16 %v2500
        %v2769 = vunpack.c.h.b16 %v2500
        %v2770 = vunpack.c.l.b16 %v2501
        %v2771 = vunpack.c.h.b16 %v2501
        %v2772 = vunpack.c.l.b16 %v2502
        %v2773 = vunpack.c.h.b16 %v2502
        %v2774 = vunpack.c.l.b16 %v2503
        %v2775 = vunpack.c.h.b16 %v2503
        %v2776 = vunpack.c.l.b16 %v2504
        %v2777 = vunpack.c.h.b16 %v2504
        %v2778 = vunpack.c.l.b16 %v2505
        %v2779 = vunpack.c.h.b16 %v2505
        %v2780 = vunpack.c.l.b16 %v2506
        %v2781 = vunpack.c.h.b16 %v2506
        %v2782 = vunpack.c.l.b16 %v2507
        %v2783 = vunpack.c.h.b16 %v2507
        %v2784 = vunpack.c.l.b16 %v2508
        %v2785 = vunpack.c.h.b16 %v2508
        %v2786 = vunpack.c.l.b16 %v2509
        %v2787 = vunpack.c.h.b16 %v2509
        %v2788 = vunpack.c.l.b16 %v2510
        %v2789 = vunpack.c.h.b16 %v2510
        %v2790 = vunpack.c.l.b16 %v2511
        %v2791 = vunpack.c.h.b16 %v2511
        %v2792 = vunpack.c.l.b16 %v2512
        %v2793 = vunpack.c.h.b16 %v2512
        %v2794 = vunpack.c.l.b16 %v2513
        %v2795 = vunpack.c.h.b16 %v2513
        %v2796 = vunpack.c.l.b16 %v2514
        %v2797 = vunpack.c.h.b16 %v2514
        %v2798 = vunpack.c.l.b16 %v2515
        %v2799 = vunpack.c.h.b16 %v2515
        %v2800 = vunpack.c.l.b16 %v2516
        %v2801 = vunpack.c.h.b16 %v2516
        %v2802 = vunpack.c.l.b16 %v2517
        %v2803 = vunpack.c.h.b16 %v2517
        %v2804 = vunpack.c.l.b16 %v2518
        %v2805 = vunpack.c.h.b16 %v2518
        %v2806 = vunpack.c.l.b16 %v2519
        %v2807 = vunpack.c.h.b16 %v2519
        %v2808 = vpack.c.b16 %v2634, %v2632
        %v2809 = vpack.c.b16 %v2635, %v2633
        %v2810 = vpack.c.b16 %v2638, %v2636
        %v2811 = vpack.c.b16 %v2639, %v2637
        %v2812 = vpack.c.b16 %v2642, %v2640
        %v2813 = vpack.c.b16 %v2643, %v2641
        %v2814 = vpack.c.b16 %v2646, %v2644
        %v2815 = vpack.c.b16 %v2647, %v2645
        %v2816 = vpack.c.b16 %v2650, %v2648
        %v2817 = vpack.c.b16 %v2651, %v2649
        %v2818 = vpack.c.b16 %v2654, %v2652
        %v2819 = vpack.c.b16 %v2655, %v2653
        %v2820 = vpack.c.b16 %v2658, %v2656
        %v2821 = vpack.c.b16 %v2659, %v2657
        %v2822 = vpack.c.b16 %v2662, %v2660
        %v2823 = vpack.c.b16 %v2663, %v2661
        %v2824 = vpack.c.b16 %v2666, %v2664
        %v2825 = vpack.c.b16 %v2667, %v2665
        %v2826 = vpack.c.b16 %v2670, %v2668
        %v2827 = vpack.c.b16 %v2671, %v2669
        %v2828 = vpack.c.b16 %v2674, %v2672
        %v2829 = vpack.c.b16 %v2675, %v2673
        %v2830 = vpack.c.b16 %v2678, %v2676
        %v2831 = vpack.c.b16 %v2679, %v2677
        %v2832 = vpack.c.b16 %v2682, %v2680
        %v2833 = vpack.c.b16 %v2683, %v2681
        %v2834 = vpack.c.b16 %v2686, %v2684
        %v2835 = vpack.c.b16 %v2687, %v2685
        %v2836 = vpack.c.b16 %v2690, %v2688
        %v2837 = vpack.c.b16 %v2691, %v2689
        %v2838 = vpack.c.b16 %v2694, %v2692
        %v2839 = vpack.c.b16 %v2695, %v2693
        %v2840 = vpack.c.b16 %v2698, %v2696
        %v2841 = vpack.c.b16 %v2699, %v2697
        %v2842 = vpack.c.b16 %v2702, %v2700
        %v2843 = vpack.c.b16 %v2703, %v2701
        %v2844 = vpack.c.b16 %v2706, %v2704
        %v2845 = vpack.c.b16 %v2707, %v2705
        %v2846 = vpack.c.b16 %v2710, %v2708
        %v2847 = vpack.c.b16 %v2711, %v2709
        %v2848 = vpack.c.b16 %v2714, %v2712
        %v2849 = vpack.c.b16 %v2715, %v2713
        %v2850 = vpack.c.b16 %v2718, %v2716
        %v2851 = vpack.c.b16 %v2719, %v2717
        %v2852 = vpack.c.b16 %v2722, %v2720
        %v2853 = vpack.c.b16 %v2723, %v2721
        %v2854 = vpack.c.b16 %v2726, %v2724
        %v2855 = vpack.c.b16 %v2727, %v2725
        %v2856 = vpack.c.b16 %v2730, %v2728
        %v2857 = vpack.c.b16 %v2731, %v2729
        %v2858 = vpack.c.b16 %v2734, %v2732
        %v2859 = vpack.c.b16 %v2735, %v2733
        %v2860 = vpack.c.b16 %v2738, %v2736
        %v2861 = vpack.c.b16 %v2739, %v2737
        %v2862 = vpack.c.b16 %v2742, %v2740
        %v2863 = vpack.c.b16 %v2743, %v2741
        %v2864 = vpack.c.b16 %v2746, %v2744
        %v2865 = vpack.c.b16 %v2747, %v2745
        %v2866 = vpack.c.b16 %v2750, %v2748
        %v2867 = vpack.c.b16 %v2751, %v2749
        %v2868 = vpack.c.b16 %v2754, %v2752
        %v2869 = vpack.c.b16 %v2755, %v2753
        %v2870 = vpack.c.b16 %v2758, %v2756
        %v2871 = vpack.c.b16 %v2759, %v2757
        %v2872 = vpack.c.b16 %v2762, %v2760
        %v2873 = vpack.c.b16 %v2763, %v2761
        %v2874 = vpack.c.b16 %v2766, %v2764
        %v2875 = vpack.c.b16 %v2767, %v2765
        %v2876 = vpack.c.b16 %v2770, %v2768
        %v2877 = vpack.c.b16 %v2771, %v2769
        %v2878 = vpack.c.b16 %v2774, %v2772
        %v2879 = vpack.c.b16 %v2775, %v2773
        %v2880 = vpack.c.b16 %v2778, %v2776
        %v2881 = vpack.c.b16 %v2779, %v2777
        %v2882 = vpack.c.b16 %v2782, %v2780
        %v2883 = vpack.c.b16 %v2783, %v2781
        %v2884 = vpack.c.b16 %v2786, %v2784
        %v2885 = vpack.c.b16 %v2787, %v2785
        %v2886 = vpack.c.b16 %v2790, %v2788
        %v2887 = vpack.c.b16 %v2791, %v2789
        %v2888 = vpack.c.b16 %v2794, %v2792
        %v2889 = vpack.c.b16 %v2795, %v2793
        %v2890 = vpack.c.b16 %v2798, %v2796
        %v2891 = vpack.c.b16 %v2799, %v2797
        %v2892 = vpack.c.b16 %v2802, %v2800
        %v2893 = vpack.c.b16 %v2803, %v2801
        %v2894 = vpack.c.b16 %v2806, %v2804
        %v2895 = vpack.c.b16 %v2807, %v2805
        %vm2984 = vcmask 523264
        %v2986 = vsel %vm2984, %v2425, 0
        %v2989 = vsel %vm2984, %v2431, 0
        %2991 = vmatpush.bf16.msra.mxu0 %v2822
        %2992 = vmatpush.bf16.msra.mxu0 %v2820
        %2993 = vmatpush.bf16.msra.mxu0 %v2818
        %2994 = vmatpush.bf16.msra.mxu0 %v2816
        %2995 = vmatpush.bf16.msra.mxu0 %v2814
        %2996 = vmatpush.bf16.msra.mxu0 %v2812
        %2997 = vmatpush.bf16.msra.mxu0 %v2810
        %2998 = vmatpush.bf16.msra.mxu0 %v2808
        %2999 = vmatmul.bf16.gmra.mxu0 %v2420
        %v3000 = vpop.f32.mrf.mxu0
        %v3001 = vadd.f32 %v2527, %v3000
        %v3002 = vpop.f32.mrf.mxu0
        %v3003 = vadd.f32 %v2532, %v3002
        %3004 = vmatmul.bf16.gmra.mxu0 %v2426
        %v3005 = vpop.f32.mrf.mxu0
        %v3006 = vadd.f32 %v2537, %v3005
        %v3007 = vpop.f32.mrf.mxu0
        %v3008 = vadd.f32 %v2542, %v3007
        %3009 = vdwg.mxu0
        %3010 = vmatpush.bf16.msra.mxu0 %v2838
        %3011 = vmatpush.bf16.msra.mxu0 %v2836
        %3012 = vmatpush.bf16.msra.mxu0 %v2834
        %3013 = vmatpush.bf16.msra.mxu0 %v2832
        %3014 = vmatpush.bf16.msra.mxu0 %v2830
        %3015 = vmatpush.bf16.msra.mxu0 %v2828
        %3016 = vmatpush.bf16.msra.mxu0 %v2826
        %3017 = vmatpush.bf16.msra.mxu0 %v2824
        %3018 = vmatmul.bf16.gmra.mxu0 %v2421
        %v3019 = vpop.f32.mrf.mxu0
        %v3020 = vadd.f32 %v3001, %v3019
        %v3021 = vpop.f32.mrf.mxu0
        %v3022 = vadd.f32 %v3003, %v3021
        %3023 = vmatmul.bf16.gmra.mxu0 %v2427
        %v3024 = vpop.f32.mrf.mxu0
        %v3025 = vadd.f32 %v3006, %v3024
        %v3026 = vpop.f32.mrf.mxu0
        %v3027 = vadd.f32 %v3008, %v3026
        %3028 = vdwg.mxu0
        %3029 = vmatpush.bf16.msra.mxu0 %v2854
        %3030 = vmatpush.bf16.msra.mxu0 %v2852
        %3031 = vmatpush.bf16.msra.mxu0 %v2850
        %3032 = vmatpush.bf16.msra.mxu0 %v2848
        %3033 = vmatpush.bf16.msra.mxu0 %v2846
        %3034 = vmatpush.bf16.msra.mxu0 %v2844
        %3035 = vmatpush.bf16.msra.mxu0 %v2842
        %3036 = vmatpush.bf16.msra.mxu0 %v2840
        %3037 = vmatmul.bf16.gmra.mxu0 %v2422
        %v3038 = vpop.f32.mrf.mxu0
        %v3039 = vadd.f32 %v3020, %v3038
        %v3040 = vpop.f32.mrf.mxu0
        %v3041 = vadd.f32 %v3022, %v3040
        %3042 = vmatmul.bf16.gmra.mxu0 %v2428
        %v3043 = vpop.f32.mrf.mxu0
        %v3044 = vadd.f32 %v3025, %v3043
        %v3045 = vpop.f32.mrf.mxu0
        %v3046 = vadd.f32 %v3027, %v3045
        %3047 = vdwg.mxu0
        %3048 = vmatpush.bf16.msra.mxu0 %v2870
        %3049 = vmatpush.bf16.msra.mxu0 %v2868
        %3050 = vmatpush.bf16.msra.mxu0 %v2866
        %3051 = vmatpush.bf16.msra.mxu0 %v2864
        %3052 = vmatpush.bf16.msra.mxu0 %v2862
        %3053 = vmatpush.bf16.msra.mxu0 %v2860
        %3054 = vmatpush.bf16.msra.mxu0 %v2858
        %3055 = vmatpush.bf16.msra.mxu0 %v2856
        %3056 = vmatmul.bf16.gmra.mxu0 %v2423
        %v3057 = vpop.f32.mrf.mxu0
        %v3058 = vadd.f32 %v3039, %v3057
        %v3059 = vpop.f32.mrf.mxu0
        %v3060 = vadd.f32 %v3041, %v3059
        %3061 = vmatmul.bf16.gmra.mxu0 %v2429
        %v3062 = vpop.f32.mrf.mxu0
        %v3063 = vadd.f32 %v3044, %v3062
        %v3064 = vpop.f32.mrf.mxu0
        %v3065 = vadd.f32 %v3046, %v3064
        %3066 = vdwg.mxu0
        %3067 = vmatpush.bf16.msra.mxu0 %v2886
        %3068 = vmatpush.bf16.msra.mxu0 %v2884
        %3069 = vmatpush.bf16.msra.mxu0 %v2882
        %3070 = vmatpush.bf16.msra.mxu0 %v2880
        %3071 = vmatpush.bf16.msra.mxu0 %v2878
        %3072 = vmatpush.bf16.msra.mxu0 %v2876
        %3073 = vmatpush.bf16.msra.mxu0 %v2874
        %3074 = vmatpush.bf16.msra.mxu0 %v2872
        %3075 = vmatmul.bf16.gmra.mxu0 %v2424
        %v3076 = vpop.f32.mrf.mxu0
        %v3077 = vadd.f32 %v3058, %v3076
        %v3078 = vpop.f32.mrf.mxu0
        %v3079 = vadd.f32 %v3060, %v3078
        %3080 = vmatmul.bf16.gmra.mxu0 %v2430
        %v3081 = vpop.f32.mrf.mxu0
        %v3082 = vadd.f32 %v3063, %v3081
        %v3083 = vpop.f32.mrf.mxu0
        %v3084 = vadd.f32 %v3065, %v3083
        %3085 = vdwg.mxu0
        %3086 = vmatpush.bf16.msra.mxu0 0
        %3087 = vmatpush.bf16.msra.mxu0 0
        %3088 = vmatpush.bf16.msra.mxu0 0
        %3089 = vmatpush.bf16.msra.mxu0 0
        %3090 = vmatpush.bf16.msra.mxu0 %v2894
        %3091 = vmatpush.bf16.msra.mxu0 %v2892
        %3092 = vmatpush.bf16.msra.mxu0 %v2890
        %3093 = vmatpush.bf16.msra.mxu0 %v2888
        %3094 = vmatmul.bf16.gmra.mxu0 %v2986
        %v3095 = vpop.f32.mrf.mxu0
        %v3096 = vadd.f32 %v3077, %v3095
        %v3097 = vpop.f32.mrf.mxu0
        %v3098 = vadd.f32 %v3079, %v3097
        %3099 = vmatmul.bf16.gmra.mxu0 %v2989
        %v3100 = vpop.f32.mrf.mxu0
        %v3101 = vadd.f32 %v3082, %v3100
        %v3102 = vpop.f32.mrf.mxu0
        %v3103 = vadd.f32 %v3084, %v3102
        %3104 = vdwg.mxu0
        %3105 = vmatpush.bf16.msra.mxu0 %v2823
        %3106 = vmatpush.bf16.msra.mxu0 %v2821
        %3107 = vmatpush.bf16.msra.mxu0 %v2819
        %3108 = vmatpush.bf16.msra.mxu0 %v2817
        %3109 = vmatpush.bf16.msra.mxu0 %v2815
        %3110 = vmatpush.bf16.msra.mxu0 %v2813
        %3111 = vmatpush.bf16.msra.mxu0 %v2811
        %3112 = vmatpush.bf16.msra.mxu0 %v2809
        %3113 = vmatmul.bf16.gmra.mxu0 %v2420
        %v3114 = vpop.f32.mrf.mxu0
        %v3115 = vadd.f32 %v2527, %v3114
        %v3116 = vpop.f32.mrf.mxu0
        %v3117 = vadd.f32 %v2532, %v3116
        %3118 = vmatmul.bf16.gmra.mxu0 %v2426
        %v3119 = vpop.f32.mrf.mxu0
        %v3120 = vadd.f32 %v2537, %v3119
        %v3121 = vpop.f32.mrf.mxu0
        %v3122 = vadd.f32 %v2542, %v3121
        %3123 = vdwg.mxu0
        %3124 = vmatpush.bf16.msra.mxu0 %v2839
        %3125 = vmatpush.bf16.msra.mxu0 %v2837
        %3126 = vmatpush.bf16.msra.mxu0 %v2835
        %3127 = vmatpush.bf16.msra.mxu0 %v2833
        %3128 = vmatpush.bf16.msra.mxu0 %v2831
        %3129 = vmatpush.bf16.msra.mxu0 %v2829
        %3130 = vmatpush.bf16.msra.mxu0 %v2827
        %3131 = vmatpush.bf16.msra.mxu0 %v2825
        %3132 = vmatmul.bf16.gmra.mxu0 %v2421
        %v3133 = vpop.f32.mrf.mxu0
        %v3134 = vadd.f32 %v3115, %v3133
        %v3135 = vpop.f32.mrf.mxu0
        %v3136 = vadd.f32 %v3117, %v3135
        %3137 = vmatmul.bf16.gmra.mxu0 %v2427
        %v3138 = vpop.f32.mrf.mxu0
        %v3139 = vadd.f32 %v3120, %v3138
        %v3140 = vpop.f32.mrf.mxu0
        %v3141 = vadd.f32 %v3122, %v3140
        %3142 = vdwg.mxu0
        %3143 = vmatpush.bf16.msra.mxu0 %v2855
        %3144 = vmatpush.bf16.msra.mxu0 %v2853
        %3145 = vmatpush.bf16.msra.mxu0 %v2851
        %3146 = vmatpush.bf16.msra.mxu0 %v2849
        %3147 = vmatpush.bf16.msra.mxu0 %v2847
        %3148 = vmatpush.bf16.msra.mxu0 %v2845
        %3149 = vmatpush.bf16.msra.mxu0 %v2843
        %3150 = vmatpush.bf16.msra.mxu0 %v2841
        %3151 = vmatmul.bf16.gmra.mxu0 %v2422
        %v3152 = vpop.f32.mrf.mxu0
        %v3153 = vadd.f32 %v3134, %v3152
        %v3154 = vpop.f32.mrf.mxu0
        %v3155 = vadd.f32 %v3136, %v3154
        %3156 = vmatmul.bf16.gmra.mxu0 %v2428
        %v3157 = vpop.f32.mrf.mxu0
        %v3158 = vadd.f32 %v3139, %v3157
        %v3159 = vpop.f32.mrf.mxu0
        %v3160 = vadd.f32 %v3141, %v3159
        %3161 = vdwg.mxu0
        %3162 = vmatpush.bf16.msra.mxu0 %v2871
        %3163 = vmatpush.bf16.msra.mxu0 %v2869
        %3164 = vmatpush.bf16.msra.mxu0 %v2867
        %3165 = vmatpush.bf16.msra.mxu0 %v2865
        %3166 = vmatpush.bf16.msra.mxu0 %v2863
        %3167 = vmatpush.bf16.msra.mxu0 %v2861
        %3168 = vmatpush.bf16.msra.mxu0 %v2859
        %3169 = vmatpush.bf16.msra.mxu0 %v2857
        %3170 = vmatmul.bf16.gmra.mxu0 %v2423
        %v3171 = vpop.f32.mrf.mxu0
        %v3172 = vadd.f32 %v3153, %v3171
        %v3173 = vpop.f32.mrf.mxu0
        %v3174 = vadd.f32 %v3155, %v3173
        %3175 = vmatmul.bf16.gmra.mxu0 %v2429
        %v3176 = vpop.f32.mrf.mxu0
        %v3177 = vadd.f32 %v3158, %v3176
        %v3178 = vpop.f32.mrf.mxu0
        %v3179 = vadd.f32 %v3160, %v3178
        %3180 = vdwg.mxu0
        %3181 = vmatpush.bf16.msra.mxu0 %v2887
        %3182 = vmatpush.bf16.msra.mxu0 %v2885
        %3183 = vmatpush.bf16.msra.mxu0 %v2883
        %3184 = vmatpush.bf16.msra.mxu0 %v2881
        %3185 = vmatpush.bf16.msra.mxu0 %v2879
        %3186 = vmatpush.bf16.msra.mxu0 %v2877
        %3187 = vmatpush.bf16.msra.mxu0 %v2875
        %3188 = vmatpush.bf16.msra.mxu0 %v2873
        %3189 = vmatmul.bf16.gmra.mxu0 %v2424
        %v3190 = vpop.f32.mrf.mxu0
        %v3191 = vadd.f32 %v3172, %v3190
        %v3192 = vpop.f32.mrf.mxu0
        %v3193 = vadd.f32 %v3174, %v3192
        %3194 = vmatmul.bf16.gmra.mxu0 %v2430
        %v3195 = vpop.f32.mrf.mxu0
        %v3196 = vadd.f32 %v3177, %v3195
        %v3197 = vpop.f32.mrf.mxu0
        %v3198 = vadd.f32 %v3179, %v3197
        %3199 = vdwg.mxu0
        %3200 = vmatpush.bf16.msra.mxu0 0
        %3201 = vmatpush.bf16.msra.mxu0 0
        %3202 = vmatpush.bf16.msra.mxu0 0
        %3203 = vmatpush.bf16.msra.mxu0 0
        %3204 = vmatpush.bf16.msra.mxu0 %v2895
        %3205 = vmatpush.bf16.msra.mxu0 %v2893
        %3206 = vmatpush.bf16.msra.mxu0 %v2891
        %3207 = vmatpush.bf16.msra.mxu0 %v2889
        %3208 = vmatmul.bf16.gmra.mxu0 %v2986
        %v3209 = vpop.f32.mrf.mxu0
        %v3210 = vadd.f32 %v3191, %v3209
        %v3211 = vpop.f32.mrf.mxu0
        %v3212 = vadd.f32 %v3193, %v3211
        %3213 = vmatmul.bf16.gmra.mxu0 %v2989
        %v3214 = vpop.f32.mrf.mxu0
        %v3215 = vadd.f32 %v3196, %v3214
        %v3216 = vpop.f32.mrf.mxu0
        %v3217 = vadd.f32 %v3198, %v3216
        %3218 = vdwg.mxu0
        %v3219 = vmax.f32 %v3096, 0.0
        %v3220 = vmax.f32 %v3210, 0.0
        %v3221 = vmax.f32 %v3098, 0.0
        %v3222 = vmax.f32 %v3212, 0.0
        %v3223 = vmax.f32 %v3101, 0.0
        %v3224 = vmax.f32 %v3215, 0.0
        %v3225 = vmax.f32 %v3103, 0.0
        %v3226 = vmax.f32 %v3217, 0.0
        %v3227 = vpack.c.bf16 %v3220, %v3219
        %v3228 = vpack.c.bf16 %v3222, %v3221
        %v3229 = vpack.c.bf16 %v3224, %v3223
        %v3230 = vpack.c.bf16 %v3226, %v3225
        %v3231 = vld [vmem:[%s3] sm:$0xf]
        %v3232 = vld [vmem:[%s3 + $0x4] sm:$0xf]
        %v3233 = vld [vmem:[%s3 + $0x8] sm:$0xf]
        %v3234 = vld [vmem:[%s3 + $0xc] sm:$0xf]
        %v3235 = vld [vmem:[%s3 + $0x10] sm:$0xf]
        %v3236 = vld [vmem:[%s3 + $0x14] sm:$0xf]
        %v3237 = vld [vmem:[%s3 + $0x18] sm:$0xf]
        %v3238 = vld [vmem:[%s3 + $0x1c] sm:$0xf]
        %s3239 = scalar_lea.vmem %s3, 32
        %v3240 = vld [vmem:[%s3239] sm:$0xf]
        %v3241 = vld [vmem:[%s3239 + $0x4] sm:$0xf]
        %v3242 = vld [vmem:[%s3239 + $0x8] sm:$0xf]
        %v3243 = vld [vmem:[%s3239 + $0xc] sm:$0xf]
        %v3244 = vld [vmem:[%s3239 + $0x10] sm:$0xf]
        %v3245 = vld [vmem:[%s3239 + $0x14] sm:$0xf]
        %v3246 = vld [vmem:[%s3239 + $0x18] sm:$0xf]
        %v3247 = vld [vmem:[%s3239 + $0x1c] sm:$0xf]
        %v3256 = vunpack.c.l.b16 %v3240
        %v3257 = vunpack.c.l.b16 %v3241
        %v3258 = vunpack.c.l.b16 %v3242
        %v3259 = vunpack.c.l.b16 %v3243
        %v3260 = vunpack.c.l.b16 %v3244
        %v3261 = vunpack.c.l.b16 %v3245
        %v3262 = vunpack.c.l.b16 %v3246
        %v3263 = vunpack.c.l.b16 %v3247
        %v3264 = vpack.c.b16 %v3257, %v3256
        %v3265 = vpack.c.b16 %v3259, %v3258
        %v3266 = vpack.c.b16 %v3261, %v3260
        %v3267 = vpack.c.b16 %v3263, %v3262
        %v3272 = vunpack.c.l.b16 %v3227
        %v3273 = vunpack.c.h.b16 %v3227
        %v3274 = vunpack.c.l.b16 %v3228
        %v3275 = vunpack.c.h.b16 %v3228
        %v3276 = vunpack.c.l.b16 %v3229
        %v3277 = vunpack.c.h.b16 %v3229
        %v3278 = vunpack.c.l.b16 %v3230
        %v3279 = vunpack.c.h.b16 %v3230
        %v3280 = vpack.c.b16 %v3274, %v3272
        %v3281 = vpack.c.b16 %v3275, %v3273
        %v3282 = vpack.c.b16 %v3278, %v3276
        %v3283 = vpack.c.b16 %v3279, %v3277
        %3284 = vrot.lane.b32.xlu0 %v3280, 127
        %v3285 = vpop.permute.xlu0 %3284
        %3286 = vrot.lane.b32.xlu0 %v3281, 127
        %v3287 = vpop.permute.xlu0 %3286
        %3288 = vrot.lane.b32.xlu0 %v3282, 127
        %v3289 = vpop.permute.xlu0 %3288
        %3290 = vrot.lane.b32.xlu0 %v3283, 127
        %v3291 = vpop.permute.xlu0 %3290
        %vm3292 = vcmask 1039360
        %v3293 = vsel %vm3292, %v3285, %v3287
        %v3294 = vsel %vm3292, %v3289, %v3291
        %vm3299 = vcmask 261120
        %v3301 = vsel %vm3299, %v3264, 0
        %v3304 = vsel %vm3299, %v3265, 0
        %v3307 = vsel %vm3299, %v3266, 0
        %v3310 = vsel %vm3299, %v3267, 0
        %3312 = vmatpush.bf16.msra.mxu0 0
        %3313 = vmatpush.bf16.msra.mxu0 0
        %3314 = vmatpush.bf16.msra.mxu0 0
        %3315 = vmatpush.bf16.msra.mxu0 0
        %3316 = vmatpush.bf16.msra.mxu0 0
        %3317 = vmatpush.bf16.msra.mxu0 0
        %3318 = vmatpush.bf16.msra.mxu0 %v3294
        %3319 = vmatpush.bf16.msra.mxu0 %v3293
        %3320 = vmatmul.bf16.gmra.mxu0 %v3301
        %v3321 = vpop.f32.mrf.mxu0
        %v3322 = vadd.f32 0.0, %v3321
        %v3323 = vpop.f32.mrf.mxu0
        %v3324 = vadd.f32 0.0, %v3323
        %3325 = vmatmul.bf16.gmra.mxu0 %v3304
        %v3326 = vpop.f32.mrf.mxu0
        %v3327 = vadd.f32 0.0, %v3326
        %v3328 = vpop.f32.mrf.mxu0
        %v3329 = vadd.f32 0.0, %v3328
        %3330 = vmatmul.bf16.gmra.mxu0 %v3307
        %v3331 = vpop.f32.mrf.mxu0
        %v3332 = vadd.f32 0.0, %v3331
        %v3333 = vpop.f32.mrf.mxu0
        %v3334 = vadd.f32 0.0, %v3333
        %3335 = vmatmul.bf16.gmra.mxu0 %v3310
        %v3336 = vpop.f32.mrf.mxu0
        %v3337 = vadd.f32 0.0, %v3336
        %v3338 = vpop.f32.mrf.mxu0
        %v3339 = vadd.f32 0.0, %v3338
        %3340 = vdwg.mxu0
        %3341 = vmatpush.bf16.msra.mxu0 0
        %3342 = vmatpush.bf16.msra.mxu0 0
        %3343 = vmatpush.bf16.msra.mxu0 0
        %3344 = vmatpush.bf16.msra.mxu0 0
        %3345 = vmatpush.bf16.msra.mxu0 0
        %3346 = vmatpush.bf16.msra.mxu0 0
        %3347 = vmatpush.bf16.msra.mxu0 %v3291
        %3348 = vmatpush.bf16.msra.mxu0 %v3287
        %3349 = vmatmul.bf16.gmra.mxu0 %v3301
        %v3350 = vpop.f32.mrf.mxu0
        %v3351 = vadd.f32 0.0, %v3350
        %v3352 = vpop.f32.mrf.mxu0
        %v3353 = vadd.f32 0.0, %v3352
        %3354 = vmatmul.bf16.gmra.mxu0 %v3304
        %v3355 = vpop.f32.mrf.mxu0
        %v3356 = vadd.f32 0.0, %v3355
        %v3357 = vpop.f32.mrf.mxu0
        %v3358 = vadd.f32 0.0, %v3357
        %3359 = vmatmul.bf16.gmra.mxu0 %v3307
        %v3360 = vpop.f32.mrf.mxu0
        %v3361 = vadd.f32 0.0, %v3360
        %v3362 = vpop.f32.mrf.mxu0
        %v3363 = vadd.f32 0.0, %v3362
        %3364 = vmatmul.bf16.gmra.mxu0 %v3310
        %v3365 = vpop.f32.mrf.mxu0
        %v3366 = vadd.f32 0.0, %v3365
        %v3367 = vpop.f32.mrf.mxu0
        %v3368 = vadd.f32 0.0, %v3367
        %3369 = vdwg.mxu0
        %v3378 = vunpack.c.l.b16 %v3231
        %v3379 = vunpack.c.l.b16 %v3232
        %v3380 = vunpack.c.l.b16 %v3233
        %v3381 = vunpack.c.l.b16 %v3234
        %v3382 = vunpack.c.l.b16 %v3235
        %v3383 = vunpack.c.l.b16 %v3236
        %v3384 = vunpack.c.l.b16 %v3237
        %v3385 = vunpack.c.l.b16 %v3238
        %v3386 = vpack.c.b16 %v3379, %v3378
        %v3387 = vpack.c.b16 %v3381, %v3380
        %v3388 = vpack.c.b16 %v3383, %v3382
        %v3389 = vpack.c.b16 %v3385, %v3384
        %v3395 = vsel %vm3299, %v3386, 0
        %v3398 = vsel %vm3299, %v3387, 0
        %v3401 = vsel %vm3299, %v3388, 0
        %v3404 = vsel %vm3299, %v3389, 0
        %3406 = vmatpush.bf16.msra.mxu0 0
        %3407 = vmatpush.bf16.msra.mxu0 0
        %3408 = vmatpush.bf16.msra.mxu0 0
        %3409 = vmatpush.bf16.msra.mxu0 0
        %3410 = vmatpush.bf16.msra.mxu0 0
        %3411 = vmatpush.bf16.msra.mxu0 0
        %3412 = vmatpush.bf16.msra.mxu0 %v3282
        %3413 = vmatpush.bf16.msra.mxu0 %v3280
        %3414 = vmatmul.bf16.gmra.mxu0 %v3395
        %v3415 = vpop.f32.mrf.mxu0
        %v3416 = vadd.f32 %v3322, %v3415
        %v3417 = vpop.f32.mrf.mxu0
        %v3418 = vadd.f32 %v3324, %v3417
        %3419 = vmatmul.bf16.gmra.mxu0 %v3398
        %v3420 = vpop.f32.mrf.mxu0
        %v3421 = vadd.f32 %v3327, %v3420
        %v3422 = vpop.f32.mrf.mxu0
        %v3423 = vadd.f32 %v3329, %v3422
        %3424 = vmatmul.bf16.gmra.mxu0 %v3401
        %v3425 = vpop.f32.mrf.mxu0
        %v3426 = vadd.f32 %v3332, %v3425
        %v3427 = vpop.f32.mrf.mxu0
        %v3428 = vadd.f32 %v3334, %v3427
        %3429 = vmatmul.bf16.gmra.mxu0 %v3404
        %v3430 = vpop.f32.mrf.mxu0
        %v3431 = vadd.f32 %v3337, %v3430
        %v3432 = vpop.f32.mrf.mxu0
        %v3433 = vadd.f32 %v3339, %v3432
        %3434 = vdwg.mxu0
        %3435 = vmatpush.bf16.msra.mxu0 0
        %3436 = vmatpush.bf16.msra.mxu0 0
        %3437 = vmatpush.bf16.msra.mxu0 0
        %3438 = vmatpush.bf16.msra.mxu0 0
        %3439 = vmatpush.bf16.msra.mxu0 0
        %3440 = vmatpush.bf16.msra.mxu0 0
        %3441 = vmatpush.bf16.msra.mxu0 %v3283
        %3442 = vmatpush.bf16.msra.mxu0 %v3281
        %3443 = vmatmul.bf16.gmra.mxu0 %v3395
        %v3444 = vpop.f32.mrf.mxu0
        %v3445 = vadd.f32 %v3351, %v3444
        %v3446 = vpop.f32.mrf.mxu0
        %v3447 = vadd.f32 %v3353, %v3446
        %3448 = vmatmul.bf16.gmra.mxu0 %v3398
        %v3449 = vpop.f32.mrf.mxu0
        %v3450 = vadd.f32 %v3356, %v3449
        %v3451 = vpop.f32.mrf.mxu0
        %v3452 = vadd.f32 %v3358, %v3451
        %3453 = vmatmul.bf16.gmra.mxu0 %v3401
        %v3454 = vpop.f32.mrf.mxu0
        %v3455 = vadd.f32 %v3361, %v3454
        %v3456 = vpop.f32.mrf.mxu0
        %v3457 = vadd.f32 %v3363, %v3456
        %3458 = vmatmul.bf16.gmra.mxu0 %v3404
        %v3459 = vpop.f32.mrf.mxu0
        %v3460 = vadd.f32 %v3366, %v3459
        %v3461 = vpop.f32.mrf.mxu0
        %v3462 = vadd.f32 %v3368, %v3461
        %3463 = vdwg.mxu0
        %s3464 = scalar_lea.vmem %s3, 64
        %v3465 = vld [vmem:[%s3464] sm:$0xf]
        %v3466 = vld [vmem:[%s3464 + $0x4] sm:$0xf]
        %v3467 = vld [vmem:[%s3464 + $0x8] sm:$0xf]
        %v3468 = vld [vmem:[%s3464 + $0xc] sm:$0xf]
        %v3469 = vld [vmem:[%s3464 + $0x10] sm:$0xf]
        %v3470 = vld [vmem:[%s3464 + $0x14] sm:$0xf]
        %v3471 = vld [vmem:[%s3464 + $0x18] sm:$0xf]
        %v3472 = vld [vmem:[%s3464 + $0x1c] sm:$0xf]
        %v3481 = vunpack.c.l.b16 %v3465
        %v3482 = vunpack.c.l.b16 %v3466
        %v3483 = vunpack.c.l.b16 %v3467
        %v3484 = vunpack.c.l.b16 %v3468
        %v3485 = vunpack.c.l.b16 %v3469
        %v3486 = vunpack.c.l.b16 %v3470
        %v3487 = vunpack.c.l.b16 %v3471
        %v3488 = vunpack.c.l.b16 %v3472
        %v3489 = vpack.c.b16 %v3482, %v3481
        %v3490 = vpack.c.b16 %v3484, %v3483
        %v3491 = vpack.c.b16 %v3486, %v3485
        %v3492 = vpack.c.b16 %v3488, %v3487
        %3493 = vrot.lane.b32.xlu0 %v3280, 126
        %v3494 = vpop.permute.xlu0 %3493
        %3495 = vrot.lane.b32.xlu0 %v3281, 126
        %v3496 = vpop.permute.xlu0 %3495
        %3497 = vrot.lane.b32.xlu0 %v3282, 126
        %v3498 = vpop.permute.xlu0 %3497
        %3499 = vrot.lane.b32.xlu0 %v3283, 126
        %v3500 = vpop.permute.xlu0 %3499
        %vm3501 = vcmask 1031168
        %v3502 = vsel %vm3501, %v3494, %v3496
        %v3503 = vsel %vm3501, %v3498, %v3500
        %v3509 = vsel %vm3299, %v3489, 0
        %v3512 = vsel %vm3299, %v3490, 0
        %v3515 = vsel %vm3299, %v3491, 0
        %v3518 = vsel %vm3299, %v3492, 0
        %3520 = vmatpush.bf16.msra.mxu0 0
        %3521 = vmatpush.bf16.msra.mxu0 0
        %3522 = vmatpush.bf16.msra.mxu0 0
        %3523 = vmatpush.bf16.msra.mxu0 0
        %3524 = vmatpush.bf16.msra.mxu0 0
        %3525 = vmatpush.bf16.msra.mxu0 0
        %3526 = vmatpush.bf16.msra.mxu0 %v3503
        %3527 = vmatpush.bf16.msra.mxu0 %v3502
        %3528 = vmatmul.bf16.gmra.mxu0 %v3509
        %v3529 = vpop.f32.mrf.mxu0
        %v3530 = vadd.f32 0.0, %v3529
        %v3531 = vpop.f32.mrf.mxu0
        %v3532 = vadd.f32 0.0, %v3531
        %3533 = vmatmul.bf16.gmra.mxu0 %v3512
        %v3534 = vpop.f32.mrf.mxu0
        %v3535 = vadd.f32 0.0, %v3534
        %v3536 = vpop.f32.mrf.mxu0
        %v3537 = vadd.f32 0.0, %v3536
        %3538 = vmatmul.bf16.gmra.mxu0 %v3515
        %v3539 = vpop.f32.mrf.mxu0
        %v3540 = vadd.f32 0.0, %v3539
        %v3541 = vpop.f32.mrf.mxu0
        %v3542 = vadd.f32 0.0, %v3541
        %3543 = vmatmul.bf16.gmra.mxu0 %v3518
        %v3544 = vpop.f32.mrf.mxu0
        %v3545 = vadd.f32 0.0, %v3544
        %v3546 = vpop.f32.mrf.mxu0
        %v3547 = vadd.f32 0.0, %v3546
        %3548 = vdwg.mxu0
        %3549 = vmatpush.bf16.msra.mxu0 0
        %3550 = vmatpush.bf16.msra.mxu0 0
        %3551 = vmatpush.bf16.msra.mxu0 0
        %3552 = vmatpush.bf16.msra.mxu0 0
        %3553 = vmatpush.bf16.msra.mxu0 0
        %3554 = vmatpush.bf16.msra.mxu0 0
        %3555 = vmatpush.bf16.msra.mxu0 %v3500
        %3556 = vmatpush.bf16.msra.mxu0 %v3496
        %3557 = vmatmul.bf16.gmra.mxu0 %v3509
        %v3558 = vpop.f32.mrf.mxu0
        %v3559 = vadd.f32 0.0, %v3558
        %v3560 = vpop.f32.mrf.mxu0
        %v3561 = vadd.f32 0.0, %v3560
        %3562 = vmatmul.bf16.gmra.mxu0 %v3512
        %v3563 = vpop.f32.mrf.mxu0
        %v3564 = vadd.f32 0.0, %v3563
        %v3565 = vpop.f32.mrf.mxu0
        %v3566 = vadd.f32 0.0, %v3565
        %3567 = vmatmul.bf16.gmra.mxu0 %v3515
        %v3568 = vpop.f32.mrf.mxu0
        %v3569 = vadd.f32 0.0, %v3568
        %v3570 = vpop.f32.mrf.mxu0
        %v3571 = vadd.f32 0.0, %v3570
        %3572 = vmatmul.bf16.gmra.mxu0 %v3518
        %v3573 = vpop.f32.mrf.mxu0
        %v3574 = vadd.f32 0.0, %v3573
        %v3575 = vpop.f32.mrf.mxu0
        %v3576 = vadd.f32 0.0, %v3575
        %3577 = vdwg.mxu0
        %v3578 = vadd.f32 %v3416, %v3530
        %v3579 = vadd.f32 %v3445, %v3559
        %v3580 = vadd.f32 %v3418, %v3532
        %v3581 = vadd.f32 %v3447, %v3561
        %v3582 = vadd.f32 %v3421, %v3535
        %v3583 = vadd.f32 %v3450, %v3564
        %v3584 = vadd.f32 %v3423, %v3537
        %v3585 = vadd.f32 %v3452, %v3566
        %v3586 = vadd.f32 %v3426, %v3540
        %v3587 = vadd.f32 %v3455, %v3569
        %v3588 = vadd.f32 %v3428, %v3542
        %v3589 = vadd.f32 %v3457, %v3571
        %v3590 = vadd.f32 %v3431, %v3545
        %v3591 = vadd.f32 %v3460, %v3574
        %v3592 = vadd.f32 %v3433, %v3547
        %v3593 = vadd.f32 %v3462, %v3576
        %s3594 = scalar_lea.vmem %s3, 96
        %v3595 = vld [vmem:[%s3594] sm:$0xf]
        %v3596 = vld [vmem:[%s3594 + $0x4] sm:$0xf]
        %v3597 = vld [vmem:[%s3594 + $0x8] sm:$0xf]
        %v3598 = vld [vmem:[%s3594 + $0xc] sm:$0xf]
        %v3599 = vld [vmem:[%s3594 + $0x10] sm:$0xf]
        %v3600 = vld [vmem:[%s3594 + $0x14] sm:$0xf]
        %v3601 = vld [vmem:[%s3594 + $0x18] sm:$0xf]
        %v3602 = vld [vmem:[%s3594 + $0x1c] sm:$0xf]
        %v3611 = vunpack.c.l.b16 %v3595
        %v3612 = vunpack.c.l.b16 %v3596
        %v3613 = vunpack.c.l.b16 %v3597
        %v3614 = vunpack.c.l.b16 %v3598
        %v3615 = vunpack.c.l.b16 %v3599
        %v3616 = vunpack.c.l.b16 %v3600
        %v3617 = vunpack.c.l.b16 %v3601
        %v3618 = vunpack.c.l.b16 %v3602
        %v3619 = vpack.c.b16 %v3612, %v3611
        %v3620 = vpack.c.b16 %v3614, %v3613
        %v3621 = vpack.c.b16 %v3616, %v3615
        %v3622 = vpack.c.b16 %v3618, %v3617
        %3623 = vrot.lane.b32.xlu0 %v3280, 115
        %v3624 = vpop.permute.xlu0 %3623
        %3625 = vrot.lane.b32.xlu0 %v3281, 115
        %v3626 = vpop.permute.xlu0 %3625
        %3627 = vrot.lane.b32.xlu0 %v3282, 115
        %v3628 = vpop.permute.xlu0 %3627
        %3629 = vrot.lane.b32.xlu0 %v3283, 115
        %v3630 = vpop.permute.xlu0 %3629
        %vm3631 = vcmask 941056
        %v3632 = vsel %vm3631, %v3624, %v3626
        %v3633 = vsel %vm3631, %v3628, %v3630
        %v3639 = vsel %vm3299, %v3619, 0
        %v3642 = vsel %vm3299, %v3620, 0
        %v3645 = vsel %vm3299, %v3621, 0
        %v3648 = vsel %vm3299, %v3622, 0
        %3650 = vmatpush.bf16.msra.mxu0 0
        %3651 = vmatpush.bf16.msra.mxu0 0
        %3652 = vmatpush.bf16.msra.mxu0 0
        %3653 = vmatpush.bf16.msra.mxu0 0
        %3654 = vmatpush.bf16.msra.mxu0 0
        %3655 = vmatpush.bf16.msra.mxu0 0
        %3656 = vmatpush.bf16.msra.mxu0 %v3633
        %3657 = vmatpush.bf16.msra.mxu0 %v3632
        %3658 = vmatmul.bf16.gmra.mxu0 %v3639
        %v3659 = vpop.f32.mrf.mxu0
        %v3660 = vadd.f32 0.0, %v3659
        %v3661 = vpop.f32.mrf.mxu0
        %v3662 = vadd.f32 0.0, %v3661
        %3663 = vmatmul.bf16.gmra.mxu0 %v3642
        %v3664 = vpop.f32.mrf.mxu0
        %v3665 = vadd.f32 0.0, %v3664
        %v3666 = vpop.f32.mrf.mxu0
        %v3667 = vadd.f32 0.0, %v3666
        %3668 = vmatmul.bf16.gmra.mxu0 %v3645
        %v3669 = vpop.f32.mrf.mxu0
        %v3670 = vadd.f32 0.0, %v3669
        %v3671 = vpop.f32.mrf.mxu0
        %v3672 = vadd.f32 0.0, %v3671
        %3673 = vmatmul.bf16.gmra.mxu0 %v3648
        %v3674 = vpop.f32.mrf.mxu0
        %v3675 = vadd.f32 0.0, %v3674
        %v3676 = vpop.f32.mrf.mxu0
        %v3677 = vadd.f32 0.0, %v3676
        %3678 = vdwg.mxu0
        %3679 = vmatpush.bf16.msra.mxu0 0
        %3680 = vmatpush.bf16.msra.mxu0 0
        %3681 = vmatpush.bf16.msra.mxu0 0
        %3682 = vmatpush.bf16.msra.mxu0 0
        %3683 = vmatpush.bf16.msra.mxu0 0
        %3684 = vmatpush.bf16.msra.mxu0 0
        %3685 = vmatpush.bf16.msra.mxu0 %v3630
        %3686 = vmatpush.bf16.msra.mxu0 %v3626
        %3687 = vmatmul.bf16.gmra.mxu0 %v3639
        %v3688 = vpop.f32.mrf.mxu0
        %v3689 = vadd.f32 0.0, %v3688
        %v3690 = vpop.f32.mrf.mxu0
        %v3691 = vadd.f32 0.0, %v3690
        %3692 = vmatmul.bf16.gmra.mxu0 %v3642
        %v3693 = vpop.f32.mrf.mxu0
        %v3694 = vadd.f32 0.0, %v3693
        %v3695 = vpop.f32.mrf.mxu0
        %v3696 = vadd.f32 0.0, %v3695
        %3697 = vmatmul.bf16.gmra.mxu0 %v3645
        %v3698 = vpop.f32.mrf.mxu0
        %v3699 = vadd.f32 0.0, %v3698
        %v3700 = vpop.f32.mrf.mxu0
        %v3701 = vadd.f32 0.0, %v3700
        %3702 = vmatmul.bf16.gmra.mxu0 %v3648
        %v3703 = vpop.f32.mrf.mxu0
        %v3704 = vadd.f32 0.0, %v3703
        %v3705 = vpop.f32.mrf.mxu0
        %v3706 = vadd.f32 0.0, %v3705
        %3707 = vdwg.mxu0
        %v3708 = vadd.f32 %v3578, %v3660
        %v3709 = vadd.f32 %v3579, %v3689
        %v3710 = vadd.f32 %v3580, %v3662
        %v3711 = vadd.f32 %v3581, %v3691
        %v3712 = vadd.f32 %v3582, %v3665
        %v3713 = vadd.f32 %v3583, %v3694
        %v3714 = vadd.f32 %v3584, %v3667
        %v3715 = vadd.f32 %v3585, %v3696
        %v3716 = vadd.f32 %v3586, %v3670
        %v3717 = vadd.f32 %v3587, %v3699
        %v3718 = vadd.f32 %v3588, %v3672
        %v3719 = vadd.f32 %v3589, %v3701
        %v3720 = vadd.f32 %v3590, %v3675
        %v3721 = vadd.f32 %v3591, %v3704
        %v3722 = vadd.f32 %v3592, %v3677
        %v3723 = vadd.f32 %v3593, %v3706
        %s3724 = scalar_lea.vmem %s3, 128
        %v3725 = vld [vmem:[%s3724] sm:$0xf]
        %v3726 = vld [vmem:[%s3724 + $0x4] sm:$0xf]
        %v3727 = vld [vmem:[%s3724 + $0x8] sm:$0xf]
        %v3728 = vld [vmem:[%s3724 + $0xc] sm:$0xf]
        %v3729 = vld [vmem:[%s3724 + $0x10] sm:$0xf]
        %v3730 = vld [vmem:[%s3724 + $0x14] sm:$0xf]
        %v3731 = vld [vmem:[%s3724 + $0x18] sm:$0xf]
        %v3732 = vld [vmem:[%s3724 + $0x1c] sm:$0xf]
        %v3741 = vunpack.c.l.b16 %v3725
        %v3742 = vunpack.c.l.b16 %v3726
        %v3743 = vunpack.c.l.b16 %v3727
        %v3744 = vunpack.c.l.b16 %v3728
        %v3745 = vunpack.c.l.b16 %v3729
        %v3746 = vunpack.c.l.b16 %v3730
        %v3747 = vunpack.c.l.b16 %v3731
        %v3748 = vunpack.c.l.b16 %v3732
        %v3749 = vpack.c.b16 %v3742, %v3741
        %v3750 = vpack.c.b16 %v3744, %v3743
        %v3751 = vpack.c.b16 %v3746, %v3745
        %v3752 = vpack.c.b16 %v3748, %v3747
        %3753 = vrot.lane.b32.xlu0 %v3280, 114
        %v3754 = vpop.permute.xlu0 %3753
        %3755 = vrot.lane.b32.xlu0 %v3281, 114
        %v3756 = vpop.permute.xlu0 %3755
        %3757 = vrot.lane.b32.xlu0 %v3282, 114
        %v3758 = vpop.permute.xlu0 %3757
        %3759 = vrot.lane.b32.xlu0 %v3283, 114
        %v3760 = vpop.permute.xlu0 %3759
        %vm3761 = vcmask 932864
        %v3762 = vsel %vm3761, %v3754, %v3756
        %v3763 = vsel %vm3761, %v3758, %v3760
        %v3769 = vsel %vm3299, %v3749, 0
        %v3772 = vsel %vm3299, %v3750, 0
        %v3775 = vsel %vm3299, %v3751, 0
        %v3778 = vsel %vm3299, %v3752, 0
        %3780 = vmatpush.bf16.msra.mxu0 0
        %3781 = vmatpush.bf16.msra.mxu0 0
        %3782 = vmatpush.bf16.msra.mxu0 0
        %3783 = vmatpush.bf16.msra.mxu0 0
        %3784 = vmatpush.bf16.msra.mxu0 0
        %3785 = vmatpush.bf16.msra.mxu0 0
        %3786 = vmatpush.bf16.msra.mxu0 %v3763
        %3787 = vmatpush.bf16.msra.mxu0 %v3762
        %3788 = vmatmul.bf16.gmra.mxu0 %v3769
        %v3789 = vpop.f32.mrf.mxu0
        %v3790 = vadd.f32 0.0, %v3789
        %v3791 = vpop.f32.mrf.mxu0
        %v3792 = vadd.f32 0.0, %v3791
        %3793 = vmatmul.bf16.gmra.mxu0 %v3772
        %v3794 = vpop.f32.mrf.mxu0
        %v3795 = vadd.f32 0.0, %v3794
        %v3796 = vpop.f32.mrf.mxu0
        %v3797 = vadd.f32 0.0, %v3796
        %3798 = vmatmul.bf16.gmra.mxu0 %v3775
        %v3799 = vpop.f32.mrf.mxu0
        %v3800 = vadd.f32 0.0, %v3799
        %v3801 = vpop.f32.mrf.mxu0
        %v3802 = vadd.f32 0.0, %v3801
        %3803 = vmatmul.bf16.gmra.mxu0 %v3778
        %v3804 = vpop.f32.mrf.mxu0
        %v3805 = vadd.f32 0.0, %v3804
        %v3806 = vpop.f32.mrf.mxu0
        %v3807 = vadd.f32 0.0, %v3806
        %3808 = vdwg.mxu0
        %3809 = vmatpush.bf16.msra.mxu0 0
        %3810 = vmatpush.bf16.msra.mxu0 0
        %3811 = vmatpush.bf16.msra.mxu0 0
        %3812 = vmatpush.bf16.msra.mxu0 0
        %3813 = vmatpush.bf16.msra.mxu0 0
        %3814 = vmatpush.bf16.msra.mxu0 0
        %3815 = vmatpush.bf16.msra.mxu0 %v3760
        %3816 = vmatpush.bf16.msra.mxu0 %v3756
        %3817 = vmatmul.bf16.gmra.mxu0 %v3769
        %v3818 = vpop.f32.mrf.mxu0
        %v3819 = vadd.f32 0.0, %v3818
        %v3820 = vpop.f32.mrf.mxu0
        %v3821 = vadd.f32 0.0, %v3820
        %3822 = vmatmul.bf16.gmra.mxu0 %v3772
        %v3823 = vpop.f32.mrf.mxu0
        %v3824 = vadd.f32 0.0, %v3823
        %v3825 = vpop.f32.mrf.mxu0
        %v3826 = vadd.f32 0.0, %v3825
        %3827 = vmatmul.bf16.gmra.mxu0 %v3775
        %v3828 = vpop.f32.mrf.mxu0
        %v3829 = vadd.f32 0.0, %v3828
        %v3830 = vpop.f32.mrf.mxu0
        %v3831 = vadd.f32 0.0, %v3830
        %3832 = vmatmul.bf16.gmra.mxu0 %v3778
        %v3833 = vpop.f32.mrf.mxu0
        %v3834 = vadd.f32 0.0, %v3833
        %v3835 = vpop.f32.mrf.mxu0
        %v3836 = vadd.f32 0.0, %v3835
        %3837 = vdwg.mxu0
        %v3838 = vadd.f32 %v3708, %v3790
        %v3839 = vadd.f32 %v3709, %v3819
        %v3840 = vadd.f32 %v3710, %v3792
        %v3841 = vadd.f32 %v3711, %v3821
        %v3842 = vadd.f32 %v3712, %v3795
        %v3843 = vadd.f32 %v3713, %v3824
        %v3844 = vadd.f32 %v3714, %v3797
        %v3845 = vadd.f32 %v3715, %v3826
        %v3846 = vadd.f32 %v3716, %v3800
        %v3847 = vadd.f32 %v3717, %v3829
        %v3848 = vadd.f32 %v3718, %v3802
        %v3849 = vadd.f32 %v3719, %v3831
        %v3850 = vadd.f32 %v3720, %v3805
        %v3851 = vadd.f32 %v3721, %v3834
        %v3852 = vadd.f32 %v3722, %v3807
        %v3853 = vadd.f32 %v3723, %v3836
        %s3854 = scalar_lea.vmem %s3, 160
        %v3855 = vld [vmem:[%s3854] sm:$0xf]
        %v3856 = vld [vmem:[%s3854 + $0x4] sm:$0xf]
        %v3857 = vld [vmem:[%s3854 + $0x8] sm:$0xf]
        %v3858 = vld [vmem:[%s3854 + $0xc] sm:$0xf]
        %v3859 = vld [vmem:[%s3854 + $0x10] sm:$0xf]
        %v3860 = vld [vmem:[%s3854 + $0x14] sm:$0xf]
        %v3861 = vld [vmem:[%s3854 + $0x18] sm:$0xf]
        %v3862 = vld [vmem:[%s3854 + $0x1c] sm:$0xf]
        %v3871 = vunpack.c.l.b16 %v3855
        %v3872 = vunpack.c.l.b16 %v3856
        %v3873 = vunpack.c.l.b16 %v3857
        %v3874 = vunpack.c.l.b16 %v3858
        %v3875 = vunpack.c.l.b16 %v3859
        %v3876 = vunpack.c.l.b16 %v3860
        %v3877 = vunpack.c.l.b16 %v3861
        %v3878 = vunpack.c.l.b16 %v3862
        %v3879 = vpack.c.b16 %v3872, %v3871
        %v3880 = vpack.c.b16 %v3874, %v3873
        %v3881 = vpack.c.b16 %v3876, %v3875
        %v3882 = vpack.c.b16 %v3878, %v3877
        %3883 = vrot.lane.b32.xlu0 %v3280, 113
        %v3884 = vpop.permute.xlu0 %3883
        %3885 = vrot.lane.b32.xlu0 %v3281, 113
        %v3886 = vpop.permute.xlu0 %3885
        %3887 = vrot.lane.b32.xlu0 %v3282, 113
        %v3888 = vpop.permute.xlu0 %3887
        %3889 = vrot.lane.b32.xlu0 %v3283, 113
        %v3890 = vpop.permute.xlu0 %3889
        %vm3891 = vcmask 924672
        %v3892 = vsel %vm3891, %v3884, %v3886
        %v3893 = vsel %vm3891, %v3888, %v3890
        %v3899 = vsel %vm3299, %v3879, 0
        %v3902 = vsel %vm3299, %v3880, 0
        %v3905 = vsel %vm3299, %v3881, 0
        %v3908 = vsel %vm3299, %v3882, 0
        %3910 = vmatpush.bf16.msra.mxu0 0
        %3911 = vmatpush.bf16.msra.mxu0 0
        %3912 = vmatpush.bf16.msra.mxu0 0
        %3913 = vmatpush.bf16.msra.mxu0 0
        %3914 = vmatpush.bf16.msra.mxu0 0
        %3915 = vmatpush.bf16.msra.mxu0 0
        %3916 = vmatpush.bf16.msra.mxu0 %v3893
        %3917 = vmatpush.bf16.msra.mxu0 %v3892
        %3918 = vmatmul.bf16.gmra.mxu0 %v3899
        %v3919 = vpop.f32.mrf.mxu0
        %v3920 = vadd.f32 0.0, %v3919
        %v3921 = vpop.f32.mrf.mxu0
        %v3922 = vadd.f32 0.0, %v3921
        %3923 = vmatmul.bf16.gmra.mxu0 %v3902
        %v3924 = vpop.f32.mrf.mxu0
        %v3925 = vadd.f32 0.0, %v3924
        %v3926 = vpop.f32.mrf.mxu0
        %v3927 = vadd.f32 0.0, %v3926
        %3928 = vmatmul.bf16.gmra.mxu0 %v3905
        %v3929 = vpop.f32.mrf.mxu0
        %v3930 = vadd.f32 0.0, %v3929
        %v3931 = vpop.f32.mrf.mxu0
        %v3932 = vadd.f32 0.0, %v3931
        %3933 = vmatmul.bf16.gmra.mxu0 %v3908
        %v3934 = vpop.f32.mrf.mxu0
        %v3935 = vadd.f32 0.0, %v3934
        %v3936 = vpop.f32.mrf.mxu0
        %v3937 = vadd.f32 0.0, %v3936
        %3938 = vdwg.mxu0
        %3939 = vmatpush.bf16.msra.mxu0 0
        %3940 = vmatpush.bf16.msra.mxu0 0
        %3941 = vmatpush.bf16.msra.mxu0 0
        %3942 = vmatpush.bf16.msra.mxu0 0
        %3943 = vmatpush.bf16.msra.mxu0 0
        %3944 = vmatpush.bf16.msra.mxu0 0
        %3945 = vmatpush.bf16.msra.mxu0 %v3890
        %3946 = vmatpush.bf16.msra.mxu0 %v3886
        %3947 = vmatmul.bf16.gmra.mxu0 %v3899
        %v3948 = vpop.f32.mrf.mxu0
        %v3949 = vadd.f32 0.0, %v3948
        %v3950 = vpop.f32.mrf.mxu0
        %v3951 = vadd.f32 0.0, %v3950
        %3952 = vmatmul.bf16.gmra.mxu0 %v3902
        %v3953 = vpop.f32.mrf.mxu0
        %v3954 = vadd.f32 0.0, %v3953
        %v3955 = vpop.f32.mrf.mxu0
        %v3956 = vadd.f32 0.0, %v3955
        %3957 = vmatmul.bf16.gmra.mxu0 %v3905
        %v3958 = vpop.f32.mrf.mxu0
        %v3959 = vadd.f32 0.0, %v3958
        %v3960 = vpop.f32.mrf.mxu0
        %v3961 = vadd.f32 0.0, %v3960
        %3962 = vmatmul.bf16.gmra.mxu0 %v3908
        %v3963 = vpop.f32.mrf.mxu0
        %v3964 = vadd.f32 0.0, %v3963
        %v3965 = vpop.f32.mrf.mxu0
        %v3966 = vadd.f32 0.0, %v3965
        %3967 = vdwg.mxu0
        %v3968 = vadd.f32 %v3838, %v3920
        %v3969 = vadd.f32 %v3839, %v3949
        %v3970 = vadd.f32 %v3840, %v3922
        %v3971 = vadd.f32 %v3841, %v3951
        %v3972 = vadd.f32 %v3842, %v3925
        %v3973 = vadd.f32 %v3843, %v3954
        %v3974 = vadd.f32 %v3844, %v3927
        %v3975 = vadd.f32 %v3845, %v3956
        %v3976 = vadd.f32 %v3846, %v3930
        %v3977 = vadd.f32 %v3847, %v3959
        %v3978 = vadd.f32 %v3848, %v3932
        %v3979 = vadd.f32 %v3849, %v3961
        %v3980 = vadd.f32 %v3850, %v3935
        %v3981 = vadd.f32 %v3851, %v3964
        %v3982 = vadd.f32 %v3852, %v3937
        %v3983 = vadd.f32 %v3853, %v3966
        %s3984 = scalar_lea.vmem %s3, 192
        %v3985 = vld [vmem:[%s3984] sm:$0xf]
        %v3986 = vld [vmem:[%s3984 + $0x4] sm:$0xf]
        %v3987 = vld [vmem:[%s3984 + $0x8] sm:$0xf]
        %v3988 = vld [vmem:[%s3984 + $0xc] sm:$0xf]
        %v3989 = vld [vmem:[%s3984 + $0x10] sm:$0xf]
        %v3990 = vld [vmem:[%s3984 + $0x14] sm:$0xf]
        %v3991 = vld [vmem:[%s3984 + $0x18] sm:$0xf]
        %v3992 = vld [vmem:[%s3984 + $0x1c] sm:$0xf]
        %v4001 = vunpack.c.l.b16 %v3985
        %v4002 = vunpack.c.l.b16 %v3986
        %v4003 = vunpack.c.l.b16 %v3987
        %v4004 = vunpack.c.l.b16 %v3988
        %v4005 = vunpack.c.l.b16 %v3989
        %v4006 = vunpack.c.l.b16 %v3990
        %v4007 = vunpack.c.l.b16 %v3991
        %v4008 = vunpack.c.l.b16 %v3992
        %v4009 = vpack.c.b16 %v4002, %v4001
        %v4010 = vpack.c.b16 %v4004, %v4003
        %v4011 = vpack.c.b16 %v4006, %v4005
        %v4012 = vpack.c.b16 %v4008, %v4007
        %4013 = vrot.lane.b32.xlu0 %v3280, 102
        %v4014 = vpop.permute.xlu0 %4013
        %4015 = vrot.lane.b32.xlu0 %v3281, 102
        %v4016 = vpop.permute.xlu0 %4015
        %4017 = vrot.lane.b32.xlu0 %v3282, 102
        %v4018 = vpop.permute.xlu0 %4017
        %4019 = vrot.lane.b32.xlu0 %v3283, 102
        %v4020 = vpop.permute.xlu0 %4019
        %vm4021 = vcmask 834560
        %v4022 = vsel %vm4021, %v4014, %v4016
        %v4023 = vsel %vm4021, %v4018, %v4020
        %v4029 = vsel %vm3299, %v4009, 0
        %v4032 = vsel %vm3299, %v4010, 0
        %v4035 = vsel %vm3299, %v4011, 0
        %v4038 = vsel %vm3299, %v4012, 0
        %4040 = vmatpush.bf16.msra.mxu0 0
        %4041 = vmatpush.bf16.msra.mxu0 0
        %4042 = vmatpush.bf16.msra.mxu0 0
        %4043 = vmatpush.bf16.msra.mxu0 0
        %4044 = vmatpush.bf16.msra.mxu0 0
        %4045 = vmatpush.bf16.msra.mxu0 0
        %4046 = vmatpush.bf16.msra.mxu0 %v4023
        %4047 = vmatpush.bf16.msra.mxu0 %v4022
        %4048 = vmatmul.bf16.gmra.mxu0 %v4029
        %v4049 = vpop.f32.mrf.mxu0
        %v4050 = vadd.f32 0.0, %v4049
        %v4051 = vpop.f32.mrf.mxu0
        %v4052 = vadd.f32 0.0, %v4051
        %4053 = vmatmul.bf16.gmra.mxu0 %v4032
        %v4054 = vpop.f32.mrf.mxu0
        %v4055 = vadd.f32 0.0, %v4054
        %v4056 = vpop.f32.mrf.mxu0
        %v4057 = vadd.f32 0.0, %v4056
        %4058 = vmatmul.bf16.gmra.mxu0 %v4035
        %v4059 = vpop.f32.mrf.mxu0
        %v4060 = vadd.f32 0.0, %v4059
        %v4061 = vpop.f32.mrf.mxu0
        %v4062 = vadd.f32 0.0, %v4061
        %4063 = vmatmul.bf16.gmra.mxu0 %v4038
        %v4064 = vpop.f32.mrf.mxu0
        %v4065 = vadd.f32 0.0, %v4064
        %v4066 = vpop.f32.mrf.mxu0
        %v4067 = vadd.f32 0.0, %v4066
        %4068 = vdwg.mxu0
        %4069 = vmatpush.bf16.msra.mxu0 0
        %4070 = vmatpush.bf16.msra.mxu0 0
        %4071 = vmatpush.bf16.msra.mxu0 0
        %4072 = vmatpush.bf16.msra.mxu0 0
        %4073 = vmatpush.bf16.msra.mxu0 0
        %4074 = vmatpush.bf16.msra.mxu0 0
        %4075 = vmatpush.bf16.msra.mxu0 %v4020
        %4076 = vmatpush.bf16.msra.mxu0 %v4016
        %4077 = vmatmul.bf16.gmra.mxu0 %v4029
        %v4078 = vpop.f32.mrf.mxu0
        %v4079 = vadd.f32 0.0, %v4078
        %v4080 = vpop.f32.mrf.mxu0
        %v4081 = vadd.f32 0.0, %v4080
        %4082 = vmatmul.bf16.gmra.mxu0 %v4032
        %v4083 = vpop.f32.mrf.mxu0
        %v4084 = vadd.f32 0.0, %v4083
        %v4085 = vpop.f32.mrf.mxu0
        %v4086 = vadd.f32 0.0, %v4085
        %4087 = vmatmul.bf16.gmra.mxu0 %v4035
        %v4088 = vpop.f32.mrf.mxu0
        %v4089 = vadd.f32 0.0, %v4088
        %v4090 = vpop.f32.mrf.mxu0
        %v4091 = vadd.f32 0.0, %v4090
        %4092 = vmatmul.bf16.gmra.mxu0 %v4038
        %v4093 = vpop.f32.mrf.mxu0
        %v4094 = vadd.f32 0.0, %v4093
        %v4095 = vpop.f32.mrf.mxu0
        %v4096 = vadd.f32 0.0, %v4095
        %4097 = vdwg.mxu0
        %v4098 = vadd.f32 %v3968, %v4050
        %v4099 = vadd.f32 %v3969, %v4079
        %v4100 = vadd.f32 %v3970, %v4052
        %v4101 = vadd.f32 %v3971, %v4081
        %v4102 = vadd.f32 %v3972, %v4055
        %v4103 = vadd.f32 %v3973, %v4084
        %v4104 = vadd.f32 %v3974, %v4057
        %v4105 = vadd.f32 %v3975, %v4086
        %v4106 = vadd.f32 %v3976, %v4060
        %v4107 = vadd.f32 %v3977, %v4089
        %v4108 = vadd.f32 %v3978, %v4062
        %v4109 = vadd.f32 %v3979, %v4091
        %v4110 = vadd.f32 %v3980, %v4065
        %v4111 = vadd.f32 %v3981, %v4094
        %v4112 = vadd.f32 %v3982, %v4067
        %v4113 = vadd.f32 %v3983, %v4096
        %s4114 = scalar_lea.vmem %s3, 224
        %v4115 = vld [vmem:[%s4114] sm:$0xf]
        %v4116 = vld [vmem:[%s4114 + $0x4] sm:$0xf]
        %v4117 = vld [vmem:[%s4114 + $0x8] sm:$0xf]
        %v4118 = vld [vmem:[%s4114 + $0xc] sm:$0xf]
        %v4119 = vld [vmem:[%s4114 + $0x10] sm:$0xf]
        %v4120 = vld [vmem:[%s4114 + $0x14] sm:$0xf]
        %v4121 = vld [vmem:[%s4114 + $0x18] sm:$0xf]
        %v4122 = vld [vmem:[%s4114 + $0x1c] sm:$0xf]
        %v4131 = vunpack.c.l.b16 %v4115
        %v4132 = vunpack.c.l.b16 %v4116
        %v4133 = vunpack.c.l.b16 %v4117
        %v4134 = vunpack.c.l.b16 %v4118
        %v4135 = vunpack.c.l.b16 %v4119
        %v4136 = vunpack.c.l.b16 %v4120
        %v4137 = vunpack.c.l.b16 %v4121
        %v4138 = vunpack.c.l.b16 %v4122
        %v4139 = vpack.c.b16 %v4132, %v4131
        %v4140 = vpack.c.b16 %v4134, %v4133
        %v4141 = vpack.c.b16 %v4136, %v4135
        %v4142 = vpack.c.b16 %v4138, %v4137
        %4143 = vrot.lane.b32.xlu0 %v3280, 101
        %v4144 = vpop.permute.xlu0 %4143
        %4145 = vrot.lane.b32.xlu0 %v3281, 101
        %v4146 = vpop.permute.xlu0 %4145
        %4147 = vrot.lane.b32.xlu0 %v3282, 101
        %v4148 = vpop.permute.xlu0 %4147
        %4149 = vrot.lane.b32.xlu0 %v3283, 101
        %v4150 = vpop.permute.xlu0 %4149
        %vm4151 = vcmask 826368
        %v4152 = vsel %vm4151, %v4144, %v4146
        %v4153 = vsel %vm4151, %v4148, %v4150
        %v4159 = vsel %vm3299, %v4139, 0
        %v4162 = vsel %vm3299, %v4140, 0
        %v4165 = vsel %vm3299, %v4141, 0
        %v4168 = vsel %vm3299, %v4142, 0
        %4170 = vmatpush.bf16.msra.mxu0 0
        %4171 = vmatpush.bf16.msra.mxu0 0
        %4172 = vmatpush.bf16.msra.mxu0 0
        %4173 = vmatpush.bf16.msra.mxu0 0
        %4174 = vmatpush.bf16.msra.mxu0 0
        %4175 = vmatpush.bf16.msra.mxu0 0
        %4176 = vmatpush.bf16.msra.mxu0 %v4153
        %4177 = vmatpush.bf16.msra.mxu0 %v4152
        %4178 = vmatmul.bf16.gmra.mxu0 %v4159
        %v4179 = vpop.f32.mrf.mxu0
        %v4180 = vadd.f32 0.0, %v4179
        %v4181 = vpop.f32.mrf.mxu0
        %v4182 = vadd.f32 0.0, %v4181
        %4183 = vmatmul.bf16.gmra.mxu0 %v4162
        %v4184 = vpop.f32.mrf.mxu0
        %v4185 = vadd.f32 0.0, %v4184
        %v4186 = vpop.f32.mrf.mxu0
        %v4187 = vadd.f32 0.0, %v4186
        %4188 = vmatmul.bf16.gmra.mxu0 %v4165
        %v4189 = vpop.f32.mrf.mxu0
        %v4190 = vadd.f32 0.0, %v4189
        %v4191 = vpop.f32.mrf.mxu0
        %v4192 = vadd.f32 0.0, %v4191
        %4193 = vmatmul.bf16.gmra.mxu0 %v4168
        %v4194 = vpop.f32.mrf.mxu0
        %v4195 = vadd.f32 0.0, %v4194
        %v4196 = vpop.f32.mrf.mxu0
        %v4197 = vadd.f32 0.0, %v4196
        %4198 = vdwg.mxu0
        %4199 = vmatpush.bf16.msra.mxu0 0
        %4200 = vmatpush.bf16.msra.mxu0 0
        %4201 = vmatpush.bf16.msra.mxu0 0
        %4202 = vmatpush.bf16.msra.mxu0 0
        %4203 = vmatpush.bf16.msra.mxu0 0
        %4204 = vmatpush.bf16.msra.mxu0 0
        %4205 = vmatpush.bf16.msra.mxu0 %v4150
        %4206 = vmatpush.bf16.msra.mxu0 %v4146
        %4207 = vmatmul.bf16.gmra.mxu0 %v4159
        %v4208 = vpop.f32.mrf.mxu0
        %v4209 = vadd.f32 0.0, %v4208
        %v4210 = vpop.f32.mrf.mxu0
        %v4211 = vadd.f32 0.0, %v4210
        %4212 = vmatmul.bf16.gmra.mxu0 %v4162
        %v4213 = vpop.f32.mrf.mxu0
        %v4214 = vadd.f32 0.0, %v4213
        %v4215 = vpop.f32.mrf.mxu0
        %v4216 = vadd.f32 0.0, %v4215
        %4217 = vmatmul.bf16.gmra.mxu0 %v4165
        %v4218 = vpop.f32.mrf.mxu0
        %v4219 = vadd.f32 0.0, %v4218
        %v4220 = vpop.f32.mrf.mxu0
        %v4221 = vadd.f32 0.0, %v4220
        %4222 = vmatmul.bf16.gmra.mxu0 %v4168
        %v4223 = vpop.f32.mrf.mxu0
        %v4224 = vadd.f32 0.0, %v4223
        %v4225 = vpop.f32.mrf.mxu0
        %v4226 = vadd.f32 0.0, %v4225
        %4227 = vdwg.mxu0
        %v4228 = vadd.f32 %v4098, %v4180
        %v4229 = vadd.f32 %v4099, %v4209
        %v4230 = vadd.f32 %v4100, %v4182
        %v4231 = vadd.f32 %v4101, %v4211
        %v4232 = vadd.f32 %v4102, %v4185
        %v4233 = vadd.f32 %v4103, %v4214
        %v4234 = vadd.f32 %v4104, %v4187
        %v4235 = vadd.f32 %v4105, %v4216
        %v4236 = vadd.f32 %v4106, %v4190
        %v4237 = vadd.f32 %v4107, %v4219
        %v4238 = vadd.f32 %v4108, %v4192
        %v4239 = vadd.f32 %v4109, %v4221
        %v4240 = vadd.f32 %v4110, %v4195
        %v4241 = vadd.f32 %v4111, %v4224
        %v4242 = vadd.f32 %v4112, %v4197
        %v4243 = vadd.f32 %v4113, %v4226
        %s4244 = scalar_lea.vmem %s3, 256
        %v4245 = vld [vmem:[%s4244] sm:$0xf]
        %v4246 = vld [vmem:[%s4244 + $0x4] sm:$0xf]
        %v4247 = vld [vmem:[%s4244 + $0x8] sm:$0xf]
        %v4248 = vld [vmem:[%s4244 + $0xc] sm:$0xf]
        %v4249 = vld [vmem:[%s4244 + $0x10] sm:$0xf]
        %v4250 = vld [vmem:[%s4244 + $0x14] sm:$0xf]
        %v4251 = vld [vmem:[%s4244 + $0x18] sm:$0xf]
        %v4252 = vld [vmem:[%s4244 + $0x1c] sm:$0xf]
        %v4261 = vunpack.c.l.b16 %v4245
        %v4262 = vunpack.c.l.b16 %v4246
        %v4263 = vunpack.c.l.b16 %v4247
        %v4264 = vunpack.c.l.b16 %v4248
        %v4265 = vunpack.c.l.b16 %v4249
        %v4266 = vunpack.c.l.b16 %v4250
        %v4267 = vunpack.c.l.b16 %v4251
        %v4268 = vunpack.c.l.b16 %v4252
        %v4269 = vpack.c.b16 %v4262, %v4261
        %v4270 = vpack.c.b16 %v4264, %v4263
        %v4271 = vpack.c.b16 %v4266, %v4265
        %v4272 = vpack.c.b16 %v4268, %v4267
        %4273 = vrot.lane.b32.xlu0 %v3280, 100
        %v4274 = vpop.permute.xlu0 %4273
        %4275 = vrot.lane.b32.xlu0 %v3281, 100
        %v4276 = vpop.permute.xlu0 %4275
        %4277 = vrot.lane.b32.xlu0 %v3282, 100
        %v4278 = vpop.permute.xlu0 %4277
        %4279 = vrot.lane.b32.xlu0 %v3283, 100
        %v4280 = vpop.permute.xlu0 %4279
        %vm4281 = vcmask 818176
        %v4282 = vsel %vm4281, %v4274, %v4276
        %v4283 = vsel %vm4281, %v4278, %v4280
        %v4289 = vsel %vm3299, %v4269, 0
        %v4292 = vsel %vm3299, %v4270, 0
        %v4295 = vsel %vm3299, %v4271, 0
        %v4298 = vsel %vm3299, %v4272, 0
        %4300 = vmatpush.bf16.msra.mxu0 0
        %4301 = vmatpush.bf16.msra.mxu0 0
        %4302 = vmatpush.bf16.msra.mxu0 0
        %4303 = vmatpush.bf16.msra.mxu0 0
        %4304 = vmatpush.bf16.msra.mxu0 0
        %4305 = vmatpush.bf16.msra.mxu0 0
        %4306 = vmatpush.bf16.msra.mxu0 %v4283
        %4307 = vmatpush.bf16.msra.mxu0 %v4282
        %4308 = vmatmul.bf16.gmra.mxu0 %v4289
        %v4309 = vpop.f32.mrf.mxu0
        %v4310 = vadd.f32 0.0, %v4309
        %v4311 = vpop.f32.mrf.mxu0
        %v4312 = vadd.f32 0.0, %v4311
        %4313 = vmatmul.bf16.gmra.mxu0 %v4292
        %v4314 = vpop.f32.mrf.mxu0
        %v4315 = vadd.f32 0.0, %v4314
        %v4316 = vpop.f32.mrf.mxu0
        %v4317 = vadd.f32 0.0, %v4316
        %4318 = vmatmul.bf16.gmra.mxu0 %v4295
        %v4319 = vpop.f32.mrf.mxu0
        %v4320 = vadd.f32 0.0, %v4319
        %v4321 = vpop.f32.mrf.mxu0
        %v4322 = vadd.f32 0.0, %v4321
        %4323 = vmatmul.bf16.gmra.mxu0 %v4298
        %v4324 = vpop.f32.mrf.mxu0
        %v4325 = vadd.f32 0.0, %v4324
        %v4326 = vpop.f32.mrf.mxu0
        %v4327 = vadd.f32 0.0, %v4326
        %4328 = vdwg.mxu0
        %4329 = vmatpush.bf16.msra.mxu0 0
        %4330 = vmatpush.bf16.msra.mxu0 0
        %4331 = vmatpush.bf16.msra.mxu0 0
        %4332 = vmatpush.bf16.msra.mxu0 0
        %4333 = vmatpush.bf16.msra.mxu0 0
        %4334 = vmatpush.bf16.msra.mxu0 0
        %4335 = vmatpush.bf16.msra.mxu0 %v4280
        %4336 = vmatpush.bf16.msra.mxu0 %v4276
        %4337 = vmatmul.bf16.gmra.mxu0 %v4289
        %v4338 = vpop.f32.mrf.mxu0
        %v4339 = vadd.f32 0.0, %v4338
        %v4340 = vpop.f32.mrf.mxu0
        %v4341 = vadd.f32 0.0, %v4340
        %4342 = vmatmul.bf16.gmra.mxu0 %v4292
        %v4343 = vpop.f32.mrf.mxu0
        %v4344 = vadd.f32 0.0, %v4343
        %v4345 = vpop.f32.mrf.mxu0
        %v4346 = vadd.f32 0.0, %v4345
        %4347 = vmatmul.bf16.gmra.mxu0 %v4295
        %v4348 = vpop.f32.mrf.mxu0
        %v4349 = vadd.f32 0.0, %v4348
        %v4350 = vpop.f32.mrf.mxu0
        %v4351 = vadd.f32 0.0, %v4350
        %4352 = vmatmul.bf16.gmra.mxu0 %v4298
        %v4353 = vpop.f32.mrf.mxu0
        %v4354 = vadd.f32 0.0, %v4353
        %v4355 = vpop.f32.mrf.mxu0
        %v4356 = vadd.f32 0.0, %v4355
        %4357 = vdwg.mxu0
        %v4358 = vadd.f32 %v4228, %v4310
        %v4359 = vadd.f32 %v4229, %v4339
        %v4360 = vadd.f32 %v4230, %v4312
        %v4361 = vadd.f32 %v4231, %v4341
        %v4362 = vadd.f32 %v4232, %v4315
        %v4363 = vadd.f32 %v4233, %v4344
        %v4364 = vadd.f32 %v4234, %v4317
        %v4365 = vadd.f32 %v4235, %v4346
        %v4366 = vadd.f32 %v4236, %v4320
        %v4367 = vadd.f32 %v4237, %v4349
        %v4368 = vadd.f32 %v4238, %v4322
        %v4369 = vadd.f32 %v4239, %v4351
        %v4370 = vadd.f32 %v4240, %v4325
        %v4371 = vadd.f32 %v4241, %v4354
        %v4372 = vadd.f32 %v4242, %v4327
        %v4373 = vadd.f32 %v4243, %v4356
        %4390 = vrot.lane.b32.xlu0 %v4358, 127
        %v4391 = vpop.permute.xlu0 %4390
        %4392 = vrot.lane.b32.xlu0 %v4359, 127
        %v4393 = vpop.permute.xlu0 %4392
        %4394 = vrot.lane.b32.xlu0 %v4360, 127
        %v4395 = vpop.permute.xlu0 %4394
        %4396 = vrot.lane.b32.xlu0 %v4361, 127
        %v4397 = vpop.permute.xlu0 %4396
        %4398 = vrot.lane.b32.xlu0 %v4362, 127
        %v4399 = vpop.permute.xlu0 %4398
        %4400 = vrot.lane.b32.xlu0 %v4363, 127
        %v4401 = vpop.permute.xlu0 %4400
        %4402 = vrot.lane.b32.xlu0 %v4364, 127
        %v4403 = vpop.permute.xlu0 %4402
        %4404 = vrot.lane.b32.xlu0 %v4365, 127
        %v4405 = vpop.permute.xlu0 %4404
        %4406 = vrot.lane.b32.xlu0 %v4366, 127
        %v4407 = vpop.permute.xlu0 %4406
        %4408 = vrot.lane.b32.xlu0 %v4367, 127
        %v4409 = vpop.permute.xlu0 %4408
        %4410 = vrot.lane.b32.xlu0 %v4368, 127
        %v4411 = vpop.permute.xlu0 %4410
        %4412 = vrot.lane.b32.xlu0 %v4369, 127
        %v4413 = vpop.permute.xlu0 %4412
        %4414 = vrot.lane.b32.xlu0 %v4370, 127
        %v4415 = vpop.permute.xlu0 %4414
        %4416 = vrot.lane.b32.xlu0 %v4371, 127
        %v4417 = vpop.permute.xlu0 %4416
        %4418 = vrot.lane.b32.xlu0 %v4372, 127
        %v4419 = vpop.permute.xlu0 %4418
        %4420 = vrot.lane.b32.xlu0 %v4373, 127
        %v4421 = vpop.permute.xlu0 %4420
        %v4422 = vsel %vm597, %v4391, %v4393
        %v4423 = vsel %vm597, %v4395, %v4397
        %v4424 = vsel %vm597, %v4399, %v4401
        %v4425 = vsel %vm597, %v4403, %v4405
        %v4426 = vsel %vm597, %v4407, %v4409
        %v4427 = vsel %vm597, %v4411, %v4413
        %v4428 = vsel %vm597, %v4415, %v4417
        %v4429 = vsel %vm597, %v4419, %v4421
        %v4438 = vmax.f32 %v4358, %v4422
        %v4439 = vmax.f32 %v4360, %v4423
        %v4440 = vmax.f32 %v4362, %v4424
        %v4441 = vmax.f32 %v4364, %v4425
        %v4442 = vmax.f32 %v4366, %v4426
        %v4443 = vmax.f32 %v4368, %v4427
        %v4444 = vmax.f32 %v4370, %v4428
        %v4445 = vmax.f32 %v4372, %v4429
        %v4454 = vmax.f32 %v4359, %v4393
        %v4455 = vmax.f32 %v4361, %v4397
        %v4456 = vmax.f32 %v4363, %v4401
        %v4457 = vmax.f32 %v4365, %v4405
        %v4458 = vmax.f32 %v4367, %v4409
        %v4459 = vmax.f32 %v4369, %v4413
        %v4460 = vmax.f32 %v4371, %v4417
        %v4461 = vmax.f32 %v4373, %v4421
        %4478 = vrot.lane.b32.xlu0 %v4438, 115
        %v4479 = vpop.permute.xlu0 %4478
        %4480 = vrot.lane.b32.xlu0 %v4454, 115
        %v4481 = vpop.permute.xlu0 %4480
        %4482 = vrot.lane.b32.xlu0 %v4439, 115
        %v4483 = vpop.permute.xlu0 %4482
        %4484 = vrot.lane.b32.xlu0 %v4455, 115
        %v4485 = vpop.permute.xlu0 %4484
        %4486 = vrot.lane.b32.xlu0 %v4440, 115
        %v4487 = vpop.permute.xlu0 %4486
        %4488 = vrot.lane.b32.xlu0 %v4456, 115
        %v4489 = vpop.permute.xlu0 %4488
        %4490 = vrot.lane.b32.xlu0 %v4441, 115
        %v4491 = vpop.permute.xlu0 %4490
        %4492 = vrot.lane.b32.xlu0 %v4457, 115
        %v4493 = vpop.permute.xlu0 %4492
        %4494 = vrot.lane.b32.xlu0 %v4442, 115
        %v4495 = vpop.permute.xlu0 %4494
        %4496 = vrot.lane.b32.xlu0 %v4458, 115
        %v4497 = vpop.permute.xlu0 %4496
        %4498 = vrot.lane.b32.xlu0 %v4443, 115
        %v4499 = vpop.permute.xlu0 %4498
        %4500 = vrot.lane.b32.xlu0 %v4459, 115
        %v4501 = vpop.permute.xlu0 %4500
        %4502 = vrot.lane.b32.xlu0 %v4444, 115
        %v4503 = vpop.permute.xlu0 %4502
        %4504 = vrot.lane.b32.xlu0 %v4460, 115
        %v4505 = vpop.permute.xlu0 %4504
        %4506 = vrot.lane.b32.xlu0 %v4445, 115
        %v4507 = vpop.permute.xlu0 %4506
        %4508 = vrot.lane.b32.xlu0 %v4461, 115
        %v4509 = vpop.permute.xlu0 %4508
        %vm4510 = vcmask 941056
        %v4511 = vsel %vm4510, %v4479, %v4481
        %v4512 = vsel %vm4510, %v4483, %v4485
        %v4513 = vsel %vm4510, %v4487, %v4489
        %v4514 = vsel %vm4510, %v4491, %v4493
        %v4515 = vsel %vm4510, %v4495, %v4497
        %v4516 = vsel %vm4510, %v4499, %v4501
        %v4517 = vsel %vm4510, %v4503, %v4505
        %v4518 = vsel %vm4510, %v4507, %v4509
        %v4527 = vmax.f32 %v4438, %v4511
        %v4528 = vmax.f32 %v4439, %v4512
        %v4529 = vmax.f32 %v4440, %v4513
        %v4530 = vmax.f32 %v4441, %v4514
        %v4531 = vmax.f32 %v4442, %v4515
        %v4532 = vmax.f32 %v4443, %v4516
        %v4533 = vmax.f32 %v4444, %v4517
        %v4534 = vmax.f32 %v4445, %v4518
        %v4535 = vld [vmem:[%s4] sm:$0xff]
        %v4536 = vld [vmem:[%s4 + $0x8] sm:$0xff]
        %v4537 = vld [vmem:[%s4 + $0x10] sm:$0xff]
        %v4538 = vld [vmem:[%s4 + $0x18] sm:$0xff]
        %v4539 = vld [vmem:[%s4 + $0x20] sm:$0xff]
        %v4540 = vld [vmem:[%s4 + $0x28] sm:$0xff]
        %v4541 = vld [vmem:[%s4 + $0x30] sm:$0xff]
        %v4542 = vld [vmem:[%s4 + $0x38] sm:$0xff]
        %4544 = vset.pattern.permute.xlu0 0
        %4545 = vperm.xlu0 %4544, %v4535
        %v4546 = vpop.permute.xlu0 %4545
        %4549 = vset.pattern.permute.xlu0 0
        %4550 = vperm.xlu0 %4549, %v4536
        %v4551 = vpop.permute.xlu0 %4550
        %4554 = vset.pattern.permute.xlu0 0
        %4555 = vperm.xlu0 %4554, %v4537
        %v4556 = vpop.permute.xlu0 %4555
        %4559 = vset.pattern.permute.xlu0 0
        %4560 = vperm.xlu0 %4559, %v4538
        %v4561 = vpop.permute.xlu0 %4560
        %4564 = vset.pattern.permute.xlu0 0
        %4565 = vperm.xlu0 %4564, %v4539
        %v4566 = vpop.permute.xlu0 %4565
        %4569 = vset.pattern.permute.xlu0 0
        %4570 = vperm.xlu0 %4569, %v4540
        %v4571 = vpop.permute.xlu0 %4570
        %4574 = vset.pattern.permute.xlu0 0
        %4575 = vperm.xlu0 %4574, %v4541
        %v4576 = vpop.permute.xlu0 %4575
        %4579 = vset.pattern.permute.xlu0 0
        %4580 = vperm.xlu0 %4579, %v4542
        %v4581 = vpop.permute.xlu0 %4580
        %v4583 = vadd.f32 %v4527, %v4546
        %v4584 = vadd.f32 %v4528, %v4551
        %v4585 = vadd.f32 %v4529, %v4556
        %v4586 = vadd.f32 %v4530, %v4561
        %v4587 = vadd.f32 %v4531, %v4566
        %v4588 = vadd.f32 %v4532, %v4571
        %v4589 = vadd.f32 %v4533, %v4576
        %v4590 = vadd.f32 %v4534, %v4581
        %v4591 = vmax.f32 %v4583, 0.0
        %v4592 = vmax.f32 %v4584, 0.0
        %v4593 = vmax.f32 %v4585, 0.0
        %v4594 = vmax.f32 %v4586, 0.0
        %v4595 = vmax.f32 %v4587, 0.0
        %v4596 = vmax.f32 %v4588, 0.0
        %v4597 = vmax.f32 %v4589, 0.0
        %v4598 = vmax.f32 %v4590, 0.0
        %v4599 = vld [vmem:[#allocation2] sm:$0xff]
        %v4600 = vld [vmem:[#allocation2 + $0x8] sm:$0xff]
        %v4601 = vld [vmem:[#allocation2 + $0x10] sm:$0xff]
        %v4602 = vld [vmem:[#allocation2 + $0x18] sm:$0xff]
        %v4603 = vld [vmem:[#allocation2 + $0x20] sm:$0xff]
        %v4604 = vld [vmem:[#allocation2 + $0x28] sm:$0xff]
        %v4605 = vld [vmem:[#allocation2 + $0x30] sm:$0xff]
        %v4606 = vld [vmem:[#allocation2 + $0x38] sm:$0xff]
        %4608 = vset.pattern.permute.xlu0 0
        %4609 = vperm.xlu0 %4608, %v4591
        %v4610 = vpop.permute.xlu0 %4609
        %4613 = vset.pattern.permute.xlu0 0
        %4614 = vperm.xlu0 %4613, %v4592
        %v4615 = vpop.permute.xlu0 %4614
        %4618 = vset.pattern.permute.xlu0 0
        %4619 = vperm.xlu0 %4618, %v4593
        %v4620 = vpop.permute.xlu0 %4619
        %4623 = vset.pattern.permute.xlu0 0
        %4624 = vperm.xlu0 %4623, %v4594
        %v4625 = vpop.permute.xlu0 %4624
        %4628 = vset.pattern.permute.xlu0 0
        %4629 = vperm.xlu0 %4628, %v4595
        %v4630 = vpop.permute.xlu0 %4629
        %4633 = vset.pattern.permute.xlu0 0
        %4634 = vperm.xlu0 %4633, %v4596
        %v4635 = vpop.permute.xlu0 %4634
        %4638 = vset.pattern.permute.xlu0 0
        %4639 = vperm.xlu0 %4638, %v4597
        %v4640 = vpop.permute.xlu0 %4639
        %4643 = vset.pattern.permute.xlu0 0
        %4644 = vperm.xlu0 %4643, %v4598
        %v4645 = vpop.permute.xlu0 %4644
        %v4647 = vmul.f32 %v4610, %v4599
        %v4648 = vmul.f32 %v4615, %v4600
        %v4649 = vmul.f32 %v4620, %v4601
        %v4650 = vmul.f32 %v4625, %v4602
        %v4651 = vmul.f32 %v4630, %v4603
        %v4652 = vmul.f32 %v4635, %v4604
        %v4653 = vmul.f32 %v4640, %v4605
        %v4654 = vmul.f32 %v4645, %v4606
        %v4655 = vadd.f32 %v4647, 0.0
        %v4656 = vadd.f32 %v4648, 0.0
        %v4657 = vadd.f32 %v4649, 0.0
        %v4658 = vadd.f32 %v4650, 0.0
        %v4659 = vadd.f32 %v4651, 0.0
        %v4660 = vadd.f32 %v4652, 0.0
        %v4661 = vadd.f32 %v4653, 0.0
        %v4662 = vadd.f32 %v4654, 0.0
        %s4663 = scalar_lea.vmem [#allocation2], 64
        %v4664 = vld [vmem:[%s4663] sm:$0xff]
        %v4665 = vld [vmem:[%s4663 + $0x8] sm:$0xff]
        %v4666 = vld [vmem:[%s4663 + $0x10] sm:$0xff]
        %v4667 = vld [vmem:[%s4663 + $0x18] sm:$0xff]
        %v4668 = vld [vmem:[%s4663 + $0x20] sm:$0xff]
        %v4669 = vld [vmem:[%s4663 + $0x28] sm:$0xff]
        %v4670 = vld [vmem:[%s4663 + $0x30] sm:$0xff]
        %v4671 = vld [vmem:[%s4663 + $0x38] sm:$0xff]
        %4672 = vset.pattern.permute.xlu0 2
        %4673 = vperm.xlu0 %4672, %v4591
        %v4674 = vpop.permute.xlu0 %4673
        %4676 = vset.pattern.permute.xlu0 2
        %4677 = vperm.xlu0 %4676, %v4592
        %v4678 = vpop.permute.xlu0 %4677
        %4680 = vset.pattern.permute.xlu0 2
        %4681 = vperm.xlu0 %4680, %v4593
        %v4682 = vpop.permute.xlu0 %4681
        %4684 = vset.pattern.permute.xlu0 2
        %4685 = vperm.xlu0 %4684, %v4594
        %v4686 = vpop.permute.xlu0 %4685
        %4688 = vset.pattern.permute.xlu0 2
        %4689 = vperm.xlu0 %4688, %v4595
        %v4690 = vpop.permute.xlu0 %4689
        %4692 = vset.pattern.permute.xlu0 2
        %4693 = vperm.xlu0 %4692, %v4596
        %v4694 = vpop.permute.xlu0 %4693
        %4696 = vset.pattern.permute.xlu0 2
        %4697 = vperm.xlu0 %4696, %v4597
        %v4698 = vpop.permute.xlu0 %4697
        %4700 = vset.pattern.permute.xlu0 2
        %4701 = vperm.xlu0 %4700, %v4598
        %v4702 = vpop.permute.xlu0 %4701
        %v4704 = vmul.f32 %v4674, %v4664
        %v4705 = vmul.f32 %v4678, %v4665
        %v4706 = vmul.f32 %v4682, %v4666
        %v4707 = vmul.f32 %v4686, %v4667
        %v4708 = vmul.f32 %v4690, %v4668
        %v4709 = vmul.f32 %v4694, %v4669
        %v4710 = vmul.f32 %v4698, %v4670
        %v4711 = vmul.f32 %v4702, %v4671
        %v4712 = vadd.f32 %v4655, %v4704
        %v4713 = vadd.f32 %v4656, %v4705
        %v4714 = vadd.f32 %v4657, %v4706
        %v4715 = vadd.f32 %v4658, %v4707
        %v4716 = vadd.f32 %v4659, %v4708
        %v4717 = vadd.f32 %v4660, %v4709
        %v4718 = vadd.f32 %v4661, %v4710
        %v4719 = vadd.f32 %v4662, %v4711
        %s4720 = scalar_lea.vmem [#allocation2], 128
        %v4721 = vld [vmem:[%s4720] sm:$0xff]
        %v4722 = vld [vmem:[%s4720 + $0x8] sm:$0xff]
        %v4723 = vld [vmem:[%s4720 + $0x10] sm:$0xff]
        %v4724 = vld [vmem:[%s4720 + $0x18] sm:$0xff]
        %v4725 = vld [vmem:[%s4720 + $0x20] sm:$0xff]
        %v4726 = vld [vmem:[%s4720 + $0x28] sm:$0xff]
        %v4727 = vld [vmem:[%s4720 + $0x30] sm:$0xff]
        %v4728 = vld [vmem:[%s4720 + $0x38] sm:$0xff]
        %4729 = vset.pattern.permute.xlu0 4
        %4730 = vperm.xlu0 %4729, %v4591
        %v4731 = vpop.permute.xlu0 %4730
        %4733 = vset.pattern.permute.xlu0 4
        %4734 = vperm.xlu0 %4733, %v4592
        %v4735 = vpop.permute.xlu0 %4734
        %4737 = vset.pattern.permute.xlu0 4
        %4738 = vperm.xlu0 %4737, %v4593
        %v4739 = vpop.permute.xlu0 %4738
        %4741 = vset.pattern.permute.xlu0 4
        %4742 = vperm.xlu0 %4741, %v4594
        %v4743 = vpop.permute.xlu0 %4742
        %4745 = vset.pattern.permute.xlu0 4
        %4746 = vperm.xlu0 %4745, %v4595
        %v4747 = vpop.permute.xlu0 %4746
        %4749 = vset.pattern.permute.xlu0 4
        %4750 = vperm.xlu0 %4749, %v4596
        %v4751 = vpop.permute.xlu0 %4750
        %4753 = vset.pattern.permute.xlu0 4
        %4754 = vperm.xlu0 %4753, %v4597
        %v4755 = vpop.permute.xlu0 %4754
        %4757 = vset.pattern.permute.xlu0 4
        %4758 = vperm.xlu0 %4757, %v4598
        %v4759 = vpop.permute.xlu0 %4758
        %v4761 = vmul.f32 %v4731, %v4721
        %v4762 = vmul.f32 %v4735, %v4722
        %v4763 = vmul.f32 %v4739, %v4723
        %v4764 = vmul.f32 %v4743, %v4724
        %v4765 = vmul.f32 %v4747, %v4725
        %v4766 = vmul.f32 %v4751, %v4726
        %v4767 = vmul.f32 %v4755, %v4727
        %v4768 = vmul.f32 %v4759, %v4728
        %v4769 = vadd.f32 %v4712, %v4761
        %v4770 = vadd.f32 %v4713, %v4762
        %v4771 = vadd.f32 %v4714, %v4763
        %v4772 = vadd.f32 %v4715, %v4764
        %v4773 = vadd.f32 %v4716, %v4765
        %v4774 = vadd.f32 %v4717, %v4766
        %v4775 = vadd.f32 %v4718, %v4767
        %v4776 = vadd.f32 %v4719, %v4768
        %s4777 = scalar_lea.vmem [#allocation2], 192
        %v4778 = vld [vmem:[%s4777] sm:$0xff]
        %v4779 = vld [vmem:[%s4777 + $0x8] sm:$0xff]
        %v4780 = vld [vmem:[%s4777 + $0x10] sm:$0xff]
        %v4781 = vld [vmem:[%s4777 + $0x18] sm:$0xff]
        %v4782 = vld [vmem:[%s4777 + $0x20] sm:$0xff]
        %v4783 = vld [vmem:[%s4777 + $0x28] sm:$0xff]
        %v4784 = vld [vmem:[%s4777 + $0x30] sm:$0xff]
        %v4785 = vld [vmem:[%s4777 + $0x38] sm:$0xff]
        %4786 = vset.pattern.permute.xlu0 6
        %4787 = vperm.xlu0 %4786, %v4591
        %v4788 = vpop.permute.xlu0 %4787
        %4790 = vset.pattern.permute.xlu0 6
        %4791 = vperm.xlu0 %4790, %v4592
        %v4792 = vpop.permute.xlu0 %4791
        %4794 = vset.pattern.permute.xlu0 6
        %4795 = vperm.xlu0 %4794, %v4593
        %v4796 = vpop.permute.xlu0 %4795
        %4798 = vset.pattern.permute.xlu0 6
        %4799 = vperm.xlu0 %4798, %v4594
        %v4800 = vpop.permute.xlu0 %4799
        %4802 = vset.pattern.permute.xlu0 6
        %4803 = vperm.xlu0 %4802, %v4595
        %v4804 = vpop.permute.xlu0 %4803
        %4806 = vset.pattern.permute.xlu0 6
        %4807 = vperm.xlu0 %4806, %v4596
        %v4808 = vpop.permute.xlu0 %4807
        %4810 = vset.pattern.permute.xlu0 6
        %4811 = vperm.xlu0 %4810, %v4597
        %v4812 = vpop.permute.xlu0 %4811
        %4814 = vset.pattern.permute.xlu0 6
        %4815 = vperm.xlu0 %4814, %v4598
        %v4816 = vpop.permute.xlu0 %4815
        %v4818 = vmul.f32 %v4788, %v4778
        %v4819 = vmul.f32 %v4792, %v4779
        %v4820 = vmul.f32 %v4796, %v4780
        %v4821 = vmul.f32 %v4800, %v4781
        %v4822 = vmul.f32 %v4804, %v4782
        %v4823 = vmul.f32 %v4808, %v4783
        %v4824 = vmul.f32 %v4812, %v4784
        %v4825 = vmul.f32 %v4816, %v4785
        %v4826 = vadd.f32 %v4769, %v4818
        %v4827 = vadd.f32 %v4770, %v4819
        %v4828 = vadd.f32 %v4771, %v4820
        %v4829 = vadd.f32 %v4772, %v4821
        %v4830 = vadd.f32 %v4773, %v4822
        %v4831 = vadd.f32 %v4774, %v4823
        %v4832 = vadd.f32 %v4775, %v4824
        %v4833 = vadd.f32 %v4776, %v4825
        %s4834 = scalar_lea.vmem [#allocation2], 256
        %v4835 = vld [vmem:[%s4834] sm:$0xff]
        %v4836 = vld [vmem:[%s4834 + $0x8] sm:$0xff]
        %v4837 = vld [vmem:[%s4834 + $0x10] sm:$0xff]
        %v4838 = vld [vmem:[%s4834 + $0x18] sm:$0xff]
        %v4839 = vld [vmem:[%s4834 + $0x20] sm:$0xff]
        %v4840 = vld [vmem:[%s4834 + $0x28] sm:$0xff]
        %v4841 = vld [vmem:[%s4834 + $0x30] sm:$0xff]
        %v4842 = vld [vmem:[%s4834 + $0x38] sm:$0xff]
        %4843 = vset.pattern.permute.xlu0 8
        %4844 = vperm.xlu0 %4843, %v4591
        %v4845 = vpop.permute.xlu0 %4844
        %4847 = vset.pattern.permute.xlu0 8
        %4848 = vperm.xlu0 %4847, %v4592
        %v4849 = vpop.permute.xlu0 %4848
        %4851 = vset.pattern.permute.xlu0 8
        %4852 = vperm.xlu0 %4851, %v4593
        %v4853 = vpop.permute.xlu0 %4852
        %4855 = vset.pattern.permute.xlu0 8
        %4856 = vperm.xlu0 %4855, %v4594
        %v4857 = vpop.permute.xlu0 %4856
        %4859 = vset.pattern.permute.xlu0 8
        %4860 = vperm.xlu0 %4859, %v4595
        %v4861 = vpop.permute.xlu0 %4860
        %4863 = vset.pattern.permute.xlu0 8
        %4864 = vperm.xlu0 %4863, %v4596
        %v4865 = vpop.permute.xlu0 %4864
        %4867 = vset.pattern.permute.xlu0 8
        %4868 = vperm.xlu0 %4867, %v4597
        %v4869 = vpop.permute.xlu0 %4868
        %4871 = vset.pattern.permute.xlu0 8
        %4872 = vperm.xlu0 %4871, %v4598
        %v4873 = vpop.permute.xlu0 %4872
        %v4875 = vmul.f32 %v4845, %v4835
        %v4876 = vmul.f32 %v4849, %v4836
        %v4877 = vmul.f32 %v4853, %v4837
        %v4878 = vmul.f32 %v4857, %v4838
        %v4879 = vmul.f32 %v4861, %v4839
        %v4880 = vmul.f32 %v4865, %v4840
        %v4881 = vmul.f32 %v4869, %v4841
        %v4882 = vmul.f32 %v4873, %v4842
        %v4883 = vadd.f32 %v4826, %v4875
        %v4884 = vadd.f32 %v4827, %v4876
        %v4885 = vadd.f32 %v4828, %v4877
        %v4886 = vadd.f32 %v4829, %v4878
        %v4887 = vadd.f32 %v4830, %v4879
        %v4888 = vadd.f32 %v4831, %v4880
        %v4889 = vadd.f32 %v4832, %v4881
        %v4890 = vadd.f32 %v4833, %v4882
        %s4891 = scalar_lea.vmem [#allocation2], 320
        %v4892 = vld [vmem:[%s4891] sm:$0xff]
        %v4893 = vld [vmem:[%s4891 + $0x8] sm:$0xff]
        %v4894 = vld [vmem:[%s4891 + $0x10] sm:$0xff]
        %v4895 = vld [vmem:[%s4891 + $0x18] sm:$0xff]
        %v4896 = vld [vmem:[%s4891 + $0x20] sm:$0xff]
        %v4897 = vld [vmem:[%s4891 + $0x28] sm:$0xff]
        %v4898 = vld [vmem:[%s4891 + $0x30] sm:$0xff]
        %v4899 = vld [vmem:[%s4891 + $0x38] sm:$0xff]
        %4900 = vset.pattern.permute.xlu0 26
        %4901 = vperm.xlu0 %4900, %v4591
        %v4902 = vpop.permute.xlu0 %4901
        %4904 = vset.pattern.permute.xlu0 26
        %4905 = vperm.xlu0 %4904, %v4592
        %v4906 = vpop.permute.xlu0 %4905
        %4908 = vset.pattern.permute.xlu0 26
        %4909 = vperm.xlu0 %4908, %v4593
        %v4910 = vpop.permute.xlu0 %4909
        %4912 = vset.pattern.permute.xlu0 26
        %4913 = vperm.xlu0 %4912, %v4594
        %v4914 = vpop.permute.xlu0 %4913
        %4916 = vset.pattern.permute.xlu0 26
        %4917 = vperm.xlu0 %4916, %v4595
        %v4918 = vpop.permute.xlu0 %4917
        %4920 = vset.pattern.permute.xlu0 26
        %4921 = vperm.xlu0 %4920, %v4596
        %v4922 = vpop.permute.xlu0 %4921
        %4924 = vset.pattern.permute.xlu0 26
        %4925 = vperm.xlu0 %4924, %v4597
        %v4926 = vpop.permute.xlu0 %4925
        %4928 = vset.pattern.permute.xlu0 26
        %4929 = vperm.xlu0 %4928, %v4598
        %v4930 = vpop.permute.xlu0 %4929
        %v4932 = vmul.f32 %v4902, %v4892
        %v4933 = vmul.f32 %v4906, %v4893
        %v4934 = vmul.f32 %v4910, %v4894
        %v4935 = vmul.f32 %v4914, %v4895
        %v4936 = vmul.f32 %v4918, %v4896
        %v4937 = vmul.f32 %v4922, %v4897
        %v4938 = vmul.f32 %v4926, %v4898
        %v4939 = vmul.f32 %v4930, %v4899
        %v4940 = vadd.f32 %v4883, %v4932
        %v4941 = vadd.f32 %v4884, %v4933
        %v4942 = vadd.f32 %v4885, %v4934
        %v4943 = vadd.f32 %v4886, %v4935
        %v4944 = vadd.f32 %v4887, %v4936
        %v4945 = vadd.f32 %v4888, %v4937
        %v4946 = vadd.f32 %v4889, %v4938
        %v4947 = vadd.f32 %v4890, %v4939
        %s4948 = scalar_lea.vmem [#allocation2], 384
        %v4949 = vld [vmem:[%s4948] sm:$0xff]
        %v4950 = vld [vmem:[%s4948 + $0x8] sm:$0xff]
        %v4951 = vld [vmem:[%s4948 + $0x10] sm:$0xff]
        %v4952 = vld [vmem:[%s4948 + $0x18] sm:$0xff]
        %v4953 = vld [vmem:[%s4948 + $0x20] sm:$0xff]
        %v4954 = vld [vmem:[%s4948 + $0x28] sm:$0xff]
        %v4955 = vld [vmem:[%s4948 + $0x30] sm:$0xff]
        %v4956 = vld [vmem:[%s4948 + $0x38] sm:$0xff]
        %4957 = vset.pattern.permute.xlu0 28
        %4958 = vperm.xlu0 %4957, %v4591
        %v4959 = vpop.permute.xlu0 %4958
        %4961 = vset.pattern.permute.xlu0 28
        %4962 = vperm.xlu0 %4961, %v4592
        %v4963 = vpop.permute.xlu0 %4962
        %4965 = vset.pattern.permute.xlu0 28
        %4966 = vperm.xlu0 %4965, %v4593
        %v4967 = vpop.permute.xlu0 %4966
        %4969 = vset.pattern.permute.xlu0 28
        %4970 = vperm.xlu0 %4969, %v4594
        %v4971 = vpop.permute.xlu0 %4970
        %4973 = vset.pattern.permute.xlu0 28
        %4974 = vperm.xlu0 %4973, %v4595
        %v4975 = vpop.permute.xlu0 %4974
        %4977 = vset.pattern.permute.xlu0 28
        %4978 = vperm.xlu0 %4977, %v4596
        %v4979 = vpop.permute.xlu0 %4978
        %4981 = vset.pattern.permute.xlu0 28
        %4982 = vperm.xlu0 %4981, %v4597
        %v4983 = vpop.permute.xlu0 %4982
        %4985 = vset.pattern.permute.xlu0 28
        %4986 = vperm.xlu0 %4985, %v4598
        %v4987 = vpop.permute.xlu0 %4986
        %v4989 = vmul.f32 %v4959, %v4949
        %v4990 = vmul.f32 %v4963, %v4950
        %v4991 = vmul.f32 %v4967, %v4951
        %v4992 = vmul.f32 %v4971, %v4952
        %v4993 = vmul.f32 %v4975, %v4953
        %v4994 = vmul.f32 %v4979, %v4954
        %v4995 = vmul.f32 %v4983, %v4955
        %v4996 = vmul.f32 %v4987, %v4956
        %v4997 = vadd.f32 %v4940, %v4989
        %v4998 = vadd.f32 %v4941, %v4990
        %v4999 = vadd.f32 %v4942, %v4991
        %v5000 = vadd.f32 %v4943, %v4992
        %v5001 = vadd.f32 %v4944, %v4993
        %v5002 = vadd.f32 %v4945, %v4994
        %v5003 = vadd.f32 %v4946, %v4995
        %v5004 = vadd.f32 %v4947, %v4996
        %s5005 = scalar_lea.vmem [#allocation2], 448
        %v5006 = vld [vmem:[%s5005] sm:$0xff]
        %v5007 = vld [vmem:[%s5005 + $0x8] sm:$0xff]
        %v5008 = vld [vmem:[%s5005 + $0x10] sm:$0xff]
        %v5009 = vld [vmem:[%s5005 + $0x18] sm:$0xff]
        %v5010 = vld [vmem:[%s5005 + $0x20] sm:$0xff]
        %v5011 = vld [vmem:[%s5005 + $0x28] sm:$0xff]
        %v5012 = vld [vmem:[%s5005 + $0x30] sm:$0xff]
        %v5013 = vld [vmem:[%s5005 + $0x38] sm:$0xff]
        %5014 = vset.pattern.permute.xlu0 30
        %5015 = vperm.xlu0 %5014, %v4591
        %v5016 = vpop.permute.xlu0 %5015
        %5018 = vset.pattern.permute.xlu0 30
        %5019 = vperm.xlu0 %5018, %v4592
        %v5020 = vpop.permute.xlu0 %5019
        %5022 = vset.pattern.permute.xlu0 30
        %5023 = vperm.xlu0 %5022, %v4593
        %v5024 = vpop.permute.xlu0 %5023
        %5026 = vset.pattern.permute.xlu0 30
        %5027 = vperm.xlu0 %5026, %v4594
        %v5028 = vpop.permute.xlu0 %5027
        %5030 = vset.pattern.permute.xlu0 30
        %5031 = vperm.xlu0 %5030, %v4595
        %v5032 = vpop.permute.xlu0 %5031
        %5034 = vset.pattern.permute.xlu0 30
        %5035 = vperm.xlu0 %5034, %v4596
        %v5036 = vpop.permute.xlu0 %5035
        %5038 = vset.pattern.permute.xlu0 30
        %5039 = vperm.xlu0 %5038, %v4597
        %v5040 = vpop.permute.xlu0 %5039
        %5042 = vset.pattern.permute.xlu0 30
        %5043 = vperm.xlu0 %5042, %v4598
        %v5044 = vpop.permute.xlu0 %5043
        %v5046 = vmul.f32 %v5016, %v5006
        %v5047 = vmul.f32 %v5020, %v5007
        %v5048 = vmul.f32 %v5024, %v5008
        %v5049 = vmul.f32 %v5028, %v5009
        %v5050 = vmul.f32 %v5032, %v5010
        %v5051 = vmul.f32 %v5036, %v5011
        %v5052 = vmul.f32 %v5040, %v5012
        %v5053 = vmul.f32 %v5044, %v5013
        %v5054 = vadd.f32 %v4997, %v5046
        %v5055 = vadd.f32 %v4998, %v5047
        %v5056 = vadd.f32 %v4999, %v5048
        %v5057 = vadd.f32 %v5000, %v5049
        %v5058 = vadd.f32 %v5001, %v5050
        %v5059 = vadd.f32 %v5002, %v5051
        %v5060 = vadd.f32 %v5003, %v5052
        %v5061 = vadd.f32 %v5004, %v5053
        %s5062 = scalar_lea.vmem [#allocation2], 512
        %v5063 = vld [vmem:[%s5062] sm:$0xff]
        %v5064 = vld [vmem:[%s5062 + $0x8] sm:$0xff]
        %v5065 = vld [vmem:[%s5062 + $0x10] sm:$0xff]
        %v5066 = vld [vmem:[%s5062 + $0x18] sm:$0xff]
        %v5067 = vld [vmem:[%s5062 + $0x20] sm:$0xff]
        %v5068 = vld [vmem:[%s5062 + $0x28] sm:$0xff]
        %v5069 = vld [vmem:[%s5062 + $0x30] sm:$0xff]
        %v5070 = vld [vmem:[%s5062 + $0x38] sm:$0xff]
        %5071 = vset.pattern.permute.xlu0 32
        %5072 = vperm.xlu0 %5071, %v4591
        %v5073 = vpop.permute.xlu0 %5072
        %5075 = vset.pattern.permute.xlu0 32
        %5076 = vperm.xlu0 %5075, %v4592
        %v5077 = vpop.permute.xlu0 %5076
        %5079 = vset.pattern.permute.xlu0 32
        %5080 = vperm.xlu0 %5079, %v4593
        %v5081 = vpop.permute.xlu0 %5080
        %5083 = vset.pattern.permute.xlu0 32
        %5084 = vperm.xlu0 %5083, %v4594
        %v5085 = vpop.permute.xlu0 %5084
        %5087 = vset.pattern.permute.xlu0 32
        %5088 = vperm.xlu0 %5087, %v4595
        %v5089 = vpop.permute.xlu0 %5088
        %5091 = vset.pattern.permute.xlu0 32
        %5092 = vperm.xlu0 %5091, %v4596
        %v5093 = vpop.permute.xlu0 %5092
        %5095 = vset.pattern.permute.xlu0 32
        %5096 = vperm.xlu0 %5095, %v4597
        %v5097 = vpop.permute.xlu0 %5096
        %5099 = vset.pattern.permute.xlu0 32
        %5100 = vperm.xlu0 %5099, %v4598
        %v5101 = vpop.permute.xlu0 %5100
        %v5103 = vmul.f32 %v5073, %v5063
        %v5104 = vmul.f32 %v5077, %v5064
        %v5105 = vmul.f32 %v5081, %v5065
        %v5106 = vmul.f32 %v5085, %v5066
        %v5107 = vmul.f32 %v5089, %v5067
        %v5108 = vmul.f32 %v5093, %v5068
        %v5109 = vmul.f32 %v5097, %v5069
        %v5110 = vmul.f32 %v5101, %v5070
        %v5111 = vadd.f32 %v5054, %v5103
        %v5112 = vadd.f32 %v5055, %v5104
        %v5113 = vadd.f32 %v5056, %v5105
        %v5114 = vadd.f32 %v5057, %v5106
        %v5115 = vadd.f32 %v5058, %v5107
        %v5116 = vadd.f32 %v5059, %v5108
        %v5117 = vadd.f32 %v5060, %v5109
        %v5118 = vadd.f32 %v5061, %v5110
        %s5119 = scalar_lea.vmem [#allocation2], 576
        %v5120 = vld [vmem:[%s5119] sm:$0xff]
        %v5121 = vld [vmem:[%s5119 + $0x8] sm:$0xff]
        %v5122 = vld [vmem:[%s5119 + $0x10] sm:$0xff]
        %v5123 = vld [vmem:[%s5119 + $0x18] sm:$0xff]
        %v5124 = vld [vmem:[%s5119 + $0x20] sm:$0xff]
        %v5125 = vld [vmem:[%s5119 + $0x28] sm:$0xff]
        %v5126 = vld [vmem:[%s5119 + $0x30] sm:$0xff]
        %v5127 = vld [vmem:[%s5119 + $0x38] sm:$0xff]
        %5128 = vset.pattern.permute.xlu0 34
        %5129 = vperm.xlu0 %5128, %v4591
        %v5130 = vpop.permute.xlu0 %5129
        %5132 = vset.pattern.permute.xlu0 34
        %5133 = vperm.xlu0 %5132, %v4592
        %v5134 = vpop.permute.xlu0 %5133
        %5136 = vset.pattern.permute.xlu0 34
        %5137 = vperm.xlu0 %5136, %v4593
        %v5138 = vpop.permute.xlu0 %5137
        %5140 = vset.pattern.permute.xlu0 34
        %5141 = vperm.xlu0 %5140, %v4594
        %v5142 = vpop.permute.xlu0 %5141
        %5144 = vset.pattern.permute.xlu0 34
        %5145 = vperm.xlu0 %5144, %v4595
        %v5146 = vpop.permute.xlu0 %5145
        %5148 = vset.pattern.permute.xlu0 34
        %5149 = vperm.xlu0 %5148, %v4596
        %v5150 = vpop.permute.xlu0 %5149
        %5152 = vset.pattern.permute.xlu0 34
        %5153 = vperm.xlu0 %5152, %v4597
        %v5154 = vpop.permute.xlu0 %5153
        %5156 = vset.pattern.permute.xlu0 34
        %5157 = vperm.xlu0 %5156, %v4598
        %v5158 = vpop.permute.xlu0 %5157
        %v5160 = vmul.f32 %v5130, %v5120
        %v5161 = vmul.f32 %v5134, %v5121
        %v5162 = vmul.f32 %v5138, %v5122
        %v5163 = vmul.f32 %v5142, %v5123
        %v5164 = vmul.f32 %v5146, %v5124
        %v5165 = vmul.f32 %v5150, %v5125
        %v5166 = vmul.f32 %v5154, %v5126
        %v5167 = vmul.f32 %v5158, %v5127
        %v5168 = vadd.f32 %v5111, %v5160
        %v5169 = vadd.f32 %v5112, %v5161
        %v5170 = vadd.f32 %v5113, %v5162
        %v5171 = vadd.f32 %v5114, %v5163
        %v5172 = vadd.f32 %v5115, %v5164
        %v5173 = vadd.f32 %v5116, %v5165
        %v5174 = vadd.f32 %v5117, %v5166
        %v5175 = vadd.f32 %v5118, %v5167
        %s5176 = scalar_lea.vmem [#allocation2], 640
        %v5177 = vld [vmem:[%s5176] sm:$0xff]
        %v5178 = vld [vmem:[%s5176 + $0x8] sm:$0xff]
        %v5179 = vld [vmem:[%s5176 + $0x10] sm:$0xff]
        %v5180 = vld [vmem:[%s5176 + $0x18] sm:$0xff]
        %v5181 = vld [vmem:[%s5176 + $0x20] sm:$0xff]
        %v5182 = vld [vmem:[%s5176 + $0x28] sm:$0xff]
        %v5183 = vld [vmem:[%s5176 + $0x30] sm:$0xff]
        %v5184 = vld [vmem:[%s5176 + $0x38] sm:$0xff]
        %5185 = vset.pattern.permute.xlu0 52
        %5186 = vperm.xlu0 %5185, %v4591
        %v5187 = vpop.permute.xlu0 %5186
        %5189 = vset.pattern.permute.xlu0 52
        %5190 = vperm.xlu0 %5189, %v4592
        %v5191 = vpop.permute.xlu0 %5190
        %5193 = vset.pattern.permute.xlu0 52
        %5194 = vperm.xlu0 %5193, %v4593
        %v5195 = vpop.permute.xlu0 %5194
        %5197 = vset.pattern.permute.xlu0 52
        %5198 = vperm.xlu0 %5197, %v4594
        %v5199 = vpop.permute.xlu0 %5198
        %5201 = vset.pattern.permute.xlu0 52
        %5202 = vperm.xlu0 %5201, %v4595
        %v5203 = vpop.permute.xlu0 %5202
        %5205 = vset.pattern.permute.xlu0 52
        %5206 = vperm.xlu0 %5205, %v4596
        %v5207 = vpop.permute.xlu0 %5206
        %5209 = vset.pattern.permute.xlu0 52
        %5210 = vperm.xlu0 %5209, %v4597
        %v5211 = vpop.permute.xlu0 %5210
        %5213 = vset.pattern.permute.xlu0 52
        %5214 = vperm.xlu0 %5213, %v4598
        %v5215 = vpop.permute.xlu0 %5214
        %v5217 = vmul.f32 %v5187, %v5177
        %v5218 = vmul.f32 %v5191, %v5178
        %v5219 = vmul.f32 %v5195, %v5179
        %v5220 = vmul.f32 %v5199, %v5180
        %v5221 = vmul.f32 %v5203, %v5181
        %v5222 = vmul.f32 %v5207, %v5182
        %v5223 = vmul.f32 %v5211, %v5183
        %v5224 = vmul.f32 %v5215, %v5184
        %v5225 = vadd.f32 %v5168, %v5217
        %v5226 = vadd.f32 %v5169, %v5218
        %v5227 = vadd.f32 %v5170, %v5219
        %v5228 = vadd.f32 %v5171, %v5220
        %v5229 = vadd.f32 %v5172, %v5221
        %v5230 = vadd.f32 %v5173, %v5222
        %v5231 = vadd.f32 %v5174, %v5223
        %v5232 = vadd.f32 %v5175, %v5224
        %s5233 = scalar_lea.vmem [#allocation2], 704
        %v5234 = vld [vmem:[%s5233] sm:$0xff]
        %v5235 = vld [vmem:[%s5233 + $0x8] sm:$0xff]
        %v5236 = vld [vmem:[%s5233 + $0x10] sm:$0xff]
        %v5237 = vld [vmem:[%s5233 + $0x18] sm:$0xff]
        %v5238 = vld [vmem:[%s5233 + $0x20] sm:$0xff]
        %v5239 = vld [vmem:[%s5233 + $0x28] sm:$0xff]
        %v5240 = vld [vmem:[%s5233 + $0x30] sm:$0xff]
        %v5241 = vld [vmem:[%s5233 + $0x38] sm:$0xff]
        %5242 = vset.pattern.permute.xlu0 54
        %5243 = vperm.xlu0 %5242, %v4591
        %v5244 = vpop.permute.xlu0 %5243
        %5246 = vset.pattern.permute.xlu0 54
        %5247 = vperm.xlu0 %5246, %v4592
        %v5248 = vpop.permute.xlu0 %5247
        %5250 = vset.pattern.permute.xlu0 54
        %5251 = vperm.xlu0 %5250, %v4593
        %v5252 = vpop.permute.xlu0 %5251
        %5254 = vset.pattern.permute.xlu0 54
        %5255 = vperm.xlu0 %5254, %v4594
        %v5256 = vpop.permute.xlu0 %5255
        %5258 = vset.pattern.permute.xlu0 54
        %5259 = vperm.xlu0 %5258, %v4595
        %v5260 = vpop.permute.xlu0 %5259
        %5262 = vset.pattern.permute.xlu0 54
        %5263 = vperm.xlu0 %5262, %v4596
        %v5264 = vpop.permute.xlu0 %5263
        %5266 = vset.pattern.permute.xlu0 54
        %5267 = vperm.xlu0 %5266, %v4597
        %v5268 = vpop.permute.xlu0 %5267
        %5270 = vset.pattern.permute.xlu0 54
        %5271 = vperm.xlu0 %5270, %v4598
        %v5272 = vpop.permute.xlu0 %5271
        %v5274 = vmul.f32 %v5244, %v5234
        %v5275 = vmul.f32 %v5248, %v5235
        %v5276 = vmul.f32 %v5252, %v5236
        %v5277 = vmul.f32 %v5256, %v5237
        %v5278 = vmul.f32 %v5260, %v5238
        %v5279 = vmul.f32 %v5264, %v5239
        %v5280 = vmul.f32 %v5268, %v5240
        %v5281 = vmul.f32 %v5272, %v5241
        %v5282 = vadd.f32 %v5225, %v5274
        %v5283 = vadd.f32 %v5226, %v5275
        %v5284 = vadd.f32 %v5227, %v5276
        %v5285 = vadd.f32 %v5228, %v5277
        %v5286 = vadd.f32 %v5229, %v5278
        %v5287 = vadd.f32 %v5230, %v5279
        %v5288 = vadd.f32 %v5231, %v5280
        %v5289 = vadd.f32 %v5232, %v5281
        %s5290 = scalar_lea.vmem [#allocation2], 768
        %v5291 = vld [vmem:[%s5290] sm:$0xff]
        %v5292 = vld [vmem:[%s5290 + $0x8] sm:$0xff]
        %v5293 = vld [vmem:[%s5290 + $0x10] sm:$0xff]
        %v5294 = vld [vmem:[%s5290 + $0x18] sm:$0xff]
        %v5295 = vld [vmem:[%s5290 + $0x20] sm:$0xff]
        %v5296 = vld [vmem:[%s5290 + $0x28] sm:$0xff]
        %v5297 = vld [vmem:[%s5290 + $0x30] sm:$0xff]
        %v5298 = vld [vmem:[%s5290 + $0x38] sm:$0xff]
        %5299 = vset.pattern.permute.xlu0 56
        %5300 = vperm.xlu0 %5299, %v4591
        %v5301 = vpop.permute.xlu0 %5300
        %5303 = vset.pattern.permute.xlu0 56
        %5304 = vperm.xlu0 %5303, %v4592
        %v5305 = vpop.permute.xlu0 %5304
        %5307 = vset.pattern.permute.xlu0 56
        %5308 = vperm.xlu0 %5307, %v4593
        %v5309 = vpop.permute.xlu0 %5308
        %5311 = vset.pattern.permute.xlu0 56
        %5312 = vperm.xlu0 %5311, %v4594
        %v5313 = vpop.permute.xlu0 %5312
        %5315 = vset.pattern.permute.xlu0 56
        %5316 = vperm.xlu0 %5315, %v4595
        %v5317 = vpop.permute.xlu0 %5316
        %5319 = vset.pattern.permute.xlu0 56
        %5320 = vperm.xlu0 %5319, %v4596
        %v5321 = vpop.permute.xlu0 %5320
        %5323 = vset.pattern.permute.xlu0 56
        %5324 = vperm.xlu0 %5323, %v4597
        %v5325 = vpop.permute.xlu0 %5324
        %5327 = vset.pattern.permute.xlu0 56
        %5328 = vperm.xlu0 %5327, %v4598
        %v5329 = vpop.permute.xlu0 %5328
        %v5331 = vmul.f32 %v5301, %v5291
        %v5332 = vmul.f32 %v5305, %v5292
        %v5333 = vmul.f32 %v5309, %v5293
        %v5334 = vmul.f32 %v5313, %v5294
        %v5335 = vmul.f32 %v5317, %v5295
        %v5336 = vmul.f32 %v5321, %v5296
        %v5337 = vmul.f32 %v5325, %v5297
        %v5338 = vmul.f32 %v5329, %v5298
        %v5339 = vadd.f32 %v5282, %v5331
        %v5340 = vadd.f32 %v5283, %v5332
        %v5341 = vadd.f32 %v5284, %v5333
        %v5342 = vadd.f32 %v5285, %v5334
        %v5343 = vadd.f32 %v5286, %v5335
        %v5344 = vadd.f32 %v5287, %v5336
        %v5345 = vadd.f32 %v5288, %v5337
        %v5346 = vadd.f32 %v5289, %v5338
        %s5347 = scalar_lea.vmem [#allocation2], 832
        %v5348 = vld [vmem:[%s5347] sm:$0xff]
        %v5349 = vld [vmem:[%s5347 + $0x8] sm:$0xff]
        %v5350 = vld [vmem:[%s5347 + $0x10] sm:$0xff]
        %v5351 = vld [vmem:[%s5347 + $0x18] sm:$0xff]
        %v5352 = vld [vmem:[%s5347 + $0x20] sm:$0xff]
        %v5353 = vld [vmem:[%s5347 + $0x28] sm:$0xff]
        %v5354 = vld [vmem:[%s5347 + $0x30] sm:$0xff]
        %v5355 = vld [vmem:[%s5347 + $0x38] sm:$0xff]
        %5356 = vset.pattern.permute.xlu0 58
        %5357 = vperm.xlu0 %5356, %v4591
        %v5358 = vpop.permute.xlu0 %5357
        %5360 = vset.pattern.permute.xlu0 58
        %5361 = vperm.xlu0 %5360, %v4592
        %v5362 = vpop.permute.xlu0 %5361
        %5364 = vset.pattern.permute.xlu0 58
        %5365 = vperm.xlu0 %5364, %v4593
        %v5366 = vpop.permute.xlu0 %5365
        %5368 = vset.pattern.permute.xlu0 58
        %5369 = vperm.xlu0 %5368, %v4594
        %v5370 = vpop.permute.xlu0 %5369
        %5372 = vset.pattern.permute.xlu0 58
        %5373 = vperm.xlu0 %5372, %v4595
        %v5374 = vpop.permute.xlu0 %5373
        %5376 = vset.pattern.permute.xlu0 58
        %5377 = vperm.xlu0 %5376, %v4596
        %v5378 = vpop.permute.xlu0 %5377
        %5380 = vset.pattern.permute.xlu0 58
        %5381 = vperm.xlu0 %5380, %v4597
        %v5382 = vpop.permute.xlu0 %5381
        %5384 = vset.pattern.permute.xlu0 58
        %5385 = vperm.xlu0 %5384, %v4598
        %v5386 = vpop.permute.xlu0 %5385
        %v5388 = vmul.f32 %v5358, %v5348
        %v5389 = vmul.f32 %v5362, %v5349
        %v5390 = vmul.f32 %v5366, %v5350
        %v5391 = vmul.f32 %v5370, %v5351
        %v5392 = vmul.f32 %v5374, %v5352
        %v5393 = vmul.f32 %v5378, %v5353
        %v5394 = vmul.f32 %v5382, %v5354
        %v5395 = vmul.f32 %v5386, %v5355
        %v5396 = vadd.f32 %v5339, %v5388
        %v5397 = vadd.f32 %v5340, %v5389
        %v5398 = vadd.f32 %v5341, %v5390
        %v5399 = vadd.f32 %v5342, %v5391
        %v5400 = vadd.f32 %v5343, %v5392
        %v5401 = vadd.f32 %v5344, %v5393
        %v5402 = vadd.f32 %v5345, %v5394
        %v5403 = vadd.f32 %v5346, %v5395
        %s5404 = scalar_lea.vmem [#allocation2], 896
        %v5405 = vld [vmem:[%s5404] sm:$0xff]
        %v5406 = vld [vmem:[%s5404 + $0x8] sm:$0xff]
        %v5407 = vld [vmem:[%s5404 + $0x10] sm:$0xff]
        %v5408 = vld [vmem:[%s5404 + $0x18] sm:$0xff]
        %v5409 = vld [vmem:[%s5404 + $0x20] sm:$0xff]
        %v5410 = vld [vmem:[%s5404 + $0x28] sm:$0xff]
        %v5411 = vld [vmem:[%s5404 + $0x30] sm:$0xff]
        %v5412 = vld [vmem:[%s5404 + $0x38] sm:$0xff]
        %5413 = vset.pattern.permute.xlu0 60
        %5414 = vperm.xlu0 %5413, %v4591
        %v5415 = vpop.permute.xlu0 %5414
        %5417 = vset.pattern.permute.xlu0 60
        %5418 = vperm.xlu0 %5417, %v4592
        %v5419 = vpop.permute.xlu0 %5418
        %5421 = vset.pattern.permute.xlu0 60
        %5422 = vperm.xlu0 %5421, %v4593
        %v5423 = vpop.permute.xlu0 %5422
        %5425 = vset.pattern.permute.xlu0 60
        %5426 = vperm.xlu0 %5425, %v4594
        %v5427 = vpop.permute.xlu0 %5426
        %5429 = vset.pattern.permute.xlu0 60
        %5430 = vperm.xlu0 %5429, %v4595
        %v5431 = vpop.permute.xlu0 %5430
        %5433 = vset.pattern.permute.xlu0 60
        %5434 = vperm.xlu0 %5433, %v4596
        %v5435 = vpop.permute.xlu0 %5434
        %5437 = vset.pattern.permute.xlu0 60
        %5438 = vperm.xlu0 %5437, %v4597
        %v5439 = vpop.permute.xlu0 %5438
        %5441 = vset.pattern.permute.xlu0 60
        %5442 = vperm.xlu0 %5441, %v4598
        %v5443 = vpop.permute.xlu0 %5442
        %v5445 = vmul.f32 %v5415, %v5405
        %v5446 = vmul.f32 %v5419, %v5406
        %v5447 = vmul.f32 %v5423, %v5407
        %v5448 = vmul.f32 %v5427, %v5408
        %v5449 = vmul.f32 %v5431, %v5409
        %v5450 = vmul.f32 %v5435, %v5410
        %v5451 = vmul.f32 %v5439, %v5411
        %v5452 = vmul.f32 %v5443, %v5412
        %v5453 = vadd.f32 %v5396, %v5445
        %v5454 = vadd.f32 %v5397, %v5446
        %v5455 = vadd.f32 %v5398, %v5447
        %v5456 = vadd.f32 %v5399, %v5448
        %v5457 = vadd.f32 %v5400, %v5449
        %v5458 = vadd.f32 %v5401, %v5450
        %v5459 = vadd.f32 %v5402, %v5451
        %v5460 = vadd.f32 %v5403, %v5452
        %s5461 = scalar_lea.vmem [#allocation2], 960
        %v5462 = vld [vmem:[%s5461] sm:$0xff]
        %v5463 = vld [vmem:[%s5461 + $0x8] sm:$0xff]
        %v5464 = vld [vmem:[%s5461 + $0x10] sm:$0xff]
        %v5465 = vld [vmem:[%s5461 + $0x18] sm:$0xff]
        %v5466 = vld [vmem:[%s5461 + $0x20] sm:$0xff]
        %v5467 = vld [vmem:[%s5461 + $0x28] sm:$0xff]
        %v5468 = vld [vmem:[%s5461 + $0x30] sm:$0xff]
        %v5469 = vld [vmem:[%s5461 + $0x38] sm:$0xff]
        %5470 = vset.pattern.permute.xlu0 78
        %5471 = vperm.xlu0 %5470, %v4591
        %v5472 = vpop.permute.xlu0 %5471
        %5474 = vset.pattern.permute.xlu0 78
        %5475 = vperm.xlu0 %5474, %v4592
        %v5476 = vpop.permute.xlu0 %5475
        %5478 = vset.pattern.permute.xlu0 78
        %5479 = vperm.xlu0 %5478, %v4593
        %v5480 = vpop.permute.xlu0 %5479
        %5482 = vset.pattern.permute.xlu0 78
        %5483 = vperm.xlu0 %5482, %v4594
        %v5484 = vpop.permute.xlu0 %5483
        %5486 = vset.pattern.permute.xlu0 78
        %5487 = vperm.xlu0 %5486, %v4595
        %v5488 = vpop.permute.xlu0 %5487
        %5490 = vset.pattern.permute.xlu0 78
        %5491 = vperm.xlu0 %5490, %v4596
        %v5492 = vpop.permute.xlu0 %5491
        %5494 = vset.pattern.permute.xlu0 78
        %5495 = vperm.xlu0 %5494, %v4597
        %v5496 = vpop.permute.xlu0 %5495
        %5498 = vset.pattern.permute.xlu0 78
        %5499 = vperm.xlu0 %5498, %v4598
        %v5500 = vpop.permute.xlu0 %5499
        %v5502 = vmul.f32 %v5472, %v5462
        %v5503 = vmul.f32 %v5476, %v5463
        %v5504 = vmul.f32 %v5480, %v5464
        %v5505 = vmul.f32 %v5484, %v5465
        %v5506 = vmul.f32 %v5488, %v5466
        %v5507 = vmul.f32 %v5492, %v5467
        %v5508 = vmul.f32 %v5496, %v5468
        %v5509 = vmul.f32 %v5500, %v5469
        %v5510 = vadd.f32 %v5453, %v5502
        %v5511 = vadd.f32 %v5454, %v5503
        %v5512 = vadd.f32 %v5455, %v5504
        %v5513 = vadd.f32 %v5456, %v5505
        %v5514 = vadd.f32 %v5457, %v5506
        %v5515 = vadd.f32 %v5458, %v5507
        %v5516 = vadd.f32 %v5459, %v5508
        %v5517 = vadd.f32 %v5460, %v5509
        %s5518 = scalar_lea.vmem [#allocation2], 1024
        %v5519 = vld [vmem:[%s5518] sm:$0xff]
        %v5520 = vld [vmem:[%s5518 + $0x8] sm:$0xff]
        %v5521 = vld [vmem:[%s5518 + $0x10] sm:$0xff]
        %v5522 = vld [vmem:[%s5518 + $0x18] sm:$0xff]
        %v5523 = vld [vmem:[%s5518 + $0x20] sm:$0xff]
        %v5524 = vld [vmem:[%s5518 + $0x28] sm:$0xff]
        %v5525 = vld [vmem:[%s5518 + $0x30] sm:$0xff]
        %v5526 = vld [vmem:[%s5518 + $0x38] sm:$0xff]
        %5527 = vset.pattern.permute.xlu0 80
        %5528 = vperm.xlu0 %5527, %v4591
        %v5529 = vpop.permute.xlu0 %5528
        %5531 = vset.pattern.permute.xlu0 80
        %5532 = vperm.xlu0 %5531, %v4592
        %v5533 = vpop.permute.xlu0 %5532
        %5535 = vset.pattern.permute.xlu0 80
        %5536 = vperm.xlu0 %5535, %v4593
        %v5537 = vpop.permute.xlu0 %5536
        %5539 = vset.pattern.permute.xlu0 80
        %5540 = vperm.xlu0 %5539, %v4594
        %v5541 = vpop.permute.xlu0 %5540
        %5543 = vset.pattern.permute.xlu0 80
        %5544 = vperm.xlu0 %5543, %v4595
        %v5545 = vpop.permute.xlu0 %5544
        %5547 = vset.pattern.permute.xlu0 80
        %5548 = vperm.xlu0 %5547, %v4596
        %v5549 = vpop.permute.xlu0 %5548
        %5551 = vset.pattern.permute.xlu0 80
        %5552 = vperm.xlu0 %5551, %v4597
        %v5553 = vpop.permute.xlu0 %5552
        %5555 = vset.pattern.permute.xlu0 80
        %5556 = vperm.xlu0 %5555, %v4598
        %v5557 = vpop.permute.xlu0 %5556
        %v5559 = vmul.f32 %v5529, %v5519
        %v5560 = vmul.f32 %v5533, %v5520
        %v5561 = vmul.f32 %v5537, %v5521
        %v5562 = vmul.f32 %v5541, %v5522
        %v5563 = vmul.f32 %v5545, %v5523
        %v5564 = vmul.f32 %v5549, %v5524
        %v5565 = vmul.f32 %v5553, %v5525
        %v5566 = vmul.f32 %v5557, %v5526
        %v5567 = vadd.f32 %v5510, %v5559
        %v5568 = vadd.f32 %v5511, %v5560
        %v5569 = vadd.f32 %v5512, %v5561
        %v5570 = vadd.f32 %v5513, %v5562
        %v5571 = vadd.f32 %v5514, %v5563
        %v5572 = vadd.f32 %v5515, %v5564
        %v5573 = vadd.f32 %v5516, %v5565
        %v5574 = vadd.f32 %v5517, %v5566
        %s5575 = scalar_lea.vmem [#allocation2], 1088
        %v5576 = vld [vmem:[%s5575] sm:$0xff]
        %v5577 = vld [vmem:[%s5575 + $0x8] sm:$0xff]
        %v5578 = vld [vmem:[%s5575 + $0x10] sm:$0xff]
        %v5579 = vld [vmem:[%s5575 + $0x18] sm:$0xff]
        %v5580 = vld [vmem:[%s5575 + $0x20] sm:$0xff]
        %v5581 = vld [vmem:[%s5575 + $0x28] sm:$0xff]
        %v5582 = vld [vmem:[%s5575 + $0x30] sm:$0xff]
        %v5583 = vld [vmem:[%s5575 + $0x38] sm:$0xff]
        %5584 = vset.pattern.permute.xlu0 82
        %5585 = vperm.xlu0 %5584, %v4591
        %v5586 = vpop.permute.xlu0 %5585
        %5588 = vset.pattern.permute.xlu0 82
        %5589 = vperm.xlu0 %5588, %v4592
        %v5590 = vpop.permute.xlu0 %5589
        %5592 = vset.pattern.permute.xlu0 82
        %5593 = vperm.xlu0 %5592, %v4593
        %v5594 = vpop.permute.xlu0 %5593
        %5596 = vset.pattern.permute.xlu0 82
        %5597 = vperm.xlu0 %5596, %v4594
        %v5598 = vpop.permute.xlu0 %5597
        %5600 = vset.pattern.permute.xlu0 82
        %5601 = vperm.xlu0 %5600, %v4595
        %v5602 = vpop.permute.xlu0 %5601
        %5604 = vset.pattern.permute.xlu0 82
        %5605 = vperm.xlu0 %5604, %v4596
        %v5606 = vpop.permute.xlu0 %5605
        %5608 = vset.pattern.permute.xlu0 82
        %5609 = vperm.xlu0 %5608, %v4597
        %v5610 = vpop.permute.xlu0 %5609
        %5612 = vset.pattern.permute.xlu0 82
        %5613 = vperm.xlu0 %5612, %v4598
        %v5614 = vpop.permute.xlu0 %5613
        %v5616 = vmul.f32 %v5586, %v5576
        %v5617 = vmul.f32 %v5590, %v5577
        %v5618 = vmul.f32 %v5594, %v5578
        %v5619 = vmul.f32 %v5598, %v5579
        %v5620 = vmul.f32 %v5602, %v5580
        %v5621 = vmul.f32 %v5606, %v5581
        %v5622 = vmul.f32 %v5610, %v5582
        %v5623 = vmul.f32 %v5614, %v5583
        %v5624 = vadd.f32 %v5567, %v5616
        %v5625 = vadd.f32 %v5568, %v5617
        %v5626 = vadd.f32 %v5569, %v5618
        %v5627 = vadd.f32 %v5570, %v5619
        %v5628 = vadd.f32 %v5571, %v5620
        %v5629 = vadd.f32 %v5572, %v5621
        %v5630 = vadd.f32 %v5573, %v5622
        %v5631 = vadd.f32 %v5574, %v5623
        %s5632 = scalar_lea.vmem [#allocation2], 1152
        %v5633 = vld [vmem:[%s5632] sm:$0xff]
        %v5634 = vld [vmem:[%s5632 + $0x8] sm:$0xff]
        %v5635 = vld [vmem:[%s5632 + $0x10] sm:$0xff]
        %v5636 = vld [vmem:[%s5632 + $0x18] sm:$0xff]
        %v5637 = vld [vmem:[%s5632 + $0x20] sm:$0xff]
        %v5638 = vld [vmem:[%s5632 + $0x28] sm:$0xff]
        %v5639 = vld [vmem:[%s5632 + $0x30] sm:$0xff]
        %v5640 = vld [vmem:[%s5632 + $0x38] sm:$0xff]
        %5641 = vset.pattern.permute.xlu0 84
        %5642 = vperm.xlu0 %5641, %v4591
        %v5643 = vpop.permute.xlu0 %5642
        %5645 = vset.pattern.permute.xlu0 84
        %5646 = vperm.xlu0 %5645, %v4592
        %v5647 = vpop.permute.xlu0 %5646
        %5649 = vset.pattern.permute.xlu0 84
        %5650 = vperm.xlu0 %5649, %v4593
        %v5651 = vpop.permute.xlu0 %5650
        %5653 = vset.pattern.permute.xlu0 84
        %5654 = vperm.xlu0 %5653, %v4594
        %v5655 = vpop.permute.xlu0 %5654
        %5657 = vset.pattern.permute.xlu0 84
        %5658 = vperm.xlu0 %5657, %v4595
        %v5659 = vpop.permute.xlu0 %5658
        %5661 = vset.pattern.permute.xlu0 84
        %5662 = vperm.xlu0 %5661, %v4596
        %v5663 = vpop.permute.xlu0 %5662
        %5665 = vset.pattern.permute.xlu0 84
        %5666 = vperm.xlu0 %5665, %v4597
        %v5667 = vpop.permute.xlu0 %5666
        %5669 = vset.pattern.permute.xlu0 84
        %5670 = vperm.xlu0 %5669, %v4598
        %v5671 = vpop.permute.xlu0 %5670
        %v5673 = vmul.f32 %v5643, %v5633
        %v5674 = vmul.f32 %v5647, %v5634
        %v5675 = vmul.f32 %v5651, %v5635
        %v5676 = vmul.f32 %v5655, %v5636
        %v5677 = vmul.f32 %v5659, %v5637
        %v5678 = vmul.f32 %v5663, %v5638
        %v5679 = vmul.f32 %v5667, %v5639
        %v5680 = vmul.f32 %v5671, %v5640
        %v5681 = vadd.f32 %v5624, %v5673
        %v5682 = vadd.f32 %v5625, %v5674
        %v5683 = vadd.f32 %v5626, %v5675
        %v5684 = vadd.f32 %v5627, %v5676
        %v5685 = vadd.f32 %v5628, %v5677
        %v5686 = vadd.f32 %v5629, %v5678
        %v5687 = vadd.f32 %v5630, %v5679
        %v5688 = vadd.f32 %v5631, %v5680
        %s5689 = scalar_lea.vmem [#allocation2], 1216
        %v5690 = vld [vmem:[%s5689] sm:$0xff]
        %v5691 = vld [vmem:[%s5689 + $0x8] sm:$0xff]
        %v5692 = vld [vmem:[%s5689 + $0x10] sm:$0xff]
        %v5693 = vld [vmem:[%s5689 + $0x18] sm:$0xff]
        %v5694 = vld [vmem:[%s5689 + $0x20] sm:$0xff]
        %v5695 = vld [vmem:[%s5689 + $0x28] sm:$0xff]
        %v5696 = vld [vmem:[%s5689 + $0x30] sm:$0xff]
        %v5697 = vld [vmem:[%s5689 + $0x38] sm:$0xff]
        %5698 = vset.pattern.permute.xlu0 86
        %5699 = vperm.xlu0 %5698, %v4591
        %v5700 = vpop.permute.xlu0 %5699
        %5702 = vset.pattern.permute.xlu0 86
        %5703 = vperm.xlu0 %5702, %v4592
        %v5704 = vpop.permute.xlu0 %5703
        %5706 = vset.pattern.permute.xlu0 86
        %5707 = vperm.xlu0 %5706, %v4593
        %v5708 = vpop.permute.xlu0 %5707
        %5710 = vset.pattern.permute.xlu0 86
        %5711 = vperm.xlu0 %5710, %v4594
        %v5712 = vpop.permute.xlu0 %5711
        %5714 = vset.pattern.permute.xlu0 86
        %5715 = vperm.xlu0 %5714, %v4595
        %v5716 = vpop.permute.xlu0 %5715
        %5718 = vset.pattern.permute.xlu0 86
        %5719 = vperm.xlu0 %5718, %v4596
        %v5720 = vpop.permute.xlu0 %5719
        %5722 = vset.pattern.permute.xlu0 86
        %5723 = vperm.xlu0 %5722, %v4597
        %v5724 = vpop.permute.xlu0 %5723
        %5726 = vset.pattern.permute.xlu0 86
        %5727 = vperm.xlu0 %5726, %v4598
        %v5728 = vpop.permute.xlu0 %5727
        %v5730 = vmul.f32 %v5700, %v5690
        %v5731 = vmul.f32 %v5704, %v5691
        %v5732 = vmul.f32 %v5708, %v5692
        %v5733 = vmul.f32 %v5712, %v5693
        %v5734 = vmul.f32 %v5716, %v5694
        %v5735 = vmul.f32 %v5720, %v5695
        %v5736 = vmul.f32 %v5724, %v5696
        %v5737 = vmul.f32 %v5728, %v5697
        %v5738 = vadd.f32 %v5681, %v5730
        %v5739 = vadd.f32 %v5682, %v5731
        %v5740 = vadd.f32 %v5683, %v5732
        %v5741 = vadd.f32 %v5684, %v5733
        %v5742 = vadd.f32 %v5685, %v5734
        %v5743 = vadd.f32 %v5686, %v5735
        %v5744 = vadd.f32 %v5687, %v5736
        %v5745 = vadd.f32 %v5688, %v5737
        %s5746 = scalar_lea.vmem [#allocation2], 1280
        %v5747 = vld [vmem:[%s5746] sm:$0xff]
        %v5748 = vld [vmem:[%s5746 + $0x8] sm:$0xff]
        %v5749 = vld [vmem:[%s5746 + $0x10] sm:$0xff]
        %v5750 = vld [vmem:[%s5746 + $0x18] sm:$0xff]
        %v5751 = vld [vmem:[%s5746 + $0x20] sm:$0xff]
        %v5752 = vld [vmem:[%s5746 + $0x28] sm:$0xff]
        %v5753 = vld [vmem:[%s5746 + $0x30] sm:$0xff]
        %v5754 = vld [vmem:[%s5746 + $0x38] sm:$0xff]
        %5755 = vset.pattern.permute.xlu0 104
        %5756 = vperm.xlu0 %5755, %v4591
        %v5757 = vpop.permute.xlu0 %5756
        %5759 = vset.pattern.permute.xlu0 104
        %5760 = vperm.xlu0 %5759, %v4592
        %v5761 = vpop.permute.xlu0 %5760
        %5763 = vset.pattern.permute.xlu0 104
        %5764 = vperm.xlu0 %5763, %v4593
        %v5765 = vpop.permute.xlu0 %5764
        %5767 = vset.pattern.permute.xlu0 104
        %5768 = vperm.xlu0 %5767, %v4594
        %v5769 = vpop.permute.xlu0 %5768
        %5771 = vset.pattern.permute.xlu0 104
        %5772 = vperm.xlu0 %5771, %v4595
        %v5773 = vpop.permute.xlu0 %5772
        %5775 = vset.pattern.permute.xlu0 104
        %5776 = vperm.xlu0 %5775, %v4596
        %v5777 = vpop.permute.xlu0 %5776
        %5779 = vset.pattern.permute.xlu0 104
        %5780 = vperm.xlu0 %5779, %v4597
        %v5781 = vpop.permute.xlu0 %5780
        %5783 = vset.pattern.permute.xlu0 104
        %5784 = vperm.xlu0 %5783, %v4598
        %v5785 = vpop.permute.xlu0 %5784
        %v5787 = vmul.f32 %v5757, %v5747
        %v5788 = vmul.f32 %v5761, %v5748
        %v5789 = vmul.f32 %v5765, %v5749
        %v5790 = vmul.f32 %v5769, %v5750
        %v5791 = vmul.f32 %v5773, %v5751
        %v5792 = vmul.f32 %v5777, %v5752
        %v5793 = vmul.f32 %v5781, %v5753
        %v5794 = vmul.f32 %v5785, %v5754
        %v5795 = vadd.f32 %v5738, %v5787
        %v5796 = vadd.f32 %v5739, %v5788
        %v5797 = vadd.f32 %v5740, %v5789
        %v5798 = vadd.f32 %v5741, %v5790
        %v5799 = vadd.f32 %v5742, %v5791
        %v5800 = vadd.f32 %v5743, %v5792
        %v5801 = vadd.f32 %v5744, %v5793
        %v5802 = vadd.f32 %v5745, %v5794
        %s5803 = scalar_lea.vmem [#allocation2], 1344
        %v5804 = vld [vmem:[%s5803] sm:$0xff]
        %v5805 = vld [vmem:[%s5803 + $0x8] sm:$0xff]
        %v5806 = vld [vmem:[%s5803 + $0x10] sm:$0xff]
        %v5807 = vld [vmem:[%s5803 + $0x18] sm:$0xff]
        %v5808 = vld [vmem:[%s5803 + $0x20] sm:$0xff]
        %v5809 = vld [vmem:[%s5803 + $0x28] sm:$0xff]
        %v5810 = vld [vmem:[%s5803 + $0x30] sm:$0xff]
        %v5811 = vld [vmem:[%s5803 + $0x38] sm:$0xff]
        %5812 = vset.pattern.permute.xlu0 106
        %5813 = vperm.xlu0 %5812, %v4591
        %v5814 = vpop.permute.xlu0 %5813
        %5816 = vset.pattern.permute.xlu0 106
        %5817 = vperm.xlu0 %5816, %v4592
        %v5818 = vpop.permute.xlu0 %5817
        %5820 = vset.pattern.permute.xlu0 106
        %5821 = vperm.xlu0 %5820, %v4593
        %v5822 = vpop.permute.xlu0 %5821
        %5824 = vset.pattern.permute.xlu0 106
        %5825 = vperm.xlu0 %5824, %v4594
        %v5826 = vpop.permute.xlu0 %5825
        %5828 = vset.pattern.permute.xlu0 106
        %5829 = vperm.xlu0 %5828, %v4595
        %v5830 = vpop.permute.xlu0 %5829
        %5832 = vset.pattern.permute.xlu0 106
        %5833 = vperm.xlu0 %5832, %v4596
        %v5834 = vpop.permute.xlu0 %5833
        %5836 = vset.pattern.permute.xlu0 106
        %5837 = vperm.xlu0 %5836, %v4597
        %v5838 = vpop.permute.xlu0 %5837
        %5840 = vset.pattern.permute.xlu0 106
        %5841 = vperm.xlu0 %5840, %v4598
        %v5842 = vpop.permute.xlu0 %5841
        %v5844 = vmul.f32 %v5814, %v5804
        %v5845 = vmul.f32 %v5818, %v5805
        %v5846 = vmul.f32 %v5822, %v5806
        %v5847 = vmul.f32 %v5826, %v5807
        %v5848 = vmul.f32 %v5830, %v5808
        %v5849 = vmul.f32 %v5834, %v5809
        %v5850 = vmul.f32 %v5838, %v5810
        %v5851 = vmul.f32 %v5842, %v5811
        %v5852 = vadd.f32 %v5795, %v5844
        %v5853 = vadd.f32 %v5796, %v5845
        %v5854 = vadd.f32 %v5797, %v5846
        %v5855 = vadd.f32 %v5798, %v5847
        %v5856 = vadd.f32 %v5799, %v5848
        %v5857 = vadd.f32 %v5800, %v5849
        %v5858 = vadd.f32 %v5801, %v5850
        %v5859 = vadd.f32 %v5802, %v5851
        %s5860 = scalar_lea.vmem [#allocation2], 1408
        %v5861 = vld [vmem:[%s5860] sm:$0xff]
        %v5862 = vld [vmem:[%s5860 + $0x8] sm:$0xff]
        %v5863 = vld [vmem:[%s5860 + $0x10] sm:$0xff]
        %v5864 = vld [vmem:[%s5860 + $0x18] sm:$0xff]
        %v5865 = vld [vmem:[%s5860 + $0x20] sm:$0xff]
        %v5866 = vld [vmem:[%s5860 + $0x28] sm:$0xff]
        %v5867 = vld [vmem:[%s5860 + $0x30] sm:$0xff]
        %v5868 = vld [vmem:[%s5860 + $0x38] sm:$0xff]
        %5869 = vset.pattern.permute.xlu0 108
        %5870 = vperm.xlu0 %5869, %v4591
        %v5871 = vpop.permute.xlu0 %5870
        %5873 = vset.pattern.permute.xlu0 108
        %5874 = vperm.xlu0 %5873, %v4592
        %v5875 = vpop.permute.xlu0 %5874
        %5877 = vset.pattern.permute.xlu0 108
        %5878 = vperm.xlu0 %5877, %v4593
        %v5879 = vpop.permute.xlu0 %5878
        %5881 = vset.pattern.permute.xlu0 108
        %5882 = vperm.xlu0 %5881, %v4594
        %v5883 = vpop.permute.xlu0 %5882
        %5885 = vset.pattern.permute.xlu0 108
        %5886 = vperm.xlu0 %5885, %v4595
        %v5887 = vpop.permute.xlu0 %5886
        %5889 = vset.pattern.permute.xlu0 108
        %5890 = vperm.xlu0 %5889, %v4596
        %v5891 = vpop.permute.xlu0 %5890
        %5893 = vset.pattern.permute.xlu0 108
        %5894 = vperm.xlu0 %5893, %v4597
        %v5895 = vpop.permute.xlu0 %5894
        %5897 = vset.pattern.permute.xlu0 108
        %5898 = vperm.xlu0 %5897, %v4598
        %v5899 = vpop.permute.xlu0 %5898
        %v5901 = vmul.f32 %v5871, %v5861
        %v5902 = vmul.f32 %v5875, %v5862
        %v5903 = vmul.f32 %v5879, %v5863
        %v5904 = vmul.f32 %v5883, %v5864
        %v5905 = vmul.f32 %v5887, %v5865
        %v5906 = vmul.f32 %v5891, %v5866
        %v5907 = vmul.f32 %v5895, %v5867
        %v5908 = vmul.f32 %v5899, %v5868
        %v5909 = vadd.f32 %v5852, %v5901
        %v5910 = vadd.f32 %v5853, %v5902
        %v5911 = vadd.f32 %v5854, %v5903
        %v5912 = vadd.f32 %v5855, %v5904
        %v5913 = vadd.f32 %v5856, %v5905
        %v5914 = vadd.f32 %v5857, %v5906
        %v5915 = vadd.f32 %v5858, %v5907
        %v5916 = vadd.f32 %v5859, %v5908
        %s5917 = scalar_lea.vmem [#allocation2], 1472
        %v5918 = vld [vmem:[%s5917] sm:$0xff]
        %v5919 = vld [vmem:[%s5917 + $0x8] sm:$0xff]
        %v5920 = vld [vmem:[%s5917 + $0x10] sm:$0xff]
        %v5921 = vld [vmem:[%s5917 + $0x18] sm:$0xff]
        %v5922 = vld [vmem:[%s5917 + $0x20] sm:$0xff]
        %v5923 = vld [vmem:[%s5917 + $0x28] sm:$0xff]
        %v5924 = vld [vmem:[%s5917 + $0x30] sm:$0xff]
        %v5925 = vld [vmem:[%s5917 + $0x38] sm:$0xff]
        %5926 = vset.pattern.permute.xlu0 110
        %5927 = vperm.xlu0 %5926, %v4591
        %v5928 = vpop.permute.xlu0 %5927
        %5930 = vset.pattern.permute.xlu0 110
        %5931 = vperm.xlu0 %5930, %v4592
        %v5932 = vpop.permute.xlu0 %5931
        %5934 = vset.pattern.permute.xlu0 110
        %5935 = vperm.xlu0 %5934, %v4593
        %v5936 = vpop.permute.xlu0 %5935
        %5938 = vset.pattern.permute.xlu0 110
        %5939 = vperm.xlu0 %5938, %v4594
        %v5940 = vpop.permute.xlu0 %5939
        %5942 = vset.pattern.permute.xlu0 110
        %5943 = vperm.xlu0 %5942, %v4595
        %v5944 = vpop.permute.xlu0 %5943
        %5946 = vset.pattern.permute.xlu0 110
        %5947 = vperm.xlu0 %5946, %v4596
        %v5948 = vpop.permute.xlu0 %5947
        %5950 = vset.pattern.permute.xlu0 110
        %5951 = vperm.xlu0 %5950, %v4597
        %v5952 = vpop.permute.xlu0 %5951
        %5954 = vset.pattern.permute.xlu0 110
        %5955 = vperm.xlu0 %5954, %v4598
        %v5956 = vpop.permute.xlu0 %5955
        %v5958 = vmul.f32 %v5928, %v5918
        %v5959 = vmul.f32 %v5932, %v5919
        %v5960 = vmul.f32 %v5936, %v5920
        %v5961 = vmul.f32 %v5940, %v5921
        %v5962 = vmul.f32 %v5944, %v5922
        %v5963 = vmul.f32 %v5948, %v5923
        %v5964 = vmul.f32 %v5952, %v5924
        %v5965 = vmul.f32 %v5956, %v5925
        %v5966 = vadd.f32 %v5909, %v5958
        %v5967 = vadd.f32 %v5910, %v5959
        %v5968 = vadd.f32 %v5911, %v5960
        %v5969 = vadd.f32 %v5912, %v5961
        %v5970 = vadd.f32 %v5913, %v5962
        %v5971 = vadd.f32 %v5914, %v5963
        %v5972 = vadd.f32 %v5915, %v5964
        %v5973 = vadd.f32 %v5916, %v5965
        %s5974 = scalar_lea.vmem [#allocation2], 1536
        %v5975 = vld [vmem:[%s5974] sm:$0xff]
        %v5976 = vld [vmem:[%s5974 + $0x8] sm:$0xff]
        %v5977 = vld [vmem:[%s5974 + $0x10] sm:$0xff]
        %v5978 = vld [vmem:[%s5974 + $0x18] sm:$0xff]
        %v5979 = vld [vmem:[%s5974 + $0x20] sm:$0xff]
        %v5980 = vld [vmem:[%s5974 + $0x28] sm:$0xff]
        %v5981 = vld [vmem:[%s5974 + $0x30] sm:$0xff]
        %v5982 = vld [vmem:[%s5974 + $0x38] sm:$0xff]
        %5983 = vset.pattern.permute.xlu0 112
        %5984 = vperm.xlu0 %5983, %v4591
        %v5985 = vpop.permute.xlu0 %5984
        %5987 = vset.pattern.permute.xlu0 112
        %5988 = vperm.xlu0 %5987, %v4592
        %v5989 = vpop.permute.xlu0 %5988
        %5991 = vset.pattern.permute.xlu0 112
        %5992 = vperm.xlu0 %5991, %v4593
        %v5993 = vpop.permute.xlu0 %5992
        %5995 = vset.pattern.permute.xlu0 112
        %5996 = vperm.xlu0 %5995, %v4594
        %v5997 = vpop.permute.xlu0 %5996
        %5999 = vset.pattern.permute.xlu0 112
        %6000 = vperm.xlu0 %5999, %v4595
        %v6001 = vpop.permute.xlu0 %6000
        %6003 = vset.pattern.permute.xlu0 112
        %6004 = vperm.xlu0 %6003, %v4596
        %v6005 = vpop.permute.xlu0 %6004
        %6007 = vset.pattern.permute.xlu0 112
        %6008 = vperm.xlu0 %6007, %v4597
        %v6009 = vpop.permute.xlu0 %6008
        %6011 = vset.pattern.permute.xlu0 112
        %6012 = vperm.xlu0 %6011, %v4598
        %v6013 = vpop.permute.xlu0 %6012
        %v6015 = vmul.f32 %v5985, %v5975
        %v6016 = vmul.f32 %v5989, %v5976
        %v6017 = vmul.f32 %v5993, %v5977
        %v6018 = vmul.f32 %v5997, %v5978
        %v6019 = vmul.f32 %v6001, %v5979
        %v6020 = vmul.f32 %v6005, %v5980
        %v6021 = vmul.f32 %v6009, %v5981
        %v6022 = vmul.f32 %v6013, %v5982
        %v6023 = vadd.f32 %v5966, %v6015
        %v6024 = vadd.f32 %v5967, %v6016
        %v6025 = vadd.f32 %v5968, %v6017
        %v6026 = vadd.f32 %v5969, %v6018
        %v6027 = vadd.f32 %v5970, %v6019
        %v6028 = vadd.f32 %v5971, %v6020
        %v6029 = vadd.f32 %v5972, %v6021
        %v6030 = vadd.f32 %v5973, %v6022
        %v6031 = vadd.f32 %v6023, %v6024
        %v6032 = vadd.f32 %v6031, %v6025
        %v6033 = vadd.f32 %v6032, %v6026
        %v6034 = vadd.f32 %v6033, %v6027
        %v6035 = vadd.f32 %v6034, %v6028
        %v6036 = vadd.f32 %v6035, %v6029
        %v6037 = vadd.f32 %v6036, %v6030
        %v6038 = vrot.slane %v6037, 4
        %v6039 = vadd.f32 %v6037, %v6038
        %v6040 = vrot.slane %v6039, 2
        %v6041 = vadd.f32 %v6039, %v6040
        %v6042 = vrot.slane %v6041, 1
        %v6043 = vadd.f32 %v6041, %v6042
        %v6044 = vld [vmem:[%s7] sm:$0x1]
        %v6045 = vadd.f32 %v6043, %v6044
        %v6046 = vmax.f32 %v6045, 0.0
        %v6047 = vld [vmem:[%s8] sm:$0xff]
        %v6048 = vld [vmem:[%s8 + $0x8] sm:$0xff]
        %v6049 = vld [vmem:[%s8 + $0x10] sm:$0xff]
        %v6050 = vld [vmem:[%s8 + $0x18] sm:$0xff]
        %v6051 = vld [vmem:[%s8 + $0x20] sm:$0xff]
        %v6052 = vld [vmem:[%s8 + $0x28] sm:$0xff]
        %v6053 = vld [vmem:[%s8 + $0x30] sm:$0xff]
        %v6054 = vld [vmem:[%s8 + $0x38] sm:$0xff]
        %v6055 = vld [vmem:[%s8 + $0x40] sm:$0xff]
        %v6056 = vld [vmem:[%s8 + $0x48] sm:$0xff]
        %v6057 = vld [vmem:[%s8 + $0x50] sm:$0xff]
        %v6058 = vld [vmem:[%s8 + $0x58] sm:$0xff]
        %v6059 = vld [vmem:[%s8 + $0x60] sm:$0xff]
        %v6060 = vld [vmem:[%s8 + $0x68] sm:$0xff]
        %v6061 = vld [vmem:[%s8 + $0x70] sm:$0xff]
        %v6062 = vld [vmem:[%s8 + $0x78] sm:$0xff]
        %v6063 = vld [vmem:[%s9] sm:$0x1]
        %6064 = vmatpush.msra.mxu0 %v6062
        %6065 = vmatpush.msra.mxu0 %v6061
        %6066 = vmatpush.msra.mxu0 %v6060
        %6067 = vmatpush.msra.mxu0 %v6059
        %6068 = vmatpush.msra.mxu0 %v6058
        %6069 = vmatpush.msra.mxu0 %v6057
        %6070 = vmatpush.msra.mxu0 %v6056
        %6071 = vmatpush.msra.mxu0 %v6055
        %6072 = vmatpush.msra.mxu0 %v6054
        %6073 = vmatpush.msra.mxu0 %v6053
        %6074 = vmatpush.msra.mxu0 %v6052
        %6075 = vmatpush.msra.mxu0 %v6051
        %6076 = vmatpush.msra.mxu0 %v6050
        %6077 = vmatpush.msra.mxu0 %v6049
        %6078 = vmatpush.msra.mxu0 %v6048
        %6079 = vmatpush.msra.mxu0 %v6047
        %6080 = vmatmul.f32.gmra.mxu0 %v6046
        %v6081 = vpop.f32.mrf.mxu0
        %v6082 = vadd.f32 %v6063, %v6081
        %6083 = vdwg.mxu0
        %6084 = vst [vmem:[%s366] sm:$0x1] %v6082
        %s6085 = sand.u32 %s248, 1
        %s6086 = scalar_lea.sflag [#allocation4], %s6085
        %s6087 = sand.u32 %s248, 1
        %s6088 = scalar_lea.vmem [#allocation5], %s6087
        // Predicated region
        $region65: #{net_forward.1} parent=59 // pred_check
          %p6089 = pneg %p258
        $region66: #{net_forward.1} parent=59 // pred_check_branch
          %6091 = sbr.rel (%p6089) target = $region68
        $region67: #{net_forward.1} parent=59 // pred_region
          %6093 = vsyncadd %s6086, 0
          %s6094 = scalar_lea.hbm %s10, %s25
          %s6096 = sshll.u32 %s6088, 4
          %s6097 = int_to_ptr.vmem [resolvable:$true] %s6096
          %s6098 = sshll.u32 %s6094, 4
          %s6099 = int_to_ptr.hbm [resolvable:$true] %s6098
          %6101 = dma.vmem_to_hbm [thread:$0]  %s6097, 16, %s6099, %s6086
        $region68: #{net_forward.1} parent=59 // pred_fallthru
          _
      $region60: #{net_forward.1} parent=5 // pred_fallthru
        _
      %p6102 = scmp.le.s32.totalorder 2, %s20
      // Predicated region
      $region69: #{net_forward.1} parent=5 // pred_check
        %p6103 = pneg %p6102
      $region70: #{net_forward.1} parent=5 // pred_check_branch
        %6105 = sbr.rel (%p6103) target = $region72
      $region71: #{net_forward.1} parent=5 // pred_region
        %s6106 = ssub.s32 %s20, 2
        // Predicated region
        $region73: #{net_forward.1} parent=71 // pred_check
          %p6107 = pneg %p264
        $region74: #{net_forward.1} parent=71 // pred_check_branch
          %6109 = sbr.rel (%p6107) target = $region76
        $region75: #{net_forward.1} parent=71 // pred_region
          %s6110 = sand.u32 %s249, 1
          %s6111 = scalar_lea.sflag [#allocation4], %s6110
          %s6112 = sand.u32 %s249, 1
          %s6113 = scalar_lea.vmem [#allocation5], %s6112
          %6115 = dma.done %s6111, 16
        $region76: #{net_forward.1} parent=71 // pred_fallthru
          _
      $region72: #{net_forward.1} parent=5 // pred_fallthru
        _
    $region6: #{net_forward.1} parent=1 // loop_footer
      %s24 = sadd.s32 1, %s20
    $region7: #{net_forward.1} parent=1 // loop_footer_branch
      %19 = sbr.rel target = $region3
    $region8: #{net_forward.1} parent=1 // loop_exit
      _
    %6116 = vsyncpa [#allocation3], 1
    %s6117 = scalar_lea.sflag [#allocation3], 1
    %6118 = vsyncpa %s6117, 1
    %6119 = vsyncpa [#allocation4], 1
    %s6120 = scalar_lea.sflag [#allocation4], 1
    %6121 = vsyncpa %s6120, 1

</llo_original>
